<compile_context>
chip_gen: v6e
topology: v6e:2x2x1
jax: 0.10.0
libtpu: 0.0.40
codegen_flags: <defaults>
</compile_context>

<pallas_src>
import functools

import jax
import jax.numpy as jnp
from jax.experimental import pallas as pl
from jax.experimental.pallas import tpu as pltpu


# ----------------------------- kernels --------------------------------------


def _vpu_upsample_kernel(x_ref, o_ref, *, scale_h, scale_w, copy_w):
    """Lane-repeat path (f32 / f16 / integer dtypes)."""
    x = x_ref[...]
    y = jnp.repeat(x, scale_w, axis=-1) if scale_w > 1 else x
    if scale_h == 1:
        o_ref[...] = y
    else:
        # Vertical replication = direct slice stores (no concat intermediate).
        for r in range(scale_h):
            o_ref[:, r * copy_w:(r + 1) * copy_w] = y


def _mxu_upsample_kernel(x_ref, rep_ref, o_ref, *, scale_h, copy_w, fold_h):
    """MXU path (bf16): W-replication as a matmul against a 0/1 matrix."""
    y = jnp.dot(x_ref[...], rep_ref[...], preferred_element_type=jnp.float32)
    y = y.astype(o_ref.dtype)
    if fold_h:
        o_ref[...] = y  # replicate matrix already emits the sh vertical copies
    else:
        for r in range(scale_h):
            o_ref[:, r * copy_w:(r + 1) * copy_w] = y


# --------------------------- host-side helpers -------------------------------


def _replicate_matrix(w, sw, dtype):
    # (w, w*sw): output column j copies input column j // sw.
    src = jnp.arange(w * sw) // sw
    return (jnp.arange(w)[:, None] == src[None, :]).astype(dtype)


def _grouped_replicate_matrix(w, sh, sw, g, dtype):
    # (g*w, g*sh*w*sw) block-diagonal matrix emitting, for each of the g packed
    # input rows, its sh vertical copies of the W-upsampled row.
    cols = jnp.arange(g * sh * w * sw)
    src = (cols // (sh * w * sw)) * w + (cols % (w * sw)) // sw
    return (jnp.arange(g * w)[:, None] == src[None, :]).astype(dtype)


def _sublane_pack(itemsize):
    return max(8, (8 * 4) // itemsize)  # 8 f32/i32, 16 bf16/f16, 32 int8/fp8


def _pick_group(h, w, sh, sw, max_k=256):
    """Smallest divisor g of H with g*sh*w*sw >= 128 (lane-dense out blocks)."""
    lane_out = sh * w * sw
    if lane_out >= 128:
        return 1
    best = 1
    for g in range(1, h + 1):
        if h % g:
            continue
        if g * w > max_k:
            break
        best = g
        if g * lane_out >= 128:
            return g
    return best


def _pick_rows(total_rows, out_row_bytes, pack, target_bytes):
    t = (target_bytes // max(out_row_bytes, 1)) // pack * pack
    t = max(t, pack)
    return int(total_rows if t >= total_rows else t)


# ------------------------------ wrapper --------------------------------------


def nearest_upsample(x: jax.Array, scale_factor, *,
                     block_target_bytes: int = 4 << 20) -> jax.Array:
    """Pallas equivalent of F.interpolate(x, scale_factor, mode='nearest')."""
    if isinstance(scale_factor, (tuple, list)):
        assert len(scale_factor) == 2, "expect (scale_h, scale_w)"
        sh, sw = int(scale_factor[0]), int(scale_factor[1])
        ok = (sh == scale_factor[0]) and (sw == scale_factor[1])
    else:
        sh = sw = int(scale_factor)
        ok = (sh == scale_factor)
    # TODO(synk): non-integer scale factors (fractional nearest index math) are
    # not implemented; PyTorch semantics for integer scales are exact.
    assert ok and sh >= 1 and sw >= 1, "only integer scale factors supported"

    N, C, H, W = x.shape
    if sh == 1 and sw == 1:
        return x

    dtype = x.dtype
    isz = jnp.dtype(dtype).itemsize
    pack = _sublane_pack(isz)
    copy_w = W * sw                # one W-upsampled row
    lane_out = sh * copy_w         # one fully expanded input row

    use_mxu = (dtype == jnp.bfloat16) and sw > 1
    g = _pick_group(H, W, sh, sw) if use_mxu else 1
    fold_h = use_mxu and g > 1

    rows = (N * C * H) // g
    in_w = g * W
    out_w = g * lane_out
    t_rows = _pick_rows(rows, out_w * isz, pack, block_target_bytes)
    grid = (pl.cdiv(rows, t_rows),)

    x_flat = x.reshape(rows, in_w)  # free reshape (row-major identity)

    operands = [x_flat]
    in_specs = [pl.BlockSpec((t_rows, in_w), lambda i: (i, 0))]
    if use_mxu:
        rep = (_grouped_replicate_matrix(W, sh, sw, g, dtype) if fold_h
               else _replicate_matrix(W, sw, dtype))
        operands.append(rep)
        # Constant block across the grid (no re-fetch between steps).
        in_specs.append(pl.BlockSpec(rep.shape, lambda i: (0, 0)))
        kernel = functools.partial(_mxu_upsample_kernel, scale_h=sh,
                                   copy_w=copy_w, fold_h=fold_h)
        rep_bytes = rep.size * isz
        acc_bytes = t_rows * rep.shape[1] * 4       # f32 matmul result
        flops = 2 * rows * in_w * rep.shape[1]
    else:
        # NOTE: if lane_out < 128 (small feature maps), output stores here are
        # masked vst.msk - documented slow path; the bf16 MXU branch above
        # fixes it via row grouping.
        kernel = functools.partial(_vpu_upsample_kernel, scale_h=sh,
                                   scale_w=sw, copy_w=copy_w)
        rep_bytes = 0
        acc_bytes = 0
        flops = 0

    in_blk = t_rows * in_w * isz
    out_blk = t_rows * out_w * isz
    vmem_limit = 2 * (in_blk + out_blk) + 2 * rep_bytes + acc_bytes + (4 << 20)
    vmem_limit = int(min(32 << 20, max(vmem_limit, 16 << 20)))

    cost = pl.CostEstimate(
        flops=int(flops), transcendentals=0,
        bytes_accessed=int((rows * in_w + rows * out_w) * isz + rep_bytes))

    out_flat = pl.pallas_call(
        kernel,
        out_shape=jax.ShapeDtypeStruct((rows, out_w), dtype),
        grid=grid,
        in_specs=in_specs,
        out_specs=pl.BlockSpec((t_rows, out_w), lambda i: (i, 0)),
        compiler_params=pltpu.CompilerParams(
            dimension_semantics=("parallel",),
            vmem_limit_bytes=vmem_limit),
        cost_estimate=cost,
    )(*operands)

    # (rows, g*sh*W*sw) row-major == (N, C, H*sh, W*sw) row-major: free reshape.
    return out_flat.reshape(N, C, H * sh, W * sw)


# ------------------------------- tests ---------------------------------------


if __name__ == "__main__":
    key = jax.random.PRNGKey(0)

    def ref_upsample(a, sh, sw):
        return jnp.repeat(jnp.repeat(a, sh, axis=2), sw, axis=3)

    # 1) f32, scale 2 (VPU repeat path).
    x1 = jax.random.normal(key, (2, 4, 16, 16), dtype=jnp.float32)
    o1 = jax.block_until_ready(nearest_upsample(x1, 2))
    assert o1.shape == (2, 4, 32, 32) and o1.dtype == x1.dtype
    assert jnp.array_equal(o1, ref_upsample(x1, 2, 2))

    # 2) bf16, scale 2 (MXU replicate-matrix path with row grouping + fold).
    x2 = x1.astype(jnp.bfloat16)
    o2 = jax.block_until_ready(nearest_upsample(x2, 2))
    assert o2.dtype == jnp.bfloat16
    assert jnp.array_equal(o2, ref_upsample(x2, 2, 2))

    # 3) bf16, wide W (MXU path, no grouping / no fold, 128-aligned stores).
    x3 = jax.random.normal(jax.random.fold_in(key, 1), (1, 2, 8, 64),
                           dtype=jnp.bfloat16)
    o3 = jax.block_until_ready(nearest_upsample(x3, (2, 2)))
    assert jnp.array_equal(o3, ref_upsample(x3, 2, 2))

    # 4) f32, asymmetric scale (3,2), non-divisible H / partial row blocks.
    x4 = jax.random.normal(jax.random.fold_in(key, 2), (2, 3, 10, 16),
                           dtype=jnp.float32)
    o4 = jax.block_until_ready(
        nearest_upsample(x4, (3, 2), block_target_bytes=8 * 1024))
    assert o4.shape == (2, 3, 30, 32)
    assert jnp.array_equal(o4, ref_upsample(x4, 3, 2))

    # 5) sw == 1 fast path (pure vertical upsample, no repeat at all).
    o5 = jax.block_until_ready(nearest_upsample(x1, (2, 1)))
    assert jnp.array_equal(o5, ref_upsample(x1, 2, 1))

    # 6) int32 (repeat path on an integer dtype).
    x6 = jax.random.randint(jax.random.fold_in(key, 3), (2, 2, 8, 8), 0, 100,
                            dtype=jnp.int32)
    o6 = jax.block_until_ready(nearest_upsample(x6, 2))
    assert jnp.array_equal(o6, ref_upsample(x6, 2, 2))

    print("KERNEL_OK")
</pallas_src>

<mosaic_0001>
module attributes {stable_mosaic.version = 11 : i64} {
  func.func @_vpu_upsample_kernel(%arg0: i32, %arg1: memref<128x16xf32, #tpu.memory_space<vmem>>, %arg2: memref<128x64xf32, #tpu.memory_space<vmem>>) attributes {dimension_semantics = [#tpu.dimension_semantics<parallel>], iteration_bounds = array<i64: 1>, scalar_prefetch = 0 : i64, scratch_operands = 0 : i64, tpu.core_type = #tpu.core_type<tc>, window_params = [{transform_indices = @transform_0, window_bounds = array<i64: 128, 16>}, {transform_indices = @transform_1, window_bounds = array<i64: 128, 64>}]} {
    %c0 = arith.constant 0 : index
    %c0_0 = arith.constant 0 : index
    %0 = vector.load %arg1[%c0, %c0_0] : memref<128x16xf32, #tpu.memory_space<vmem>>, vector<128x16xf32>
    %1 = vector.shape_cast %0 : vector<128x16xf32> to vector<128x16x1xf32>
    %2 = vector.broadcast %1 : vector<128x16x1xf32> to vector<128x16x2xf32>
    %3 = vector.shape_cast %2 : vector<128x16x2xf32> to vector<128x32xf32>
    %c0_1 = arith.constant 0 : index
    %c0_2 = arith.constant 0 : index
    %4 = vector.load %arg2[%c0_1, %c0_2] : memref<128x64xf32, #tpu.memory_space<vmem>>, vector<128x32xf32>
    tpu.vector_store %arg2[%c0_1, %c0_2], %3 {strides = array<i32>} : memref<128x64xf32, #tpu.memory_space<vmem>>, vector<128x32xf32>,
    %c0_3 = arith.constant 0 : index
    %c32 = arith.constant 32 : index
    %5 = vector.load %arg2[%c0_3, %c32] : memref<128x64xf32, #tpu.memory_space<vmem>>, vector<128x32xf32>
    tpu.vector_store %arg2[%c0_3, %c32], %3 {strides = array<i32>} : memref<128x64xf32, #tpu.memory_space<vmem>>, vector<128x32xf32>,
    return
  }
  func.func @transform_0(%arg0: i32) -> (i32, i32) {
    %c0_i32 = arith.constant 0 : i32
    %c0_i32_0 = arith.constant 0 : i32
    return %arg0, %c0_i32 : i32, i32
  }
  func.func @transform_1(%arg0: i32) -> (i32, i32) {
    %c0_i32 = arith.constant 0 : i32
    %c0_i32_0 = arith.constant 0 : i32
    return %arg0, %c0_i32 : i32, i32
  }
}

</mosaic_0001>

<llo_original>
// kernel: tpu_custom_call.1
$region0: #{tpu_custom_call.1}
  #allocation0 [shape = 'u32[]', space=smem, size = 0x4, offset = 0x4, fixed_abs, tag = 'smem constant byte address 0x4 - core index']
  #allocation1 [shape = 'u32[144,128]{1,0:T(1,128)}', space=vmem, size = 0x12000, scoped, tag = 'internal scratch']
  %s0 = inlined_call_operand.vmem [shape: f32[128,16], index: 0, kind: input, shape index: {}]
  %s1 = inlined_call_operand.vmem [shape: f32[128,64], index: 1, kind: output, shape index: {}]
  %s2 = sld [smem:[#allocation0]]
  $region14: #{tpu_custom_call.1} parent=0
    _
  %s4 = ssub.s32 1, %s2
  %s5 = scalar_select 0, %s4, %s2
  // Predicated region
  $region2: #{tpu_custom_call.1} parent=0 // pred_check
    _
  $region3: #{tpu_custom_call.1} parent=0 // pred_check_branch
    %7 = sbr.rel (0) target = $region5
  $region4: #{tpu_custom_call.1} parent=0 // pred_region
    _
  $region5: #{tpu_custom_call.1} parent=0 // pred_fallthru
    _
  %v8 = vld [vmem:[%s0] sm:$0xff]
  %v9 = vld [vmem:[%s0 + $0x8] sm:$0xff]
  %v10 = vld [vmem:[%s0 + $0x10] sm:$0xff]
  %v11 = vld [vmem:[%s0 + $0x18] sm:$0xff]
  %v12 = vld [vmem:[%s0 + $0x20] sm:$0xff]
  %v13 = vld [vmem:[%s0 + $0x28] sm:$0xff]
  %v14 = vld [vmem:[%s0 + $0x30] sm:$0xff]
  %v15 = vld [vmem:[%s0 + $0x38] sm:$0xff]
  %v16 = vld [vmem:[%s0 + $0x40] sm:$0xff]
  %v17 = vld [vmem:[%s0 + $0x48] sm:$0xff]
  %v18 = vld [vmem:[%s0 + $0x50] sm:$0xff]
  %v19 = vld [vmem:[%s0 + $0x58] sm:$0xff]
  %v20 = vld [vmem:[%s0 + $0x60] sm:$0xff]
  %v21 = vld [vmem:[%s0 + $0x68] sm:$0xff]
  %v22 = vld [vmem:[%s0 + $0x70] sm:$0xff]
  %v23 = vld [vmem:[%s0 + $0x78] sm:$0xff]
  %v24 = vlaneseq
  %v25 = vshrl.u32 %v24, 7
  %v26 = vsub.s32 0, %v25
  %v27 = vrot.slane %v8, %v26
  %29 = vbcast.lane.b32.xlu0 %v27, 256
  %v30 = vpop.permute.xlu0 %29
  %s32 = sor.u32 256, 8
  %33 = vbcast.lane.b32.xlu0 %v27, %s32
  %v34 = vpop.permute.xlu0 %33
  %v35 = vlaneseq
  %v36 = vshrl.u32 %v35, 7
  %v37 = vsub.s32 1, %v36
  %v38 = vrot.slane %v8, %v37
  %40 = vbcast.lane.b32.xlu0 %v38, 256
  %v41 = vpop.permute.xlu0 %40
  %s43 = sor.u32 256, 8
  %44 = vbcast.lane.b32.xlu0 %v38, %s43
  %v45 = vpop.permute.xlu0 %44
  %v46 = vlaneseq
  %v47 = vshrl.u32 %v46, 7
  %v48 = vsub.s32 2, %v47
  %v49 = vrot.slane %v8, %v48
  %51 = vbcast.lane.b32.xlu0 %v49, 256
  %v52 = vpop.permute.xlu0 %51
  %s54 = sor.u32 256, 8
  %55 = vbcast.lane.b32.xlu0 %v49, %s54
  %v56 = vpop.permute.xlu0 %55
  %v57 = vlaneseq
  %v58 = vshrl.u32 %v57, 7
  %v59 = vsub.s32 3, %v58
  %v60 = vrot.slane %v8, %v59
  %62 = vbcast.lane.b32.xlu0 %v60, 256
  %v63 = vpop.permute.xlu0 %62
  %s65 = sor.u32 256, 8
  %66 = vbcast.lane.b32.xlu0 %v60, %s65
  %v67 = vpop.permute.xlu0 %66
  %v68 = vlaneseq
  %v69 = vshrl.u32 %v68, 7
  %v70 = vsub.s32 4, %v69
  %v71 = vrot.slane %v8, %v70
  %73 = vbcast.lane.b32.xlu0 %v71, 256
  %v74 = vpop.permute.xlu0 %73
  %s76 = sor.u32 256, 8
  %77 = vbcast.lane.b32.xlu0 %v71, %s76
  %v78 = vpop.permute.xlu0 %77
  %v79 = vlaneseq
  %v80 = vshrl.u32 %v79, 7
  %v81 = vsub.s32 5, %v80
  %v82 = vrot.slane %v8, %v81
  %84 = vbcast.lane.b32.xlu0 %v82, 256
  %v85 = vpop.permute.xlu0 %84
  %s87 = sor.u32 256, 8
  %88 = vbcast.lane.b32.xlu0 %v82, %s87
  %v89 = vpop.permute.xlu0 %88
  %v90 = vlaneseq
  %v91 = vshrl.u32 %v90, 7
  %v92 = vsub.s32 6, %v91
  %v93 = vrot.slane %v8, %v92
  %95 = vbcast.lane.b32.xlu0 %v93, 256
  %v96 = vpop.permute.xlu0 %95
  %s98 = sor.u32 256, 8
  %99 = vbcast.lane.b32.xlu0 %v93, %s98
  %v100 = vpop.permute.xlu0 %99
  %v101 = vlaneseq
  %v102 = vshrl.u32 %v101, 7
  %v103 = vsub.s32 7, %v102
  %v104 = vrot.slane %v8, %v103
  %106 = vbcast.lane.b32.xlu0 %v104, 256
  %v107 = vpop.permute.xlu0 %106
  %s109 = sor.u32 256, 8
  %110 = vbcast.lane.b32.xlu0 %v104, %s109
  %v111 = vpop.permute.xlu0 %110
  %v112 = vlaneseq
  %v113 = vshrl.u32 %v112, 7
  %v114 = vsub.s32 0, %v113
  %v115 = vrot.slane %v9, %v114
  %117 = vbcast.lane.b32.xlu0 %v115, 256
  %v118 = vpop.permute.xlu0 %117
  %s120 = sor.u32 256, 8
  %121 = vbcast.lane.b32.xlu0 %v115, %s120
  %v122 = vpop.permute.xlu0 %121
  %v123 = vlaneseq
  %v124 = vshrl.u32 %v123, 7
  %v125 = vsub.s32 1, %v124
  %v126 = vrot.slane %v9, %v125
  %128 = vbcast.lane.b32.xlu0 %v126, 256
  %v129 = vpop.permute.xlu0 %128
  %s131 = sor.u32 256, 8
  %132 = vbcast.lane.b32.xlu0 %v126, %s131
  %v133 = vpop.permute.xlu0 %132
  %v134 = vlaneseq
  %v135 = vshrl.u32 %v134, 7
  %v136 = vsub.s32 2, %v135
  %v137 = vrot.slane %v9, %v136
  %139 = vbcast.lane.b32.xlu0 %v137, 256
  %v140 = vpop.permute.xlu0 %139
  %s142 = sor.u32 256, 8
  %143 = vbcast.lane.b32.xlu0 %v137, %s142
  %v144 = vpop.permute.xlu0 %143
  %v145 = vlaneseq
  %v146 = vshrl.u32 %v145, 7
  %v147 = vsub.s32 3, %v146
  %v148 = vrot.slane %v9, %v147
  %150 = vbcast.lane.b32.xlu0 %v148, 256
  %v151 = vpop.permute.xlu0 %150
  %s153 = sor.u32 256, 8
  %154 = vbcast.lane.b32.xlu0 %v148, %s153
  %v155 = vpop.permute.xlu0 %154
  %v156 = vlaneseq
  %v157 = vshrl.u32 %v156, 7
  %v158 = vsub.s32 4, %v157
  %v159 = vrot.slane %v9, %v158
  %161 = vbcast.lane.b32.xlu0 %v159, 256
  %v162 = vpop.permute.xlu0 %161
  %s164 = sor.u32 256, 8
  %165 = vbcast.lane.b32.xlu0 %v159, %s164
  %v166 = vpop.permute.xlu0 %165
  %v167 = vlaneseq
  %v168 = vshrl.u32 %v167, 7
  %v169 = vsub.s32 5, %v168
  %v170 = vrot.slane %v9, %v169
  %172 = vbcast.lane.b32.xlu0 %v170, 256
  %v173 = vpop.permute.xlu0 %172
  %s175 = sor.u32 256, 8
  %176 = vbcast.lane.b32.xlu0 %v170, %s175
  %v177 = vpop.permute.xlu0 %176
  %v178 = vlaneseq
  %v179 = vshrl.u32 %v178, 7
  %v180 = vsub.s32 6, %v179
  %v181 = vrot.slane %v9, %v180
  %183 = vbcast.lane.b32.xlu0 %v181, 256
  %v184 = vpop.permute.xlu0 %183
  %s186 = sor.u32 256, 8
  %187 = vbcast.lane.b32.xlu0 %v181, %s186
  %v188 = vpop.permute.xlu0 %187
  %v189 = vlaneseq
  %v190 = vshrl.u32 %v189, 7
  %v191 = vsub.s32 7, %v190
  %v192 = vrot.slane %v9, %v191
  %194 = vbcast.lane.b32.xlu0 %v192, 256
  %v195 = vpop.permute.xlu0 %194
  %s197 = sor.u32 256, 8
  %198 = vbcast.lane.b32.xlu0 %v192, %s197
  %v199 = vpop.permute.xlu0 %198
  %v200 = vlaneseq
  %v201 = vshrl.u32 %v200, 7
  %v202 = vsub.s32 0, %v201
  %v203 = vrot.slane %v10, %v202
  %205 = vbcast.lane.b32.xlu0 %v203, 256
  %v206 = vpop.permute.xlu0 %205
  %s208 = sor.u32 256, 8
  %209 = vbcast.lane.b32.xlu0 %v203, %s208
  %v210 = vpop.permute.xlu0 %209
  %v211 = vlaneseq
  %v212 = vshrl.u32 %v211, 7
  %v213 = vsub.s32 1, %v212
  %v214 = vrot.slane %v10, %v213
  %216 = vbcast.lane.b32.xlu0 %v214, 256
  %v217 = vpop.permute.xlu0 %216
  %s219 = sor.u32 256, 8
  %220 = vbcast.lane.b32.xlu0 %v214, %s219
  %v221 = vpop.permute.xlu0 %220
  %v222 = vlaneseq
  %v223 = vshrl.u32 %v222, 7
  %v224 = vsub.s32 2, %v223
  %v225 = vrot.slane %v10, %v224
  %227 = vbcast.lane.b32.xlu0 %v225, 256
  %v228 = vpop.permute.xlu0 %227
  %s230 = sor.u32 256, 8
  %231 = vbcast.lane.b32.xlu0 %v225, %s230
  %v232 = vpop.permute.xlu0 %231
  %v233 = vlaneseq
  %v234 = vshrl.u32 %v233, 7
  %v235 = vsub.s32 3, %v234
  %v236 = vrot.slane %v10, %v235
  %238 = vbcast.lane.b32.xlu0 %v236, 256
  %v239 = vpop.permute.xlu0 %238
  %s241 = sor.u32 256, 8
  %242 = vbcast.lane.b32.xlu0 %v236, %s241
  %v243 = vpop.permute.xlu0 %242
  %v244 = vlaneseq
  %v245 = vshrl.u32 %v244, 7
  %v246 = vsub.s32 4, %v245
  %v247 = vrot.slane %v10, %v246
  %249 = vbcast.lane.b32.xlu0 %v247, 256
  %v250 = vpop.permute.xlu0 %249
  %s252 = sor.u32 256, 8
  %253 = vbcast.lane.b32.xlu0 %v247, %s252
  %v254 = vpop.permute.xlu0 %253
  %v255 = vlaneseq
  %v256 = vshrl.u32 %v255, 7
  %v257 = vsub.s32 5, %v256
  %v258 = vrot.slane %v10, %v257
  %260 = vbcast.lane.b32.xlu0 %v258, 256
  %v261 = vpop.permute.xlu0 %260
  %s263 = sor.u32 256, 8
  %264 = vbcast.lane.b32.xlu0 %v258, %s263
  %v265 = vpop.permute.xlu0 %264
  %v266 = vlaneseq
  %v267 = vshrl.u32 %v266, 7
  %v268 = vsub.s32 6, %v267
  %v269 = vrot.slane %v10, %v268
  %271 = vbcast.lane.b32.xlu0 %v269, 256
  %v272 = vpop.permute.xlu0 %271
  %s274 = sor.u32 256, 8
  %275 = vbcast.lane.b32.xlu0 %v269, %s274
  %v276 = vpop.permute.xlu0 %275
  %v277 = vlaneseq
  %v278 = vshrl.u32 %v277, 7
  %v279 = vsub.s32 7, %v278
  %v280 = vrot.slane %v10, %v279
  %282 = vbcast.lane.b32.xlu0 %v280, 256
  %v283 = vpop.permute.xlu0 %282
  %s285 = sor.u32 256, 8
  %286 = vbcast.lane.b32.xlu0 %v280, %s285
  %v287 = vpop.permute.xlu0 %286
  %v288 = vlaneseq
  %v289 = vshrl.u32 %v288, 7
  %v290 = vsub.s32 0, %v289
  %v291 = vrot.slane %v11, %v290
  %293 = vbcast.lane.b32.xlu0 %v291, 256
  %v294 = vpop.permute.xlu0 %293
  %s296 = sor.u32 256, 8
  %297 = vbcast.lane.b32.xlu0 %v291, %s296
  %v298 = vpop.permute.xlu0 %297
  %v299 = vlaneseq
  %v300 = vshrl.u32 %v299, 7
  %v301 = vsub.s32 1, %v300
  %v302 = vrot.slane %v11, %v301
  %304 = vbcast.lane.b32.xlu0 %v302, 256
  %v305 = vpop.permute.xlu0 %304
  %s307 = sor.u32 256, 8
  %308 = vbcast.lane.b32.xlu0 %v302, %s307
  %v309 = vpop.permute.xlu0 %308
  %v310 = vlaneseq
  %v311 = vshrl.u32 %v310, 7
  %v312 = vsub.s32 2, %v311
  %v313 = vrot.slane %v11, %v312
  %315 = vbcast.lane.b32.xlu0 %v313, 256
  %v316 = vpop.permute.xlu0 %315
  %s318 = sor.u32 256, 8
  %319 = vbcast.lane.b32.xlu0 %v313, %s318
  %v320 = vpop.permute.xlu0 %319
  %v321 = vlaneseq
  %v322 = vshrl.u32 %v321, 7
  %v323 = vsub.s32 3, %v322
  %v324 = vrot.slane %v11, %v323
  %326 = vbcast.lane.b32.xlu0 %v324, 256
  %v327 = vpop.permute.xlu0 %326
  %s329 = sor.u32 256, 8
  %330 = vbcast.lane.b32.xlu0 %v324, %s329
  %v331 = vpop.permute.xlu0 %330
  %v332 = vlaneseq
  %v333 = vshrl.u32 %v332, 7
  %v334 = vsub.s32 4, %v333
  %v335 = vrot.slane %v11, %v334
  %337 = vbcast.lane.b32.xlu0 %v335, 256
  %v338 = vpop.permute.xlu0 %337
  %s340 = sor.u32 256, 8
  %341 = vbcast.lane.b32.xlu0 %v335, %s340
  %v342 = vpop.permute.xlu0 %341
  %v343 = vlaneseq
  %v344 = vshrl.u32 %v343, 7
  %v345 = vsub.s32 5, %v344
  %v346 = vrot.slane %v11, %v345
  %348 = vbcast.lane.b32.xlu0 %v346, 256
  %v349 = vpop.permute.xlu0 %348
  %s351 = sor.u32 256, 8
  %352 = vbcast.lane.b32.xlu0 %v346, %s351
  %v353 = vpop.permute.xlu0 %352
  %v354 = vlaneseq
  %v355 = vshrl.u32 %v354, 7
  %v356 = vsub.s32 6, %v355
  %v357 = vrot.slane %v11, %v356
  %359 = vbcast.lane.b32.xlu0 %v357, 256
  %v360 = vpop.permute.xlu0 %359
  %s362 = sor.u32 256, 8
  %363 = vbcast.lane.b32.xlu0 %v357, %s362
  %v364 = vpop.permute.xlu0 %363
  %v365 = vlaneseq
  %v366 = vshrl.u32 %v365, 7
  %v367 = vsub.s32 7, %v366
  %v368 = vrot.slane %v11, %v367
  %370 = vbcast.lane.b32.xlu0 %v368, 256
  %v371 = vpop.permute.xlu0 %370
  %s373 = sor.u32 256, 8
  %374 = vbcast.lane.b32.xlu0 %v368, %s373
  %v375 = vpop.permute.xlu0 %374
  %v376 = vlaneseq
  %v377 = vshrl.u32 %v376, 7
  %v378 = vsub.s32 0, %v377
  %v379 = vrot.slane %v12, %v378
  %381 = vbcast.lane.b32.xlu0 %v379, 256
  %v382 = vpop.permute.xlu0 %381
  %s384 = sor.u32 256, 8
  %385 = vbcast.lane.b32.xlu0 %v379, %s384
  %v386 = vpop.permute.xlu0 %385
  %v387 = vlaneseq
  %v388 = vshrl.u32 %v387, 7
  %v389 = vsub.s32 1, %v388
  %v390 = vrot.slane %v12, %v389
  %392 = vbcast.lane.b32.xlu0 %v390, 256
  %v393 = vpop.permute.xlu0 %392
  %s395 = sor.u32 256, 8
  %396 = vbcast.lane.b32.xlu0 %v390, %s395
  %v397 = vpop.permute.xlu0 %396
  %v398 = vlaneseq
  %v399 = vshrl.u32 %v398, 7
  %v400 = vsub.s32 2, %v399
  %v401 = vrot.slane %v12, %v400
  %403 = vbcast.lane.b32.xlu0 %v401, 256
  %v404 = vpop.permute.xlu0 %403
  %s406 = sor.u32 256, 8
  %407 = vbcast.lane.b32.xlu0 %v401, %s406
  %v408 = vpop.permute.xlu0 %407
  %v409 = vlaneseq
  %v410 = vshrl.u32 %v409, 7
  %v411 = vsub.s32 3, %v410
  %v412 = vrot.slane %v12, %v411
  %414 = vbcast.lane.b32.xlu0 %v412, 256
  %v415 = vpop.permute.xlu0 %414
  %s417 = sor.u32 256, 8
  %418 = vbcast.lane.b32.xlu0 %v412, %s417
  %v419 = vpop.permute.xlu0 %418
  %v420 = vlaneseq
  %v421 = vshrl.u32 %v420, 7
  %v422 = vsub.s32 4, %v421
  %v423 = vrot.slane %v12, %v422
  %425 = vbcast.lane.b32.xlu0 %v423, 256
  %v426 = vpop.permute.xlu0 %425
  %s428 = sor.u32 256, 8
  %429 = vbcast.lane.b32.xlu0 %v423, %s428
  %v430 = vpop.permute.xlu0 %429
  %v431 = vlaneseq
  %v432 = vshrl.u32 %v431, 7
  %v433 = vsub.s32 5, %v432
  %v434 = vrot.slane %v12, %v433
  %436 = vbcast.lane.b32.xlu0 %v434, 256
  %v437 = vpop.permute.xlu0 %436
  %s439 = sor.u32 256, 8
  %440 = vbcast.lane.b32.xlu0 %v434, %s439
  %v441 = vpop.permute.xlu0 %440
  %v442 = vlaneseq
  %v443 = vshrl.u32 %v442, 7
  %v444 = vsub.s32 6, %v443
  %v445 = vrot.slane %v12, %v444
  %447 = vbcast.lane.b32.xlu0 %v445, 256
  %v448 = vpop.permute.xlu0 %447
  %s450 = sor.u32 256, 8
  %451 = vbcast.lane.b32.xlu0 %v445, %s450
  %v452 = vpop.permute.xlu0 %451
  %v453 = vlaneseq
  %v454 = vshrl.u32 %v453, 7
  %v455 = vsub.s32 7, %v454
  %v456 = vrot.slane %v12, %v455
  %458 = vbcast.lane.b32.xlu0 %v456, 256
  %v459 = vpop.permute.xlu0 %458
  %s461 = sor.u32 256, 8
  %462 = vbcast.lane.b32.xlu0 %v456, %s461
  %v463 = vpop.permute.xlu0 %462
  %v464 = vlaneseq
  %v465 = vshrl.u32 %v464, 7
  %v466 = vsub.s32 0, %v465
  %v467 = vrot.slane %v13, %v466
  %469 = vbcast.lane.b32.xlu0 %v467, 256
  %v470 = vpop.permute.xlu0 %469
  %s472 = sor.u32 256, 8
  %473 = vbcast.lane.b32.xlu0 %v467, %s472
  %v474 = vpop.permute.xlu0 %473
  %v475 = vlaneseq
  %v476 = vshrl.u32 %v475, 7
  %v477 = vsub.s32 1, %v476
  %v478 = vrot.slane %v13, %v477
  %480 = vbcast.lane.b32.xlu0 %v478, 256
  %v481 = vpop.permute.xlu0 %480
  %s483 = sor.u32 256, 8
  %484 = vbcast.lane.b32.xlu0 %v478, %s483
  %v485 = vpop.permute.xlu0 %484
  %v486 = vlaneseq
  %v487 = vshrl.u32 %v486, 7
  %v488 = vsub.s32 2, %v487
  %v489 = vrot.slane %v13, %v488
  %491 = vbcast.lane.b32.xlu0 %v489, 256
  %v492 = vpop.permute.xlu0 %491
  %s494 = sor.u32 256, 8
  %495 = vbcast.lane.b32.xlu0 %v489, %s494
  %v496 = vpop.permute.xlu0 %495
  %v497 = vlaneseq
  %v498 = vshrl.u32 %v497, 7
  %v499 = vsub.s32 3, %v498
  %v500 = vrot.slane %v13, %v499
  %502 = vbcast.lane.b32.xlu0 %v500, 256
  %v503 = vpop.permute.xlu0 %502
  %s505 = sor.u32 256, 8
  %506 = vbcast.lane.b32.xlu0 %v500, %s505
  %v507 = vpop.permute.xlu0 %506
  %v508 = vlaneseq
  %v509 = vshrl.u32 %v508, 7
  %v510 = vsub.s32 4, %v509
  %v511 = vrot.slane %v13, %v510
  %513 = vbcast.lane.b32.xlu0 %v511, 256
  %v514 = vpop.permute.xlu0 %513
  %s516 = sor.u32 256, 8
  %517 = vbcast.lane.b32.xlu0 %v511, %s516
  %v518 = vpop.permute.xlu0 %517
  %v519 = vlaneseq
  %v520 = vshrl.u32 %v519, 7
  %v521 = vsub.s32 5, %v520
  %v522 = vrot.slane %v13, %v521
  %524 = vbcast.lane.b32.xlu0 %v522, 256
  %v525 = vpop.permute.xlu0 %524
  %s527 = sor.u32 256, 8
  %528 = vbcast.lane.b32.xlu0 %v522, %s527
  %v529 = vpop.permute.xlu0 %528
  %v530 = vlaneseq
  %v531 = vshrl.u32 %v530, 7
  %v532 = vsub.s32 6, %v531
  %v533 = vrot.slane %v13, %v532
  %535 = vbcast.lane.b32.xlu0 %v533, 256
  %v536 = vpop.permute.xlu0 %535
  %s538 = sor.u32 256, 8
  %539 = vbcast.lane.b32.xlu0 %v533, %s538
  %v540 = vpop.permute.xlu0 %539
  %v541 = vlaneseq
  %v542 = vshrl.u32 %v541, 7
  %v543 = vsub.s32 7, %v542
  %v544 = vrot.slane %v13, %v543
  %546 = vbcast.lane.b32.xlu0 %v544, 256
  %v547 = vpop.permute.xlu0 %546
  %s549 = sor.u32 256, 8
  %550 = vbcast.lane.b32.xlu0 %v544, %s549
  %v551 = vpop.permute.xlu0 %550
  %v552 = vlaneseq
  %v553 = vshrl.u32 %v552, 7
  %v554 = vsub.s32 0, %v553
  %v555 = vrot.slane %v14, %v554
  %557 = vbcast.lane.b32.xlu0 %v555, 256
  %v558 = vpop.permute.xlu0 %557
  %s560 = sor.u32 256, 8
  %561 = vbcast.lane.b32.xlu0 %v555, %s560
  %v562 = vpop.permute.xlu0 %561
  %v563 = vlaneseq
  %v564 = vshrl.u32 %v563, 7
  %v565 = vsub.s32 1, %v564
  %v566 = vrot.slane %v14, %v565
  %568 = vbcast.lane.b32.xlu0 %v566, 256
  %v569 = vpop.permute.xlu0 %568
  %s571 = sor.u32 256, 8
  %572 = vbcast.lane.b32.xlu0 %v566, %s571
  %v573 = vpop.permute.xlu0 %572
  %v574 = vlaneseq
  %v575 = vshrl.u32 %v574, 7
  %v576 = vsub.s32 2, %v575
  %v577 = vrot.slane %v14, %v576
  %579 = vbcast.lane.b32.xlu0 %v577, 256
  %v580 = vpop.permute.xlu0 %579
  %s582 = sor.u32 256, 8
  %583 = vbcast.lane.b32.xlu0 %v577, %s582
  %v584 = vpop.permute.xlu0 %583
  %v585 = vlaneseq
  %v586 = vshrl.u32 %v585, 7
  %v587 = vsub.s32 3, %v586
  %v588 = vrot.slane %v14, %v587
  %590 = vbcast.lane.b32.xlu0 %v588, 256
  %v591 = vpop.permute.xlu0 %590
  %s593 = sor.u32 256, 8
  %594 = vbcast.lane.b32.xlu0 %v588, %s593
  %v595 = vpop.permute.xlu0 %594
  %v596 = vlaneseq
  %v597 = vshrl.u32 %v596, 7
  %v598 = vsub.s32 4, %v597
  %v599 = vrot.slane %v14, %v598
  %601 = vbcast.lane.b32.xlu0 %v599, 256
  %v602 = vpop.permute.xlu0 %601
  %s604 = sor.u32 256, 8
  %605 = vbcast.lane.b32.xlu0 %v599, %s604
  %v606 = vpop.permute.xlu0 %605
  %v607 = vlaneseq
  %v608 = vshrl.u32 %v607, 7
  %v609 = vsub.s32 5, %v608
  %v610 = vrot.slane %v14, %v609
  %612 = vbcast.lane.b32.xlu0 %v610, 256
  %v613 = vpop.permute.xlu0 %612
  %s615 = sor.u32 256, 8
  %616 = vbcast.lane.b32.xlu0 %v610, %s615
  %v617 = vpop.permute.xlu0 %616
  %v618 = vlaneseq
  %v619 = vshrl.u32 %v618, 7
  %v620 = vsub.s32 6, %v619
  %v621 = vrot.slane %v14, %v620
  %623 = vbcast.lane.b32.xlu0 %v621, 256
  %v624 = vpop.permute.xlu0 %623
  %s626 = sor.u32 256, 8
  %627 = vbcast.lane.b32.xlu0 %v621, %s626
  %v628 = vpop.permute.xlu0 %627
  %v629 = vlaneseq
  %v630 = vshrl.u32 %v629, 7
  %v631 = vsub.s32 7, %v630
  %v632 = vrot.slane %v14, %v631
  %634 = vbcast.lane.b32.xlu0 %v632, 256
  %v635 = vpop.permute.xlu0 %634
  %s637 = sor.u32 256, 8
  %638 = vbcast.lane.b32.xlu0 %v632, %s637
  %v639 = vpop.permute.xlu0 %638
  %v640 = vlaneseq
  %v641 = vshrl.u32 %v640, 7
  %v642 = vsub.s32 0, %v641
  %v643 = vrot.slane %v15, %v642
  %645 = vbcast.lane.b32.xlu0 %v643, 256
  %v646 = vpop.permute.xlu0 %645
  %s648 = sor.u32 256, 8
  %649 = vbcast.lane.b32.xlu0 %v643, %s648
  %v650 = vpop.permute.xlu0 %649
  %v651 = vlaneseq
  %v652 = vshrl.u32 %v651, 7
  %v653 = vsub.s32 1, %v652
  %v654 = vrot.slane %v15, %v653
  %656 = vbcast.lane.b32.xlu0 %v654, 256
  %v657 = vpop.permute.xlu0 %656
  %s659 = sor.u32 256, 8
  %660 = vbcast.lane.b32.xlu0 %v654, %s659
  %v661 = vpop.permute.xlu0 %660
  %v662 = vlaneseq
  %v663 = vshrl.u32 %v662, 7
  %v664 = vsub.s32 2, %v663
  %v665 = vrot.slane %v15, %v664
  %667 = vbcast.lane.b32.xlu0 %v665, 256
  %v668 = vpop.permute.xlu0 %667
  %s670 = sor.u32 256, 8
  %671 = vbcast.lane.b32.xlu0 %v665, %s670
  %v672 = vpop.permute.xlu0 %671
  %v673 = vlaneseq
  %v674 = vshrl.u32 %v673, 7
  %v675 = vsub.s32 3, %v674
  %v676 = vrot.slane %v15, %v675
  %678 = vbcast.lane.b32.xlu0 %v676, 256
  %v679 = vpop.permute.xlu0 %678
  %s681 = sor.u32 256, 8
  %682 = vbcast.lane.b32.xlu0 %v676, %s681
  %v683 = vpop.permute.xlu0 %682
  %v684 = vlaneseq
  %v685 = vshrl.u32 %v684, 7
  %v686 = vsub.s32 4, %v685
  %v687 = vrot.slane %v15, %v686
  %689 = vbcast.lane.b32.xlu0 %v687, 256
  %v690 = vpop.permute.xlu0 %689
  %s692 = sor.u32 256, 8
  %693 = vbcast.lane.b32.xlu0 %v687, %s692
  %v694 = vpop.permute.xlu0 %693
  %v695 = vlaneseq
  %v696 = vshrl.u32 %v695, 7
  %v697 = vsub.s32 5, %v696
  %v698 = vrot.slane %v15, %v697
  %700 = vbcast.lane.b32.xlu0 %v698, 256
  %v701 = vpop.permute.xlu0 %700
  %s703 = sor.u32 256, 8
  %704 = vbcast.lane.b32.xlu0 %v698, %s703
  %v705 = vpop.permute.xlu0 %704
  %v706 = vlaneseq
  %v707 = vshrl.u32 %v706, 7
  %v708 = vsub.s32 6, %v707
  %v709 = vrot.slane %v15, %v708
  %711 = vbcast.lane.b32.xlu0 %v709, 256
  %v712 = vpop.permute.xlu0 %711
  %s714 = sor.u32 256, 8
  %715 = vbcast.lane.b32.xlu0 %v709, %s714
  %v716 = vpop.permute.xlu0 %715
  %v717 = vlaneseq
  %v718 = vshrl.u32 %v717, 7
  %v719 = vsub.s32 7, %v718
  %v720 = vrot.slane %v15, %v719
  %722 = vbcast.lane.b32.xlu0 %v720, 256
  %v723 = vpop.permute.xlu0 %722
  %s725 = sor.u32 256, 8
  %726 = vbcast.lane.b32.xlu0 %v720, %s725
  %v727 = vpop.permute.xlu0 %726
  %v728 = vlaneseq
  %v729 = vshrl.u32 %v728, 7
  %v730 = vsub.s32 0, %v729
  %v731 = vrot.slane %v16, %v730
  %733 = vbcast.lane.b32.xlu0 %v731, 256
  %v734 = vpop.permute.xlu0 %733
  %s736 = sor.u32 256, 8
  %737 = vbcast.lane.b32.xlu0 %v731, %s736
  %v738 = vpop.permute.xlu0 %737
  %v739 = vlaneseq
  %v740 = vshrl.u32 %v739, 7
  %v741 = vsub.s32 1, %v740
  %v742 = vrot.slane %v16, %v741
  %744 = vbcast.lane.b32.xlu0 %v742, 256
  %v745 = vpop.permute.xlu0 %744
  %s747 = sor.u32 256, 8
  %748 = vbcast.lane.b32.xlu0 %v742, %s747
  %v749 = vpop.permute.xlu0 %748
  %v750 = vlaneseq
  %v751 = vshrl.u32 %v750, 7
  %v752 = vsub.s32 2, %v751
  %v753 = vrot.slane %v16, %v752
  %755 = vbcast.lane.b32.xlu0 %v753, 256
  %v756 = vpop.permute.xlu0 %755
  %s758 = sor.u32 256, 8
  %759 = vbcast.lane.b32.xlu0 %v753, %s758
  %v760 = vpop.permute.xlu0 %759
  %v761 = vlaneseq
  %v762 = vshrl.u32 %v761, 7
  %v763 = vsub.s32 3, %v762
  %v764 = vrot.slane %v16, %v763
  %766 = vbcast.lane.b32.xlu0 %v764, 256
  %v767 = vpop.permute.xlu0 %766
  %s769 = sor.u32 256, 8
  %770 = vbcast.lane.b32.xlu0 %v764, %s769
  %v771 = vpop.permute.xlu0 %770
  %v772 = vlaneseq
  %v773 = vshrl.u32 %v772, 7
  %v774 = vsub.s32 4, %v773
  %v775 = vrot.slane %v16, %v774
  %777 = vbcast.lane.b32.xlu0 %v775, 256
  %v778 = vpop.permute.xlu0 %777
  %s780 = sor.u32 256, 8
  %781 = vbcast.lane.b32.xlu0 %v775, %s780
  %v782 = vpop.permute.xlu0 %781
  %v783 = vlaneseq
  %v784 = vshrl.u32 %v783, 7
  %v785 = vsub.s32 5, %v784
  %v786 = vrot.slane %v16, %v785
  %788 = vbcast.lane.b32.xlu0 %v786, 256
  %v789 = vpop.permute.xlu0 %788
  %s791 = sor.u32 256, 8
  %792 = vbcast.lane.b32.xlu0 %v786, %s791
  %v793 = vpop.permute.xlu0 %792
  %v794 = vlaneseq
  %v795 = vshrl.u32 %v794, 7
  %v796 = vsub.s32 6, %v795
  %v797 = vrot.slane %v16, %v796
  %799 = vbcast.lane.b32.xlu0 %v797, 256
  %v800 = vpop.permute.xlu0 %799
  %s802 = sor.u32 256, 8
  %803 = vbcast.lane.b32.xlu0 %v797, %s802
  %v804 = vpop.permute.xlu0 %803
  %v805 = vlaneseq
  %v806 = vshrl.u32 %v805, 7
  %v807 = vsub.s32 7, %v806
  %v808 = vrot.slane %v16, %v807
  %810 = vbcast.lane.b32.xlu0 %v808, 256
  %v811 = vpop.permute.xlu0 %810
  %s813 = sor.u32 256, 8
  %814 = vbcast.lane.b32.xlu0 %v808, %s813
  %v815 = vpop.permute.xlu0 %814
  %v816 = vlaneseq
  %v817 = vshrl.u32 %v816, 7
  %v818 = vsub.s32 0, %v817
  %v819 = vrot.slane %v17, %v818
  %821 = vbcast.lane.b32.xlu0 %v819, 256
  %v822 = vpop.permute.xlu0 %821
  %s824 = sor.u32 256, 8
  %825 = vbcast.lane.b32.xlu0 %v819, %s824
  %v826 = vpop.permute.xlu0 %825
  %v827 = vlaneseq
  %v828 = vshrl.u32 %v827, 7
  %v829 = vsub.s32 1, %v828
  %v830 = vrot.slane %v17, %v829
  %832 = vbcast.lane.b32.xlu0 %v830, 256
  %v833 = vpop.permute.xlu0 %832
  %s835 = sor.u32 256, 8
  %836 = vbcast.lane.b32.xlu0 %v830, %s835
  %v837 = vpop.permute.xlu0 %836
  %v838 = vlaneseq
  %v839 = vshrl.u32 %v838, 7
  %v840 = vsub.s32 2, %v839
  %v841 = vrot.slane %v17, %v840
  %843 = vbcast.lane.b32.xlu0 %v841, 256
  %v844 = vpop.permute.xlu0 %843
  %s846 = sor.u32 256, 8
  %847 = vbcast.lane.b32.xlu0 %v841, %s846
  %v848 = vpop.permute.xlu0 %847
  %v849 = vlaneseq
  %v850 = vshrl.u32 %v849, 7
  %v851 = vsub.s32 3, %v850
  %v852 = vrot.slane %v17, %v851
  %854 = vbcast.lane.b32.xlu0 %v852, 256
  %v855 = vpop.permute.xlu0 %854
  %s857 = sor.u32 256, 8
  %858 = vbcast.lane.b32.xlu0 %v852, %s857
  %v859 = vpop.permute.xlu0 %858
  %v860 = vlaneseq
  %v861 = vshrl.u32 %v860, 7
  %v862 = vsub.s32 4, %v861
  %v863 = vrot.slane %v17, %v862
  %865 = vbcast.lane.b32.xlu0 %v863, 256
  %v866 = vpop.permute.xlu0 %865
  %s868 = sor.u32 256, 8
  %869 = vbcast.lane.b32.xlu0 %v863, %s868
  %v870 = vpop.permute.xlu0 %869
  %v871 = vlaneseq
  %v872 = vshrl.u32 %v871, 7
  %v873 = vsub.s32 5, %v872
  %v874 = vrot.slane %v17, %v873
  %876 = vbcast.lane.b32.xlu0 %v874, 256
  %v877 = vpop.permute.xlu0 %876
  %s879 = sor.u32 256, 8
  %880 = vbcast.lane.b32.xlu0 %v874, %s879
  %v881 = vpop.permute.xlu0 %880
  %v882 = vlaneseq
  %v883 = vshrl.u32 %v882, 7
  %v884 = vsub.s32 6, %v883
  %v885 = vrot.slane %v17, %v884
  %887 = vbcast.lane.b32.xlu0 %v885, 256
  %v888 = vpop.permute.xlu0 %887
  %s890 = sor.u32 256, 8
  %891 = vbcast.lane.b32.xlu0 %v885, %s890
  %v892 = vpop.permute.xlu0 %891
  %v893 = vlaneseq
  %v894 = vshrl.u32 %v893, 7
  %v895 = vsub.s32 7, %v894
  %v896 = vrot.slane %v17, %v895
  %898 = vbcast.lane.b32.xlu0 %v896, 256
  %v899 = vpop.permute.xlu0 %898
  %s901 = sor.u32 256, 8
  %902 = vbcast.lane.b32.xlu0 %v896, %s901
  %v903 = vpop.permute.xlu0 %902
  %v904 = vlaneseq
  %v905 = vshrl.u32 %v904, 7
  %v906 = vsub.s32 0, %v905
  %v907 = vrot.slane %v18, %v906
  %909 = vbcast.lane.b32.xlu0 %v907, 256
  %v910 = vpop.permute.xlu0 %909
  %s912 = sor.u32 256, 8
  %913 = vbcast.lane.b32.xlu0 %v907, %s912
  %v914 = vpop.permute.xlu0 %913
  %v915 = vlaneseq
  %v916 = vshrl.u32 %v915, 7
  %v917 = vsub.s32 1, %v916
  %v918 = vrot.slane %v18, %v917
  %920 = vbcast.lane.b32.xlu0 %v918, 256
  %v921 = vpop.permute.xlu0 %920
  %s923 = sor.u32 256, 8
  %924 = vbcast.lane.b32.xlu0 %v918, %s923
  %v925 = vpop.permute.xlu0 %924
  %v926 = vlaneseq
  %v927 = vshrl.u32 %v926, 7
  %v928 = vsub.s32 2, %v927
  %v929 = vrot.slane %v18, %v928
  %931 = vbcast.lane.b32.xlu0 %v929, 256
  %v932 = vpop.permute.xlu0 %931
  %s934 = sor.u32 256, 8
  %935 = vbcast.lane.b32.xlu0 %v929, %s934
  %v936 = vpop.permute.xlu0 %935
  %v937 = vlaneseq
  %v938 = vshrl.u32 %v937, 7
  %v939 = vsub.s32 3, %v938
  %v940 = vrot.slane %v18, %v939
  %942 = vbcast.lane.b32.xlu0 %v940, 256
  %v943 = vpop.permute.xlu0 %942
  %s945 = sor.u32 256, 8
  %946 = vbcast.lane.b32.xlu0 %v940, %s945
  %v947 = vpop.permute.xlu0 %946
  %v948 = vlaneseq
  %v949 = vshrl.u32 %v948, 7
  %v950 = vsub.s32 4, %v949
  %v951 = vrot.slane %v18, %v950
  %953 = vbcast.lane.b32.xlu0 %v951, 256
  %v954 = vpop.permute.xlu0 %953
  %s956 = sor.u32 256, 8
  %957 = vbcast.lane.b32.xlu0 %v951, %s956
  %v958 = vpop.permute.xlu0 %957
  %v959 = vlaneseq
  %v960 = vshrl.u32 %v959, 7
  %v961 = vsub.s32 5, %v960
  %v962 = vrot.slane %v18, %v961
  %964 = vbcast.lane.b32.xlu0 %v962, 256
  %v965 = vpop.permute.xlu0 %964
  %s967 = sor.u32 256, 8
  %968 = vbcast.lane.b32.xlu0 %v962, %s967
  %v969 = vpop.permute.xlu0 %968
  %v970 = vlaneseq
  %v971 = vshrl.u32 %v970, 7
  %v972 = vsub.s32 6, %v971
  %v973 = vrot.slane %v18, %v972
  %975 = vbcast.lane.b32.xlu0 %v973, 256
  %v976 = vpop.permute.xlu0 %975
  %s978 = sor.u32 256, 8
  %979 = vbcast.lane.b32.xlu0 %v973, %s978
  %v980 = vpop.permute.xlu0 %979
  %v981 = vlaneseq
  %v982 = vshrl.u32 %v981, 7
  %v983 = vsub.s32 7, %v982
  %v984 = vrot.slane %v18, %v983
  %986 = vbcast.lane.b32.xlu0 %v984, 256
  %v987 = vpop.permute.xlu0 %986
  %s989 = sor.u32 256, 8
  %990 = vbcast.lane.b32.xlu0 %v984, %s989
  %v991 = vpop.permute.xlu0 %990
  %v992 = vlaneseq
  %v993 = vshrl.u32 %v992, 7
  %v994 = vsub.s32 0, %v993
  %v995 = vrot.slane %v19, %v994
  %997 = vbcast.lane.b32.xlu0 %v995, 256
  %v998 = vpop.permute.xlu0 %997
  %s1000 = sor.u32 256, 8
  %1001 = vbcast.lane.b32.xlu0 %v995, %s1000
  %v1002 = vpop.permute.xlu0 %1001
  %v1003 = vlaneseq
  %v1004 = vshrl.u32 %v1003, 7
  %v1005 = vsub.s32 1, %v1004
  %v1006 = vrot.slane %v19, %v1005
  %1008 = vbcast.lane.b32.xlu0 %v1006, 256
  %v1009 = vpop.permute.xlu0 %1008
  %s1011 = sor.u32 256, 8
  %1012 = vbcast.lane.b32.xlu0 %v1006, %s1011
  %v1013 = vpop.permute.xlu0 %1012
  %v1014 = vlaneseq
  %v1015 = vshrl.u32 %v1014, 7
  %v1016 = vsub.s32 2, %v1015
  %v1017 = vrot.slane %v19, %v1016
  %1019 = vbcast.lane.b32.xlu0 %v1017, 256
  %v1020 = vpop.permute.xlu0 %1019
  %s1022 = sor.u32 256, 8
  %1023 = vbcast.lane.b32.xlu0 %v1017, %s1022
  %v1024 = vpop.permute.xlu0 %1023
  %v1025 = vlaneseq
  %v1026 = vshrl.u32 %v1025, 7
  %v1027 = vsub.s32 3, %v1026
  %v1028 = vrot.slane %v19, %v1027
  %1030 = vbcast.lane.b32.xlu0 %v1028, 256
  %v1031 = vpop.permute.xlu0 %1030
  %s1033 = sor.u32 256, 8
  %1034 = vbcast.lane.b32.xlu0 %v1028, %s1033
  %v1035 = vpop.permute.xlu0 %1034
  %v1036 = vlaneseq
  %v1037 = vshrl.u32 %v1036, 7
  %v1038 = vsub.s32 4, %v1037
  %v1039 = vrot.slane %v19, %v1038
  %1041 = vbcast.lane.b32.xlu0 %v1039, 256
  %v1042 = vpop.permute.xlu0 %1041
  %s1044 = sor.u32 256, 8
  %1045 = vbcast.lane.b32.xlu0 %v1039, %s1044
  %v1046 = vpop.permute.xlu0 %1045
  %v1047 = vlaneseq
  %v1048 = vshrl.u32 %v1047, 7
  %v1049 = vsub.s32 5, %v1048
  %v1050 = vrot.slane %v19, %v1049
  %1052 = vbcast.lane.b32.xlu0 %v1050, 256
  %v1053 = vpop.permute.xlu0 %1052
  %s1055 = sor.u32 256, 8
  %1056 = vbcast.lane.b32.xlu0 %v1050, %s1055
  %v1057 = vpop.permute.xlu0 %1056
  %v1058 = vlaneseq
  %v1059 = vshrl.u32 %v1058, 7
  %v1060 = vsub.s32 6, %v1059
  %v1061 = vrot.slane %v19, %v1060
  %1063 = vbcast.lane.b32.xlu0 %v1061, 256
  %v1064 = vpop.permute.xlu0 %1063
  %s1066 = sor.u32 256, 8
  %1067 = vbcast.lane.b32.xlu0 %v1061, %s1066
  %v1068 = vpop.permute.xlu0 %1067
  %v1069 = vlaneseq
  %v1070 = vshrl.u32 %v1069, 7
  %v1071 = vsub.s32 7, %v1070
  %v1072 = vrot.slane %v19, %v1071
  %1074 = vbcast.lane.b32.xlu0 %v1072, 256
  %v1075 = vpop.permute.xlu0 %1074
  %s1077 = sor.u32 256, 8
  %1078 = vbcast.lane.b32.xlu0 %v1072, %s1077
  %v1079 = vpop.permute.xlu0 %1078
  %v1080 = vlaneseq
  %v1081 = vshrl.u32 %v1080, 7
  %v1082 = vsub.s32 0, %v1081
  %v1083 = vrot.slane %v20, %v1082
  %1085 = vbcast.lane.b32.xlu0 %v1083, 256
  %v1086 = vpop.permute.xlu0 %1085
  %s1088 = sor.u32 256, 8
  %1089 = vbcast.lane.b32.xlu0 %v1083, %s1088
  %v1090 = vpop.permute.xlu0 %1089
  %v1091 = vlaneseq
  %v1092 = vshrl.u32 %v1091, 7
  %v1093 = vsub.s32 1, %v1092
  %v1094 = vrot.slane %v20, %v1093
  %1096 = vbcast.lane.b32.xlu0 %v1094, 256
  %v1097 = vpop.permute.xlu0 %1096
  %s1099 = sor.u32 256, 8
  %1100 = vbcast.lane.b32.xlu0 %v1094, %s1099
  %v1101 = vpop.permute.xlu0 %1100
  %v1102 = vlaneseq
  %v1103 = vshrl.u32 %v1102, 7
  %v1104 = vsub.s32 2, %v1103
  %v1105 = vrot.slane %v20, %v1104
  %1107 = vbcast.lane.b32.xlu0 %v1105, 256
  %v1108 = vpop.permute.xlu0 %1107
  %s1110 = sor.u32 256, 8
  %1111 = vbcast.lane.b32.xlu0 %v1105, %s1110
  %v1112 = vpop.permute.xlu0 %1111
  %v1113 = vlaneseq
  %v1114 = vshrl.u32 %v1113, 7
  %v1115 = vsub.s32 3, %v1114
  %v1116 = vrot.slane %v20, %v1115
  %1118 = vbcast.lane.b32.xlu0 %v1116, 256
  %v1119 = vpop.permute.xlu0 %1118
  %s1121 = sor.u32 256, 8
  %1122 = vbcast.lane.b32.xlu0 %v1116, %s1121
  %v1123 = vpop.permute.xlu0 %1122
  %v1124 = vlaneseq
  %v1125 = vshrl.u32 %v1124, 7
  %v1126 = vsub.s32 4, %v1125
  %v1127 = vrot.slane %v20, %v1126
  %1129 = vbcast.lane.b32.xlu0 %v1127, 256
  %v1130 = vpop.permute.xlu0 %1129
  %s1132 = sor.u32 256, 8
  %1133 = vbcast.lane.b32.xlu0 %v1127, %s1132
  %v1134 = vpop.permute.xlu0 %1133
  %v1135 = vlaneseq
  %v1136 = vshrl.u32 %v1135, 7
  %v1137 = vsub.s32 5, %v1136
  %v1138 = vrot.slane %v20, %v1137
  %1140 = vbcast.lane.b32.xlu0 %v1138, 256
  %v1141 = vpop.permute.xlu0 %1140
  %s1143 = sor.u32 256, 8
  %1144 = vbcast.lane.b32.xlu0 %v1138, %s1143
  %v1145 = vpop.permute.xlu0 %1144
  %v1146 = vlaneseq
  %v1147 = vshrl.u32 %v1146, 7
  %v1148 = vsub.s32 6, %v1147
  %v1149 = vrot.slane %v20, %v1148
  %1151 = vbcast.lane.b32.xlu0 %v1149, 256
  %v1152 = vpop.permute.xlu0 %1151
  %s1154 = sor.u32 256, 8
  %1155 = vbcast.lane.b32.xlu0 %v1149, %s1154
  %v1156 = vpop.permute.xlu0 %1155
  %v1157 = vlaneseq
  %v1158 = vshrl.u32 %v1157, 7
  %v1159 = vsub.s32 7, %v1158
  %v1160 = vrot.slane %v20, %v1159
  %1162 = vbcast.lane.b32.xlu0 %v1160, 256
  %v1163 = vpop.permute.xlu0 %1162
  %s1165 = sor.u32 256, 8
  %1166 = vbcast.lane.b32.xlu0 %v1160, %s1165
  %v1167 = vpop.permute.xlu0 %1166
  %v1168 = vlaneseq
  %v1169 = vshrl.u32 %v1168, 7
  %v1170 = vsub.s32 0, %v1169
  %v1171 = vrot.slane %v21, %v1170
  %1173 = vbcast.lane.b32.xlu0 %v1171, 256
  %v1174 = vpop.permute.xlu0 %1173
  %s1176 = sor.u32 256, 8
  %1177 = vbcast.lane.b32.xlu0 %v1171, %s1176
  %v1178 = vpop.permute.xlu0 %1177
  %v1179 = vlaneseq
  %v1180 = vshrl.u32 %v1179, 7
  %v1181 = vsub.s32 1, %v1180
  %v1182 = vrot.slane %v21, %v1181
  %1184 = vbcast.lane.b32.xlu0 %v1182, 256
  %v1185 = vpop.permute.xlu0 %1184
  %s1187 = sor.u32 256, 8
  %1188 = vbcast.lane.b32.xlu0 %v1182, %s1187
  %v1189 = vpop.permute.xlu0 %1188
  %v1190 = vlaneseq
  %v1191 = vshrl.u32 %v1190, 7
  %v1192 = vsub.s32 2, %v1191
  %v1193 = vrot.slane %v21, %v1192
  %1195 = vbcast.lane.b32.xlu0 %v1193, 256
  %v1196 = vpop.permute.xlu0 %1195
  %s1198 = sor.u32 256, 8
  %1199 = vbcast.lane.b32.xlu0 %v1193, %s1198
  %v1200 = vpop.permute.xlu0 %1199
  %v1201 = vlaneseq
  %v1202 = vshrl.u32 %v1201, 7
  %v1203 = vsub.s32 3, %v1202
  %v1204 = vrot.slane %v21, %v1203
  %1206 = vbcast.lane.b32.xlu0 %v1204, 256
  %v1207 = vpop.permute.xlu0 %1206
  %s1209 = sor.u32 256, 8
  %1210 = vbcast.lane.b32.xlu0 %v1204, %s1209
  %v1211 = vpop.permute.xlu0 %1210
  %v1212 = vlaneseq
  %v1213 = vshrl.u32 %v1212, 7
  %v1214 = vsub.s32 4, %v1213
  %v1215 = vrot.slane %v21, %v1214
  %1217 = vbcast.lane.b32.xlu0 %v1215, 256
  %v1218 = vpop.permute.xlu0 %1217
  %s1220 = sor.u32 256, 8
  %1221 = vbcast.lane.b32.xlu0 %v1215, %s1220
  %v1222 = vpop.permute.xlu0 %1221
  %v1223 = vlaneseq
  %v1224 = vshrl.u32 %v1223, 7
  %v1225 = vsub.s32 5, %v1224
  %v1226 = vrot.slane %v21, %v1225
  %1228 = vbcast.lane.b32.xlu0 %v1226, 256
  %v1229 = vpop.permute.xlu0 %1228
  %s1231 = sor.u32 256, 8
  %1232 = vbcast.lane.b32.xlu0 %v1226, %s1231
  %v1233 = vpop.permute.xlu0 %1232
  %v1234 = vlaneseq
  %v1235 = vshrl.u32 %v1234, 7
  %v1236 = vsub.s32 6, %v1235
  %v1237 = vrot.slane %v21, %v1236
  %1239 = vbcast.lane.b32.xlu0 %v1237, 256
  %v1240 = vpop.permute.xlu0 %1239
  %s1242 = sor.u32 256, 8
  %1243 = vbcast.lane.b32.xlu0 %v1237, %s1242
  %v1244 = vpop.permute.xlu0 %1243
  %v1245 = vlaneseq
  %v1246 = vshrl.u32 %v1245, 7
  %v1247 = vsub.s32 7, %v1246
  %v1248 = vrot.slane %v21, %v1247
  %1250 = vbcast.lane.b32.xlu0 %v1248, 256
  %v1251 = vpop.permute.xlu0 %1250
  %s1253 = sor.u32 256, 8
  %1254 = vbcast.lane.b32.xlu0 %v1248, %s1253
  %v1255 = vpop.permute.xlu0 %1254
  %v1256 = vlaneseq
  %v1257 = vshrl.u32 %v1256, 7
  %v1258 = vsub.s32 0, %v1257
  %v1259 = vrot.slane %v22, %v1258
  %1261 = vbcast.lane.b32.xlu0 %v1259, 256
  %v1262 = vpop.permute.xlu0 %1261
  %s1264 = sor.u32 256, 8
  %1265 = vbcast.lane.b32.xlu0 %v1259, %s1264
  %v1266 = vpop.permute.xlu0 %1265
  %v1267 = vlaneseq
  %v1268 = vshrl.u32 %v1267, 7
  %v1269 = vsub.s32 1, %v1268
  %v1270 = vrot.slane %v22, %v1269
  %1272 = vbcast.lane.b32.xlu0 %v1270, 256
  %v1273 = vpop.permute.xlu0 %1272
  %s1275 = sor.u32 256, 8
  %1276 = vbcast.lane.b32.xlu0 %v1270, %s1275
  %v1277 = vpop.permute.xlu0 %1276
  %v1278 = vlaneseq
  %v1279 = vshrl.u32 %v1278, 7
  %v1280 = vsub.s32 2, %v1279
  %v1281 = vrot.slane %v22, %v1280
  %1283 = vbcast.lane.b32.xlu0 %v1281, 256
  %v1284 = vpop.permute.xlu0 %1283
  %s1286 = sor.u32 256, 8
  %1287 = vbcast.lane.b32.xlu0 %v1281, %s1286
  %v1288 = vpop.permute.xlu0 %1287
  %v1289 = vlaneseq
  %v1290 = vshrl.u32 %v1289, 7
  %v1291 = vsub.s32 3, %v1290
  %v1292 = vrot.slane %v22, %v1291
  %1294 = vbcast.lane.b32.xlu0 %v1292, 256
  %v1295 = vpop.permute.xlu0 %1294
  %s1297 = sor.u32 256, 8
  %1298 = vbcast.lane.b32.xlu0 %v1292, %s1297
  %v1299 = vpop.permute.xlu0 %1298
  %v1300 = vlaneseq
  %v1301 = vshrl.u32 %v1300, 7
  %v1302 = vsub.s32 4, %v1301
  %v1303 = vrot.slane %v22, %v1302
  %1305 = vbcast.lane.b32.xlu0 %v1303, 256
  %v1306 = vpop.permute.xlu0 %1305
  %s1308 = sor.u32 256, 8
  %1309 = vbcast.lane.b32.xlu0 %v1303, %s1308
  %v1310 = vpop.permute.xlu0 %1309
  %v1311 = vlaneseq
  %v1312 = vshrl.u32 %v1311, 7
  %v1313 = vsub.s32 5, %v1312
  %v1314 = vrot.slane %v22, %v1313
  %1316 = vbcast.lane.b32.xlu0 %v1314, 256
  %v1317 = vpop.permute.xlu0 %1316
  %s1319 = sor.u32 256, 8
  %1320 = vbcast.lane.b32.xlu0 %v1314, %s1319
  %v1321 = vpop.permute.xlu0 %1320
  %v1322 = vlaneseq
  %v1323 = vshrl.u32 %v1322, 7
  %v1324 = vsub.s32 6, %v1323
  %v1325 = vrot.slane %v22, %v1324
  %1327 = vbcast.lane.b32.xlu0 %v1325, 256
  %v1328 = vpop.permute.xlu0 %1327
  %s1330 = sor.u32 256, 8
  %1331 = vbcast.lane.b32.xlu0 %v1325, %s1330
  %v1332 = vpop.permute.xlu0 %1331
  %v1333 = vlaneseq
  %v1334 = vshrl.u32 %v1333, 7
  %v1335 = vsub.s32 7, %v1334
  %v1336 = vrot.slane %v22, %v1335
  %1338 = vbcast.lane.b32.xlu0 %v1336, 256
  %v1339 = vpop.permute.xlu0 %1338
  %s1341 = sor.u32 256, 8
  %1342 = vbcast.lane.b32.xlu0 %v1336, %s1341
  %v1343 = vpop.permute.xlu0 %1342
  %v1344 = vlaneseq
  %v1345 = vshrl.u32 %v1344, 7
  %v1346 = vsub.s32 0, %v1345
  %v1347 = vrot.slane %v23, %v1346
  %1349 = vbcast.lane.b32.xlu0 %v1347, 256
  %v1350 = vpop.permute.xlu0 %1349
  %s1352 = sor.u32 256, 8
  %1353 = vbcast.lane.b32.xlu0 %v1347, %s1352
  %v1354 = vpop.permute.xlu0 %1353
  %v1355 = vlaneseq
  %v1356 = vshrl.u32 %v1355, 7
  %v1357 = vsub.s32 1, %v1356
  %v1358 = vrot.slane %v23, %v1357
  %1360 = vbcast.lane.b32.xlu0 %v1358, 256
  %v1361 = vpop.permute.xlu0 %1360
  %s1363 = sor.u32 256, 8
  %1364 = vbcast.lane.b32.xlu0 %v1358, %s1363
  %v1365 = vpop.permute.xlu0 %1364
  %v1366 = vlaneseq
  %v1367 = vshrl.u32 %v1366, 7
  %v1368 = vsub.s32 2, %v1367
  %v1369 = vrot.slane %v23, %v1368
  %1371 = vbcast.lane.b32.xlu0 %v1369, 256
  %v1372 = vpop.permute.xlu0 %1371
  %s1374 = sor.u32 256, 8
  %1375 = vbcast.lane.b32.xlu0 %v1369, %s1374
  %v1376 = vpop.permute.xlu0 %1375
  %v1377 = vlaneseq
  %v1378 = vshrl.u32 %v1377, 7
  %v1379 = vsub.s32 3, %v1378
  %v1380 = vrot.slane %v23, %v1379
  %1382 = vbcast.lane.b32.xlu0 %v1380, 256
  %v1383 = vpop.permute.xlu0 %1382
  %s1385 = sor.u32 256, 8
  %1386 = vbcast.lane.b32.xlu0 %v1380, %s1385
  %v1387 = vpop.permute.xlu0 %1386
  %v1388 = vlaneseq
  %v1389 = vshrl.u32 %v1388, 7
  %v1390 = vsub.s32 4, %v1389
  %v1391 = vrot.slane %v23, %v1390
  %1393 = vbcast.lane.b32.xlu0 %v1391, 256
  %v1394 = vpop.permute.xlu0 %1393
  %s1396 = sor.u32 256, 8
  %1397 = vbcast.lane.b32.xlu0 %v1391, %s1396
  %v1398 = vpop.permute.xlu0 %1397
  %v1399 = vlaneseq
  %v1400 = vshrl.u32 %v1399, 7
  %v1401 = vsub.s32 5, %v1400
  %v1402 = vrot.slane %v23, %v1401
  %1404 = vbcast.lane.b32.xlu0 %v1402, 256
  %v1405 = vpop.permute.xlu0 %1404
  %s1407 = sor.u32 256, 8
  %1408 = vbcast.lane.b32.xlu0 %v1402, %s1407
  %v1409 = vpop.permute.xlu0 %1408
  %v1410 = vlaneseq
  %v1411 = vshrl.u32 %v1410, 7
  %v1412 = vsub.s32 6, %v1411
  %v1413 = vrot.slane %v23, %v1412
  %1415 = vbcast.lane.b32.xlu0 %v1413, 256
  %v1416 = vpop.permute.xlu0 %1415
  %s1418 = sor.u32 256, 8
  %1419 = vbcast.lane.b32.xlu0 %v1413, %s1418
  %v1420 = vpop.permute.xlu0 %1419
  %v1421 = vlaneseq
  %v1422 = vshrl.u32 %v1421, 7
  %v1423 = vsub.s32 7, %v1422
  %v1424 = vrot.slane %v23, %v1423
  %1426 = vbcast.lane.b32.xlu0 %v1424, 256
  %v1427 = vpop.permute.xlu0 %1426
  %s1429 = sor.u32 256, 8
  %1430 = vbcast.lane.b32.xlu0 %v1424, %s1429
  %v1431 = vpop.permute.xlu0 %1430
  %v1432 = vcombine.low %v30, %v52
  %v1433 = vcombine.high %v30, %v52
  %v1435 = vunpack.c.l.s4 1983009808
  %v1436 = vunpack.c.0.s8 %v1435
  %v1437 = vlaneseq
  %v1438 = vshrl.u32 %v1437, 7
  %v1439 = vsub.s32 %v1436, %v1438
  %v1440 = vrot.slane %v1432, %v1439
  %v1442 = vunpack.c.l.s4 1983009808
  %v1443 = vunpack.c.0.s8 %v1442
  %v1444 = vlaneseq
  %v1445 = vshrl.u32 %v1444, 7
  %v1446 = vsub.s32 %v1443, %v1445
  %v1447 = vrot.slane %v1433, %v1446
  %v1448 = vcombine.low %v41, %v63
  %v1449 = vcombine.high %v41, %v63
  %v1451 = vunpack.c.l.s4 1983009808
  %v1452 = vunpack.c.0.s8 %v1451
  %v1453 = vlaneseq
  %v1454 = vshrl.u32 %v1453, 7
  %v1455 = vsub.s32 %v1452, %v1454
  %v1456 = vrot.slane %v1448, %v1455
  %v1458 = vunpack.c.l.s4 1983009808
  %v1459 = vunpack.c.0.s8 %v1458
  %v1460 = vlaneseq
  %v1461 = vshrl.u32 %v1460, 7
  %v1462 = vsub.s32 %v1459, %v1461
  %v1463 = vrot.slane %v1449, %v1462
  %v1464 = vcombine.low %v74, %v96
  %v1465 = vcombine.high %v74, %v96
  %v1467 = vunpack.c.l.s4 1983009808
  %v1468 = vunpack.c.0.s8 %v1467
  %v1469 = vlaneseq
  %v1470 = vshrl.u32 %v1469, 7
  %v1471 = vsub.s32 %v1468, %v1470
  %v1472 = vrot.slane %v1464, %v1471
  %v1474 = vunpack.c.l.s4 1983009808
  %v1475 = vunpack.c.0.s8 %v1474
  %v1476 = vlaneseq
  %v1477 = vshrl.u32 %v1476, 7
  %v1478 = vsub.s32 %v1475, %v1477
  %v1479 = vrot.slane %v1465, %v1478
  %v1480 = vcombine.low %v85, %v107
  %v1481 = vcombine.high %v85, %v107
  %v1483 = vunpack.c.l.s4 1983009808
  %v1484 = vunpack.c.0.s8 %v1483
  %v1485 = vlaneseq
  %v1486 = vshrl.u32 %v1485, 7
  %v1487 = vsub.s32 %v1484, %v1486
  %v1488 = vrot.slane %v1480, %v1487
  %v1490 = vunpack.c.l.s4 1983009808
  %v1491 = vunpack.c.0.s8 %v1490
  %v1492 = vlaneseq
  %v1493 = vshrl.u32 %v1492, 7
  %v1494 = vsub.s32 %v1491, %v1493
  %v1495 = vrot.slane %v1481, %v1494
  %v1496 = vcombine.low %v1440, %v1456
  %v1497 = vcombine.high %v1440, %v1456
  %v1499 = vunpack.c.l.s4 1934713408
  %v1500 = vunpack.c.0.s8 %v1499
  %v1501 = vlaneseq
  %v1502 = vshrl.u32 %v1501, 7
  %v1503 = vsub.s32 %v1500, %v1502
  %v1504 = vrot.slane %v1496, %v1503
  %v1506 = vunpack.c.l.s4 1934713408
  %v1507 = vunpack.c.0.s8 %v1506
  %v1508 = vlaneseq
  %v1509 = vshrl.u32 %v1508, 7
  %v1510 = vsub.s32 %v1507, %v1509
  %v1511 = vrot.slane %v1497, %v1510
  %v1512 = vcombine.low %v1447, %v1463
  %v1513 = vcombine.high %v1447, %v1463
  %v1515 = vunpack.c.l.s4 1934713408
  %v1516 = vunpack.c.0.s8 %v1515
  %v1517 = vlaneseq
  %v1518 = vshrl.u32 %v1517, 7
  %v1519 = vsub.s32 %v1516, %v1518
  %v1520 = vrot.slane %v1512, %v1519
  %v1522 = vunpack.c.l.s4 1934713408
  %v1523 = vunpack.c.0.s8 %v1522
  %v1524 = vlaneseq
  %v1525 = vshrl.u32 %v1524, 7
  %v1526 = vsub.s32 %v1523, %v1525
  %v1527 = vrot.slane %v1513, %v1526
  %v1528 = vcombine.low %v1472, %v1488
  %v1529 = vcombine.high %v1472, %v1488
  %v1531 = vunpack.c.l.s4 1934713408
  %v1532 = vunpack.c.0.s8 %v1531
  %v1533 = vlaneseq
  %v1534 = vshrl.u32 %v1533, 7
  %v1535 = vsub.s32 %v1532, %v1534
  %v1536 = vrot.slane %v1528, %v1535
  %v1538 = vunpack.c.l.s4 1934713408
  %v1539 = vunpack.c.0.s8 %v1538
  %v1540 = vlaneseq
  %v1541 = vshrl.u32 %v1540, 7
  %v1542 = vsub.s32 %v1539, %v1541
  %v1543 = vrot.slane %v1529, %v1542
  %v1544 = vcombine.low %v1479, %v1495
  %v1545 = vcombine.high %v1479, %v1495
  %v1547 = vunpack.c.l.s4 1934713408
  %v1548 = vunpack.c.0.s8 %v1547
  %v1549 = vlaneseq
  %v1550 = vshrl.u32 %v1549, 7
  %v1551 = vsub.s32 %v1548, %v1550
  %v1552 = vrot.slane %v1544, %v1551
  %v1554 = vunpack.c.l.s4 1934713408
  %v1555 = vunpack.c.0.s8 %v1554
  %v1556 = vlaneseq
  %v1557 = vshrl.u32 %v1556, 7
  %v1558 = vsub.s32 %v1555, %v1557
  %v1559 = vrot.slane %v1545, %v1558
  %v1560 = vcombine.low %v1504, %v1536
  %v1561 = vcombine.high %v1504, %v1536
  %v1562 = vcombine.low %v1511, %v1543
  %v1563 = vcombine.high %v1511, %v1543
  %v1564 = vcombine.low %v1520, %v1552
  %v1565 = vcombine.high %v1520, %v1552
  %v1566 = vcombine.low %v1527, %v1559
  %v1567 = vcombine.high %v1527, %v1559
  %v1568 = vcombine.low %v118, %v140
  %v1569 = vcombine.high %v118, %v140
  %v1571 = vunpack.c.l.s4 1983009808
  %v1572 = vunpack.c.0.s8 %v1571
  %v1573 = vlaneseq
  %v1574 = vshrl.u32 %v1573, 7
  %v1575 = vsub.s32 %v1572, %v1574
  %v1576 = vrot.slane %v1568, %v1575
  %v1578 = vunpack.c.l.s4 1983009808
  %v1579 = vunpack.c.0.s8 %v1578
  %v1580 = vlaneseq
  %v1581 = vshrl.u32 %v1580, 7
  %v1582 = vsub.s32 %v1579, %v1581
  %v1583 = vrot.slane %v1569, %v1582
  %v1584 = vcombine.low %v129, %v151
  %v1585 = vcombine.high %v129, %v151
  %v1587 = vunpack.c.l.s4 1983009808
  %v1588 = vunpack.c.0.s8 %v1587
  %v1589 = vlaneseq
  %v1590 = vshrl.u32 %v1589, 7
  %v1591 = vsub.s32 %v1588, %v1590
  %v1592 = vrot.slane %v1584, %v1591
  %v1594 = vunpack.c.l.s4 1983009808
  %v1595 = vunpack.c.0.s8 %v1594
  %v1596 = vlaneseq
  %v1597 = vshrl.u32 %v1596, 7
  %v1598 = vsub.s32 %v1595, %v1597
  %v1599 = vrot.slane %v1585, %v1598
  %v1600 = vcombine.low %v162, %v184
  %v1601 = vcombine.high %v162, %v184
  %v1603 = vunpack.c.l.s4 1983009808
  %v1604 = vunpack.c.0.s8 %v1603
  %v1605 = vlaneseq
  %v1606 = vshrl.u32 %v1605, 7
  %v1607 = vsub.s32 %v1604, %v1606
  %v1608 = vrot.slane %v1600, %v1607
  %v1610 = vunpack.c.l.s4 1983009808
  %v1611 = vunpack.c.0.s8 %v1610
  %v1612 = vlaneseq
  %v1613 = vshrl.u32 %v1612, 7
  %v1614 = vsub.s32 %v1611, %v1613
  %v1615 = vrot.slane %v1601, %v1614
  %v1616 = vcombine.low %v173, %v195
  %v1617 = vcombine.high %v173, %v195
  %v1619 = vunpack.c.l.s4 1983009808
  %v1620 = vunpack.c.0.s8 %v1619
  %v1621 = vlaneseq
  %v1622 = vshrl.u32 %v1621, 7
  %v1623 = vsub.s32 %v1620, %v1622
  %v1624 = vrot.slane %v1616, %v1623
  %v1626 = vunpack.c.l.s4 1983009808
  %v1627 = vunpack.c.0.s8 %v1626
  %v1628 = vlaneseq
  %v1629 = vshrl.u32 %v1628, 7
  %v1630 = vsub.s32 %v1627, %v1629
  %v1631 = vrot.slane %v1617, %v1630
  %v1632 = vcombine.low %v1576, %v1592
  %v1633 = vcombine.high %v1576, %v1592
  %v1635 = vunpack.c.l.s4 1934713408
  %v1636 = vunpack.c.0.s8 %v1635
  %v1637 = vlaneseq
  %v1638 = vshrl.u32 %v1637, 7
  %v1639 = vsub.s32 %v1636, %v1638
  %v1640 = vrot.slane %v1632, %v1639
  %v1642 = vunpack.c.l.s4 1934713408
  %v1643 = vunpack.c.0.s8 %v1642
  %v1644 = vlaneseq
  %v1645 = vshrl.u32 %v1644, 7
  %v1646 = vsub.s32 %v1643, %v1645
  %v1647 = vrot.slane %v1633, %v1646
  %v1648 = vcombine.low %v1583, %v1599
  %v1649 = vcombine.high %v1583, %v1599
  %v1651 = vunpack.c.l.s4 1934713408
  %v1652 = vunpack.c.0.s8 %v1651
  %v1653 = vlaneseq
  %v1654 = vshrl.u32 %v1653, 7
  %v1655 = vsub.s32 %v1652, %v1654
  %v1656 = vrot.slane %v1648, %v1655
  %v1658 = vunpack.c.l.s4 1934713408
  %v1659 = vunpack.c.0.s8 %v1658
  %v1660 = vlaneseq
  %v1661 = vshrl.u32 %v1660, 7
  %v1662 = vsub.s32 %v1659, %v1661
  %v1663 = vrot.slane %v1649, %v1662
  %v1664 = vcombine.low %v1608, %v1624
  %v1665 = vcombine.high %v1608, %v1624
  %v1667 = vunpack.c.l.s4 1934713408
  %v1668 = vunpack.c.0.s8 %v1667
  %v1669 = vlaneseq
  %v1670 = vshrl.u32 %v1669, 7
  %v1671 = vsub.s32 %v1668, %v1670
  %v1672 = vrot.slane %v1664, %v1671
  %v1674 = vunpack.c.l.s4 1934713408
  %v1675 = vunpack.c.0.s8 %v1674
  %v1676 = vlaneseq
  %v1677 = vshrl.u32 %v1676, 7
  %v1678 = vsub.s32 %v1675, %v1677
  %v1679 = vrot.slane %v1665, %v1678
  %v1680 = vcombine.low %v1615, %v1631
  %v1681 = vcombine.high %v1615, %v1631
  %v1683 = vunpack.c.l.s4 1934713408
  %v1684 = vunpack.c.0.s8 %v1683
  %v1685 = vlaneseq
  %v1686 = vshrl.u32 %v1685, 7
  %v1687 = vsub.s32 %v1684, %v1686
  %v1688 = vrot.slane %v1680, %v1687
  %v1690 = vunpack.c.l.s4 1934713408
  %v1691 = vunpack.c.0.s8 %v1690
  %v1692 = vlaneseq
  %v1693 = vshrl.u32 %v1692, 7
  %v1694 = vsub.s32 %v1691, %v1693
  %v1695 = vrot.slane %v1681, %v1694
  %v1696 = vcombine.low %v1640, %v1672
  %v1697 = vcombine.high %v1640, %v1672
  %v1698 = vcombine.low %v1647, %v1679
  %v1699 = vcombine.high %v1647, %v1679
  %v1700 = vcombine.low %v1656, %v1688
  %v1701 = vcombine.high %v1656, %v1688
  %v1702 = vcombine.low %v1663, %v1695
  %v1703 = vcombine.high %v1663, %v1695
  %v1704 = vcombine.low %v206, %v228
  %v1705 = vcombine.high %v206, %v228
  %v1707 = vunpack.c.l.s4 1983009808
  %v1708 = vunpack.c.0.s8 %v1707
  %v1709 = vlaneseq
  %v1710 = vshrl.u32 %v1709, 7
  %v1711 = vsub.s32 %v1708, %v1710
  %v1712 = vrot.slane %v1704, %v1711
  %v1714 = vunpack.c.l.s4 1983009808
  %v1715 = vunpack.c.0.s8 %v1714
  %v1716 = vlaneseq
  %v1717 = vshrl.u32 %v1716, 7
  %v1718 = vsub.s32 %v1715, %v1717
  %v1719 = vrot.slane %v1705, %v1718
  %v1720 = vcombine.low %v217, %v239
  %v1721 = vcombine.high %v217, %v239
  %v1723 = vunpack.c.l.s4 1983009808
  %v1724 = vunpack.c.0.s8 %v1723
  %v1725 = vlaneseq
  %v1726 = vshrl.u32 %v1725, 7
  %v1727 = vsub.s32 %v1724, %v1726
  %v1728 = vrot.slane %v1720, %v1727
  %v1730 = vunpack.c.l.s4 1983009808
  %v1731 = vunpack.c.0.s8 %v1730
  %v1732 = vlaneseq
  %v1733 = vshrl.u32 %v1732, 7
  %v1734 = vsub.s32 %v1731, %v1733
  %v1735 = vrot.slane %v1721, %v1734
  %v1736 = vcombine.low %v250, %v272
  %v1737 = vcombine.high %v250, %v272
  %v1739 = vunpack.c.l.s4 1983009808
  %v1740 = vunpack.c.0.s8 %v1739
  %v1741 = vlaneseq
  %v1742 = vshrl.u32 %v1741, 7
  %v1743 = vsub.s32 %v1740, %v1742
  %v1744 = vrot.slane %v1736, %v1743
  %v1746 = vunpack.c.l.s4 1983009808
  %v1747 = vunpack.c.0.s8 %v1746
  %v1748 = vlaneseq
  %v1749 = vshrl.u32 %v1748, 7
  %v1750 = vsub.s32 %v1747, %v1749
  %v1751 = vrot.slane %v1737, %v1750
  %v1752 = vcombine.low %v261, %v283
  %v1753 = vcombine.high %v261, %v283
  %v1755 = vunpack.c.l.s4 1983009808
  %v1756 = vunpack.c.0.s8 %v1755
  %v1757 = vlaneseq
  %v1758 = vshrl.u32 %v1757, 7
  %v1759 = vsub.s32 %v1756, %v1758
  %v1760 = vrot.slane %v1752, %v1759
  %v1762 = vunpack.c.l.s4 1983009808
  %v1763 = vunpack.c.0.s8 %v1762
  %v1764 = vlaneseq
  %v1765 = vshrl.u32 %v1764, 7
  %v1766 = vsub.s32 %v1763, %v1765
  %v1767 = vrot.slane %v1753, %v1766
  %v1768 = vcombine.low %v1712, %v1728
  %v1769 = vcombine.high %v1712, %v1728
  %v1771 = vunpack.c.l.s4 1934713408
  %v1772 = vunpack.c.0.s8 %v1771
  %v1773 = vlaneseq
  %v1774 = vshrl.u32 %v1773, 7
  %v1775 = vsub.s32 %v1772, %v1774
  %v1776 = vrot.slane %v1768, %v1775
  %v1778 = vunpack.c.l.s4 1934713408
  %v1779 = vunpack.c.0.s8 %v1778
  %v1780 = vlaneseq
  %v1781 = vshrl.u32 %v1780, 7
  %v1782 = vsub.s32 %v1779, %v1781
  %v1783 = vrot.slane %v1769, %v1782
  %v1784 = vcombine.low %v1719, %v1735
  %v1785 = vcombine.high %v1719, %v1735
  %v1787 = vunpack.c.l.s4 1934713408
  %v1788 = vunpack.c.0.s8 %v1787
  %v1789 = vlaneseq
  %v1790 = vshrl.u32 %v1789, 7
  %v1791 = vsub.s32 %v1788, %v1790
  %v1792 = vrot.slane %v1784, %v1791
  %v1794 = vunpack.c.l.s4 1934713408
  %v1795 = vunpack.c.0.s8 %v1794
  %v1796 = vlaneseq
  %v1797 = vshrl.u32 %v1796, 7
  %v1798 = vsub.s32 %v1795, %v1797
  %v1799 = vrot.slane %v1785, %v1798
  %v1800 = vcombine.low %v1744, %v1760
  %v1801 = vcombine.high %v1744, %v1760
  %v1803 = vunpack.c.l.s4 1934713408
  %v1804 = vunpack.c.0.s8 %v1803
  %v1805 = vlaneseq
  %v1806 = vshrl.u32 %v1805, 7
  %v1807 = vsub.s32 %v1804, %v1806
  %v1808 = vrot.slane %v1800, %v1807
  %v1810 = vunpack.c.l.s4 1934713408
  %v1811 = vunpack.c.0.s8 %v1810
  %v1812 = vlaneseq
  %v1813 = vshrl.u32 %v1812, 7
  %v1814 = vsub.s32 %v1811, %v1813
  %v1815 = vrot.slane %v1801, %v1814
  %v1816 = vcombine.low %v1751, %v1767
  %v1817 = vcombine.high %v1751, %v1767
  %v1819 = vunpack.c.l.s4 1934713408
  %v1820 = vunpack.c.0.s8 %v1819
  %v1821 = vlaneseq
  %v1822 = vshrl.u32 %v1821, 7
  %v1823 = vsub.s32 %v1820, %v1822
  %v1824 = vrot.slane %v1816, %v1823
  %v1826 = vunpack.c.l.s4 1934713408
  %v1827 = vunpack.c.0.s8 %v1826
  %v1828 = vlaneseq
  %v1829 = vshrl.u32 %v1828, 7
  %v1830 = vsub.s32 %v1827, %v1829
  %v1831 = vrot.slane %v1817, %v1830
  %v1832 = vcombine.low %v1776, %v1808
  %v1833 = vcombine.high %v1776, %v1808
  %v1834 = vcombine.low %v1783, %v1815
  %v1835 = vcombine.high %v1783, %v1815
  %v1836 = vcombine.low %v1792, %v1824
  %v1837 = vcombine.high %v1792, %v1824
  %v1838 = vcombine.low %v1799, %v1831
  %v1839 = vcombine.high %v1799, %v1831
  %v1840 = vcombine.low %v294, %v316
  %v1841 = vcombine.high %v294, %v316
  %v1843 = vunpack.c.l.s4 1983009808
  %v1844 = vunpack.c.0.s8 %v1843
  %v1845 = vlaneseq
  %v1846 = vshrl.u32 %v1845, 7
  %v1847 = vsub.s32 %v1844, %v1846
  %v1848 = vrot.slane %v1840, %v1847
  %v1850 = vunpack.c.l.s4 1983009808
  %v1851 = vunpack.c.0.s8 %v1850
  %v1852 = vlaneseq
  %v1853 = vshrl.u32 %v1852, 7
  %v1854 = vsub.s32 %v1851, %v1853
  %v1855 = vrot.slane %v1841, %v1854
  %v1856 = vcombine.low %v305, %v327
  %v1857 = vcombine.high %v305, %v327
  %v1859 = vunpack.c.l.s4 1983009808
  %v1860 = vunpack.c.0.s8 %v1859
  %v1861 = vlaneseq
  %v1862 = vshrl.u32 %v1861, 7
  %v1863 = vsub.s32 %v1860, %v1862
  %v1864 = vrot.slane %v1856, %v1863
  %v1866 = vunpack.c.l.s4 1983009808
  %v1867 = vunpack.c.0.s8 %v1866
  %v1868 = vlaneseq
  %v1869 = vshrl.u32 %v1868, 7
  %v1870 = vsub.s32 %v1867, %v1869
  %v1871 = vrot.slane %v1857, %v1870
  %v1872 = vcombine.low %v338, %v360
  %v1873 = vcombine.high %v338, %v360
  %v1875 = vunpack.c.l.s4 1983009808
  %v1876 = vunpack.c.0.s8 %v1875
  %v1877 = vlaneseq
  %v1878 = vshrl.u32 %v1877, 7
  %v1879 = vsub.s32 %v1876, %v1878
  %v1880 = vrot.slane %v1872, %v1879
  %v1882 = vunpack.c.l.s4 1983009808
  %v1883 = vunpack.c.0.s8 %v1882
  %v1884 = vlaneseq
  %v1885 = vshrl.u32 %v1884, 7
  %v1886 = vsub.s32 %v1883, %v1885
  %v1887 = vrot.slane %v1873, %v1886
  %v1888 = vcombine.low %v349, %v371
  %v1889 = vcombine.high %v349, %v371
  %v1891 = vunpack.c.l.s4 1983009808
  %v1892 = vunpack.c.0.s8 %v1891
  %v1893 = vlaneseq
  %v1894 = vshrl.u32 %v1893, 7
  %v1895 = vsub.s32 %v1892, %v1894
  %v1896 = vrot.slane %v1888, %v1895
  %v1898 = vunpack.c.l.s4 1983009808
  %v1899 = vunpack.c.0.s8 %v1898
  %v1900 = vlaneseq
  %v1901 = vshrl.u32 %v1900, 7
  %v1902 = vsub.s32 %v1899, %v1901
  %v1903 = vrot.slane %v1889, %v1902
  %v1904 = vcombine.low %v1848, %v1864
  %v1905 = vcombine.high %v1848, %v1864
  %v1907 = vunpack.c.l.s4 1934713408
  %v1908 = vunpack.c.0.s8 %v1907
  %v1909 = vlaneseq
  %v1910 = vshrl.u32 %v1909, 7
  %v1911 = vsub.s32 %v1908, %v1910
  %v1912 = vrot.slane %v1904, %v1911
  %v1914 = vunpack.c.l.s4 1934713408
  %v1915 = vunpack.c.0.s8 %v1914
  %v1916 = vlaneseq
  %v1917 = vshrl.u32 %v1916, 7
  %v1918 = vsub.s32 %v1915, %v1917
  %v1919 = vrot.slane %v1905, %v1918
  %v1920 = vcombine.low %v1855, %v1871
  %v1921 = vcombine.high %v1855, %v1871
  %v1923 = vunpack.c.l.s4 1934713408
  %v1924 = vunpack.c.0.s8 %v1923
  %v1925 = vlaneseq
  %v1926 = vshrl.u32 %v1925, 7
  %v1927 = vsub.s32 %v1924, %v1926
  %v1928 = vrot.slane %v1920, %v1927
  %v1930 = vunpack.c.l.s4 1934713408
  %v1931 = vunpack.c.0.s8 %v1930
  %v1932 = vlaneseq
  %v1933 = vshrl.u32 %v1932, 7
  %v1934 = vsub.s32 %v1931, %v1933
  %v1935 = vrot.slane %v1921, %v1934
  %v1936 = vcombine.low %v1880, %v1896
  %v1937 = vcombine.high %v1880, %v1896
  %v1939 = vunpack.c.l.s4 1934713408
  %v1940 = vunpack.c.0.s8 %v1939
  %v1941 = vlaneseq
  %v1942 = vshrl.u32 %v1941, 7
  %v1943 = vsub.s32 %v1940, %v1942
  %v1944 = vrot.slane %v1936, %v1943
  %v1946 = vunpack.c.l.s4 1934713408
  %v1947 = vunpack.c.0.s8 %v1946
  %v1948 = vlaneseq
  %v1949 = vshrl.u32 %v1948, 7
  %v1950 = vsub.s32 %v1947, %v1949
  %v1951 = vrot.slane %v1937, %v1950
  %v1952 = vcombine.low %v1887, %v1903
  %v1953 = vcombine.high %v1887, %v1903
  %v1955 = vunpack.c.l.s4 1934713408
  %v1956 = vunpack.c.0.s8 %v1955
  %v1957 = vlaneseq
  %v1958 = vshrl.u32 %v1957, 7
  %v1959 = vsub.s32 %v1956, %v1958
  %v1960 = vrot.slane %v1952, %v1959
  %v1962 = vunpack.c.l.s4 1934713408
  %v1963 = vunpack.c.0.s8 %v1962
  %v1964 = vlaneseq
  %v1965 = vshrl.u32 %v1964, 7
  %v1966 = vsub.s32 %v1963, %v1965
  %v1967 = vrot.slane %v1953, %v1966
  %v1968 = vcombine.low %v1912, %v1944
  %v1969 = vcombine.high %v1912, %v1944
  %v1970 = vcombine.low %v1919, %v1951
  %v1971 = vcombine.high %v1919, %v1951
  %v1972 = vcombine.low %v1928, %v1960
  %v1973 = vcombine.high %v1928, %v1960
  %v1974 = vcombine.low %v1935, %v1967
  %v1975 = vcombine.high %v1935, %v1967
  %v1976 = vcombine.low %v382, %v404
  %v1977 = vcombine.high %v382, %v404
  %v1979 = vunpack.c.l.s4 1983009808
  %v1980 = vunpack.c.0.s8 %v1979
  %v1981 = vlaneseq
  %v1982 = vshrl.u32 %v1981, 7
  %v1983 = vsub.s32 %v1980, %v1982
  %v1984 = vrot.slane %v1976, %v1983
  %v1986 = vunpack.c.l.s4 1983009808
  %v1987 = vunpack.c.0.s8 %v1986
  %v1988 = vlaneseq
  %v1989 = vshrl.u32 %v1988, 7
  %v1990 = vsub.s32 %v1987, %v1989
  %v1991 = vrot.slane %v1977, %v1990
  %v1992 = vcombine.low %v393, %v415
  %v1993 = vcombine.high %v393, %v415
  %v1995 = vunpack.c.l.s4 1983009808
  %v1996 = vunpack.c.0.s8 %v1995
  %v1997 = vlaneseq
  %v1998 = vshrl.u32 %v1997, 7
  %v1999 = vsub.s32 %v1996, %v1998
  %v2000 = vrot.slane %v1992, %v1999
  %v2002 = vunpack.c.l.s4 1983009808
  %v2003 = vunpack.c.0.s8 %v2002
  %v2004 = vlaneseq
  %v2005 = vshrl.u32 %v2004, 7
  %v2006 = vsub.s32 %v2003, %v2005
  %v2007 = vrot.slane %v1993, %v2006
  %v2008 = vcombine.low %v426, %v448
  %v2009 = vcombine.high %v426, %v448
  %v2011 = vunpack.c.l.s4 1983009808
  %v2012 = vunpack.c.0.s8 %v2011
  %v2013 = vlaneseq
  %v2014 = vshrl.u32 %v2013, 7
  %v2015 = vsub.s32 %v2012, %v2014
  %v2016 = vrot.slane %v2008, %v2015
  %v2018 = vunpack.c.l.s4 1983009808
  %v2019 = vunpack.c.0.s8 %v2018
  %v2020 = vlaneseq
  %v2021 = vshrl.u32 %v2020, 7
  %v2022 = vsub.s32 %v2019, %v2021
  %v2023 = vrot.slane %v2009, %v2022
  %v2024 = vcombine.low %v437, %v459
  %v2025 = vcombine.high %v437, %v459
  %v2027 = vunpack.c.l.s4 1983009808
  %v2028 = vunpack.c.0.s8 %v2027
  %v2029 = vlaneseq
  %v2030 = vshrl.u32 %v2029, 7
  %v2031 = vsub.s32 %v2028, %v2030
  %v2032 = vrot.slane %v2024, %v2031
  %v2034 = vunpack.c.l.s4 1983009808
  %v2035 = vunpack.c.0.s8 %v2034
  %v2036 = vlaneseq
  %v2037 = vshrl.u32 %v2036, 7
  %v2038 = vsub.s32 %v2035, %v2037
  %v2039 = vrot.slane %v2025, %v2038
  %v2040 = vcombine.low %v1984, %v2000
  %v2041 = vcombine.high %v1984, %v2000
  %v2043 = vunpack.c.l.s4 1934713408
  %v2044 = vunpack.c.0.s8 %v2043
  %v2045 = vlaneseq
  %v2046 = vshrl.u32 %v2045, 7
  %v2047 = vsub.s32 %v2044, %v2046
  %v2048 = vrot.slane %v2040, %v2047
  %v2050 = vunpack.c.l.s4 1934713408
  %v2051 = vunpack.c.0.s8 %v2050
  %v2052 = vlaneseq
  %v2053 = vshrl.u32 %v2052, 7
  %v2054 = vsub.s32 %v2051, %v2053
  %v2055 = vrot.slane %v2041, %v2054
  %v2056 = vcombine.low %v1991, %v2007
  %v2057 = vcombine.high %v1991, %v2007
  %v2059 = vunpack.c.l.s4 1934713408
  %v2060 = vunpack.c.0.s8 %v2059
  %v2061 = vlaneseq
  %v2062 = vshrl.u32 %v2061, 7
  %v2063 = vsub.s32 %v2060, %v2062
  %v2064 = vrot.slane %v2056, %v2063
  %v2066 = vunpack.c.l.s4 1934713408
  %v2067 = vunpack.c.0.s8 %v2066
  %v2068 = vlaneseq
  %v2069 = vshrl.u32 %v2068, 7
  %v2070 = vsub.s32 %v2067, %v2069
  %v2071 = vrot.slane %v2057, %v2070
  %v2072 = vcombine.low %v2016, %v2032
  %v2073 = vcombine.high %v2016, %v2032
  %v2075 = vunpack.c.l.s4 1934713408
  %v2076 = vunpack.c.0.s8 %v2075
  %v2077 = vlaneseq
  %v2078 = vshrl.u32 %v2077, 7
  %v2079 = vsub.s32 %v2076, %v2078
  %v2080 = vrot.slane %v2072, %v2079
  %v2082 = vunpack.c.l.s4 1934713408
  %v2083 = vunpack.c.0.s8 %v2082
  %v2084 = vlaneseq
  %v2085 = vshrl.u32 %v2084, 7
  %v2086 = vsub.s32 %v2083, %v2085
  %v2087 = vrot.slane %v2073, %v2086
  %v2088 = vcombine.low %v2023, %v2039
  %v2089 = vcombine.high %v2023, %v2039
  %v2091 = vunpack.c.l.s4 1934713408
  %v2092 = vunpack.c.0.s8 %v2091
  %v2093 = vlaneseq
  %v2094 = vshrl.u32 %v2093, 7
  %v2095 = vsub.s32 %v2092, %v2094
  %v2096 = vrot.slane %v2088, %v2095
  %v2098 = vunpack.c.l.s4 1934713408
  %v2099 = vunpack.c.0.s8 %v2098
  %v2100 = vlaneseq
  %v2101 = vshrl.u32 %v2100, 7
  %v2102 = vsub.s32 %v2099, %v2101
  %v2103 = vrot.slane %v2089, %v2102
  %v2104 = vcombine.low %v2048, %v2080
  %v2105 = vcombine.high %v2048, %v2080
  %v2106 = vcombine.low %v2055, %v2087
  %v2107 = vcombine.high %v2055, %v2087
  %v2108 = vcombine.low %v2064, %v2096
  %v2109 = vcombine.high %v2064, %v2096
  %v2110 = vcombine.low %v2071, %v2103
  %v2111 = vcombine.high %v2071, %v2103
  %v2112 = vcombine.low %v470, %v492
  %v2113 = vcombine.high %v470, %v492
  %v2115 = vunpack.c.l.s4 1983009808
  %v2116 = vunpack.c.0.s8 %v2115
  %v2117 = vlaneseq
  %v2118 = vshrl.u32 %v2117, 7
  %v2119 = vsub.s32 %v2116, %v2118
  %v2120 = vrot.slane %v2112, %v2119
  %v2122 = vunpack.c.l.s4 1983009808
  %v2123 = vunpack.c.0.s8 %v2122
  %v2124 = vlaneseq
  %v2125 = vshrl.u32 %v2124, 7
  %v2126 = vsub.s32 %v2123, %v2125
  %v2127 = vrot.slane %v2113, %v2126
  %v2128 = vcombine.low %v481, %v503
  %v2129 = vcombine.high %v481, %v503
  %v2131 = vunpack.c.l.s4 1983009808
  %v2132 = vunpack.c.0.s8 %v2131
  %v2133 = vlaneseq
  %v2134 = vshrl.u32 %v2133, 7
  %v2135 = vsub.s32 %v2132, %v2134
  %v2136 = vrot.slane %v2128, %v2135
  %v2138 = vunpack.c.l.s4 1983009808
  %v2139 = vunpack.c.0.s8 %v2138
  %v2140 = vlaneseq
  %v2141 = vshrl.u32 %v2140, 7
  %v2142 = vsub.s32 %v2139, %v2141
  %v2143 = vrot.slane %v2129, %v2142
  %v2144 = vcombine.low %v514, %v536
  %v2145 = vcombine.high %v514, %v536
  %v2147 = vunpack.c.l.s4 1983009808
  %v2148 = vunpack.c.0.s8 %v2147
  %v2149 = vlaneseq
  %v2150 = vshrl.u32 %v2149, 7
  %v2151 = vsub.s32 %v2148, %v2150
  %v2152 = vrot.slane %v2144, %v2151
  %v2154 = vunpack.c.l.s4 1983009808
  %v2155 = vunpack.c.0.s8 %v2154
  %v2156 = vlaneseq
  %v2157 = vshrl.u32 %v2156, 7
  %v2158 = vsub.s32 %v2155, %v2157
  %v2159 = vrot.slane %v2145, %v2158
  %v2160 = vcombine.low %v525, %v547
  %v2161 = vcombine.high %v525, %v547
  %v2163 = vunpack.c.l.s4 1983009808
  %v2164 = vunpack.c.0.s8 %v2163
  %v2165 = vlaneseq
  %v2166 = vshrl.u32 %v2165, 7
  %v2167 = vsub.s32 %v2164, %v2166
  %v2168 = vrot.slane %v2160, %v2167
  %v2170 = vunpack.c.l.s4 1983009808
  %v2171 = vunpack.c.0.s8 %v2170
  %v2172 = vlaneseq
  %v2173 = vshrl.u32 %v2172, 7
  %v2174 = vsub.s32 %v2171, %v2173
  %v2175 = vrot.slane %v2161, %v2174
  %v2176 = vcombine.low %v2120, %v2136
  %v2177 = vcombine.high %v2120, %v2136
  %v2179 = vunpack.c.l.s4 1934713408
  %v2180 = vunpack.c.0.s8 %v2179
  %v2181 = vlaneseq
  %v2182 = vshrl.u32 %v2181, 7
  %v2183 = vsub.s32 %v2180, %v2182
  %v2184 = vrot.slane %v2176, %v2183
  %v2186 = vunpack.c.l.s4 1934713408
  %v2187 = vunpack.c.0.s8 %v2186
  %v2188 = vlaneseq
  %v2189 = vshrl.u32 %v2188, 7
  %v2190 = vsub.s32 %v2187, %v2189
  %v2191 = vrot.slane %v2177, %v2190
  %v2192 = vcombine.low %v2127, %v2143
  %v2193 = vcombine.high %v2127, %v2143
  %v2195 = vunpack.c.l.s4 1934713408
  %v2196 = vunpack.c.0.s8 %v2195
  %v2197 = vlaneseq
  %v2198 = vshrl.u32 %v2197, 7
  %v2199 = vsub.s32 %v2196, %v2198
  %v2200 = vrot.slane %v2192, %v2199
  %v2202 = vunpack.c.l.s4 1934713408
  %v2203 = vunpack.c.0.s8 %v2202
  %v2204 = vlaneseq
  %v2205 = vshrl.u32 %v2204, 7
  %v2206 = vsub.s32 %v2203, %v2205
  %v2207 = vrot.slane %v2193, %v2206
  %v2208 = vcombine.low %v2152, %v2168
  %v2209 = vcombine.high %v2152, %v2168
  %v2211 = vunpack.c.l.s4 1934713408
  %v2212 = vunpack.c.0.s8 %v2211
  %v2213 = vlaneseq
  %v2214 = vshrl.u32 %v2213, 7
  %v2215 = vsub.s32 %v2212, %v2214
  %v2216 = vrot.slane %v2208, %v2215
  %v2218 = vunpack.c.l.s4 1934713408
  %v2219 = vunpack.c.0.s8 %v2218
  %v2220 = vlaneseq
  %v2221 = vshrl.u32 %v2220, 7
  %v2222 = vsub.s32 %v2219, %v2221
  %v2223 = vrot.slane %v2209, %v2222
  %v2224 = vcombine.low %v2159, %v2175
  %v2225 = vcombine.high %v2159, %v2175
  %v2227 = vunpack.c.l.s4 1934713408
  %v2228 = vunpack.c.0.s8 %v2227
  %v2229 = vlaneseq
  %v2230 = vshrl.u32 %v2229, 7
  %v2231 = vsub.s32 %v2228, %v2230
  %v2232 = vrot.slane %v2224, %v2231
  %v2234 = vunpack.c.l.s4 1934713408
  %v2235 = vunpack.c.0.s8 %v2234
  %v2236 = vlaneseq
  %v2237 = vshrl.u32 %v2236, 7
  %v2238 = vsub.s32 %v2235, %v2237
  %v2239 = vrot.slane %v2225, %v2238
  %v2240 = vcombine.low %v2184, %v2216
  %v2241 = vcombine.high %v2184, %v2216
  %v2242 = vcombine.low %v2191, %v2223
  %v2243 = vcombine.high %v2191, %v2223
  %v2244 = vcombine.low %v2200, %v2232
  %v2245 = vcombine.high %v2200, %v2232
  %v2246 = vcombine.low %v2207, %v2239
  %v2247 = vcombine.high %v2207, %v2239
  %v2248 = vcombine.low %v558, %v580
  %v2249 = vcombine.high %v558, %v580
  %v2251 = vunpack.c.l.s4 1983009808
  %v2252 = vunpack.c.0.s8 %v2251
  %v2253 = vlaneseq
  %v2254 = vshrl.u32 %v2253, 7
  %v2255 = vsub.s32 %v2252, %v2254
  %v2256 = vrot.slane %v2248, %v2255
  %v2258 = vunpack.c.l.s4 1983009808
  %v2259 = vunpack.c.0.s8 %v2258
  %v2260 = vlaneseq
  %v2261 = vshrl.u32 %v2260, 7
  %v2262 = vsub.s32 %v2259, %v2261
  %v2263 = vrot.slane %v2249, %v2262
  %v2264 = vcombine.low %v569, %v591
  %v2265 = vcombine.high %v569, %v591
  %v2267 = vunpack.c.l.s4 1983009808
  %v2268 = vunpack.c.0.s8 %v2267
  %v2269 = vlaneseq
  %v2270 = vshrl.u32 %v2269, 7
  %v2271 = vsub.s32 %v2268, %v2270
  %v2272 = vrot.slane %v2264, %v2271
  %v2274 = vunpack.c.l.s4 1983009808
  %v2275 = vunpack.c.0.s8 %v2274
  %v2276 = vlaneseq
  %v2277 = vshrl.u32 %v2276, 7
  %v2278 = vsub.s32 %v2275, %v2277
  %v2279 = vrot.slane %v2265, %v2278
  %v2280 = vcombine.low %v602, %v624
  %v2281 = vcombine.high %v602, %v624
  %v2283 = vunpack.c.l.s4 1983009808
  %v2284 = vunpack.c.0.s8 %v2283
  %v2285 = vlaneseq
  %v2286 = vshrl.u32 %v2285, 7
  %v2287 = vsub.s32 %v2284, %v2286
  %v2288 = vrot.slane %v2280, %v2287
  %v2290 = vunpack.c.l.s4 1983009808
  %v2291 = vunpack.c.0.s8 %v2290
  %v2292 = vlaneseq
  %v2293 = vshrl.u32 %v2292, 7
  %v2294 = vsub.s32 %v2291, %v2293
  %v2295 = vrot.slane %v2281, %v2294
  %v2296 = vcombine.low %v613, %v635
  %v2297 = vcombine.high %v613, %v635
  %v2299 = vunpack.c.l.s4 1983009808
  %v2300 = vunpack.c.0.s8 %v2299
  %v2301 = vlaneseq
  %v2302 = vshrl.u32 %v2301, 7
  %v2303 = vsub.s32 %v2300, %v2302
  %v2304 = vrot.slane %v2296, %v2303
  %v2306 = vunpack.c.l.s4 1983009808
  %v2307 = vunpack.c.0.s8 %v2306
  %v2308 = vlaneseq
  %v2309 = vshrl.u32 %v2308, 7
  %v2310 = vsub.s32 %v2307, %v2309
  %v2311 = vrot.slane %v2297, %v2310
  %v2312 = vcombine.low %v2256, %v2272
  %v2313 = vcombine.high %v2256, %v2272
  %v2315 = vunpack.c.l.s4 1934713408
  %v2316 = vunpack.c.0.s8 %v2315
  %v2317 = vlaneseq
  %v2318 = vshrl.u32 %v2317, 7
  %v2319 = vsub.s32 %v2316, %v2318
  %v2320 = vrot.slane %v2312, %v2319
  %v2322 = vunpack.c.l.s4 1934713408
  %v2323 = vunpack.c.0.s8 %v2322
  %v2324 = vlaneseq
  %v2325 = vshrl.u32 %v2324, 7
  %v2326 = vsub.s32 %v2323, %v2325
  %v2327 = vrot.slane %v2313, %v2326
  %v2328 = vcombine.low %v2263, %v2279
  %v2329 = vcombine.high %v2263, %v2279
  %v2331 = vunpack.c.l.s4 1934713408
  %v2332 = vunpack.c.0.s8 %v2331
  %v2333 = vlaneseq
  %v2334 = vshrl.u32 %v2333, 7
  %v2335 = vsub.s32 %v2332, %v2334
  %v2336 = vrot.slane %v2328, %v2335
  %v2338 = vunpack.c.l.s4 1934713408
  %v2339 = vunpack.c.0.s8 %v2338
  %v2340 = vlaneseq
  %v2341 = vshrl.u32 %v2340, 7
  %v2342 = vsub.s32 %v2339, %v2341
  %v2343 = vrot.slane %v2329, %v2342
  %v2344 = vcombine.low %v2288, %v2304
  %v2345 = vcombine.high %v2288, %v2304
  %v2347 = vunpack.c.l.s4 1934713408
  %v2348 = vunpack.c.0.s8 %v2347
  %v2349 = vlaneseq
  %v2350 = vshrl.u32 %v2349, 7
  %v2351 = vsub.s32 %v2348, %v2350
  %v2352 = vrot.slane %v2344, %v2351
  %v2354 = vunpack.c.l.s4 1934713408
  %v2355 = vunpack.c.0.s8 %v2354
  %v2356 = vlaneseq
  %v2357 = vshrl.u32 %v2356, 7
  %v2358 = vsub.s32 %v2355, %v2357
  %v2359 = vrot.slane %v2345, %v2358
  %v2360 = vcombine.low %v2295, %v2311
  %v2361 = vcombine.high %v2295, %v2311
  %v2363 = vunpack.c.l.s4 1934713408
  %v2364 = vunpack.c.0.s8 %v2363
  %v2365 = vlaneseq
  %v2366 = vshrl.u32 %v2365, 7
  %v2367 = vsub.s32 %v2364, %v2366
  %v2368 = vrot.slane %v2360, %v2367
  %v2370 = vunpack.c.l.s4 1934713408
  %v2371 = vunpack.c.0.s8 %v2370
  %v2372 = vlaneseq
  %v2373 = vshrl.u32 %v2372, 7
  %v2374 = vsub.s32 %v2371, %v2373
  %v2375 = vrot.slane %v2361, %v2374
  %v2376 = vcombine.low %v2320, %v2352
  %v2377 = vcombine.high %v2320, %v2352
  %v2378 = vcombine.low %v2327, %v2359
  %v2379 = vcombine.high %v2327, %v2359
  %v2380 = vcombine.low %v2336, %v2368
  %v2381 = vcombine.high %v2336, %v2368
  %v2382 = vcombine.low %v2343, %v2375
  %v2383 = vcombine.high %v2343, %v2375
  %v2384 = vcombine.low %v646, %v668
  %v2385 = vcombine.high %v646, %v668
  %v2387 = vunpack.c.l.s4 1983009808
  %v2388 = vunpack.c.0.s8 %v2387
  %v2389 = vlaneseq
  %v2390 = vshrl.u32 %v2389, 7
  %v2391 = vsub.s32 %v2388, %v2390
  %v2392 = vrot.slane %v2384, %v2391
  %v2394 = vunpack.c.l.s4 1983009808
  %v2395 = vunpack.c.0.s8 %v2394
  %v2396 = vlaneseq
  %v2397 = vshrl.u32 %v2396, 7
  %v2398 = vsub.s32 %v2395, %v2397
  %v2399 = vrot.slane %v2385, %v2398
  %v2400 = vcombine.low %v657, %v679
  %v2401 = vcombine.high %v657, %v679
  %v2403 = vunpack.c.l.s4 1983009808
  %v2404 = vunpack.c.0.s8 %v2403
  %v2405 = vlaneseq
  %v2406 = vshrl.u32 %v2405, 7
  %v2407 = vsub.s32 %v2404, %v2406
  %v2408 = vrot.slane %v2400, %v2407
  %v2410 = vunpack.c.l.s4 1983009808
  %v2411 = vunpack.c.0.s8 %v2410
  %v2412 = vlaneseq
  %v2413 = vshrl.u32 %v2412, 7
  %v2414 = vsub.s32 %v2411, %v2413
  %v2415 = vrot.slane %v2401, %v2414
  %v2416 = vcombine.low %v690, %v712
  %v2417 = vcombine.high %v690, %v712
  %v2419 = vunpack.c.l.s4 1983009808
  %v2420 = vunpack.c.0.s8 %v2419
  %v2421 = vlaneseq
  %v2422 = vshrl.u32 %v2421, 7
  %v2423 = vsub.s32 %v2420, %v2422
  %v2424 = vrot.slane %v2416, %v2423
  %v2426 = vunpack.c.l.s4 1983009808
  %v2427 = vunpack.c.0.s8 %v2426
  %v2428 = vlaneseq
  %v2429 = vshrl.u32 %v2428, 7
  %v2430 = vsub.s32 %v2427, %v2429
  %v2431 = vrot.slane %v2417, %v2430
  %v2432 = vcombine.low %v701, %v723
  %v2433 = vcombine.high %v701, %v723
  %v2435 = vunpack.c.l.s4 1983009808
  %v2436 = vunpack.c.0.s8 %v2435
  %v2437 = vlaneseq
  %v2438 = vshrl.u32 %v2437, 7
  %v2439 = vsub.s32 %v2436, %v2438
  %v2440 = vrot.slane %v2432, %v2439
  %v2442 = vunpack.c.l.s4 1983009808
  %v2443 = vunpack.c.0.s8 %v2442
  %v2444 = vlaneseq
  %v2445 = vshrl.u32 %v2444, 7
  %v2446 = vsub.s32 %v2443, %v2445
  %v2447 = vrot.slane %v2433, %v2446
  %v2448 = vcombine.low %v2392, %v2408
  %v2449 = vcombine.high %v2392, %v2408
  %v2451 = vunpack.c.l.s4 1934713408
  %v2452 = vunpack.c.0.s8 %v2451
  %v2453 = vlaneseq
  %v2454 = vshrl.u32 %v2453, 7
  %v2455 = vsub.s32 %v2452, %v2454
  %v2456 = vrot.slane %v2448, %v2455
  %v2458 = vunpack.c.l.s4 1934713408
  %v2459 = vunpack.c.0.s8 %v2458
  %v2460 = vlaneseq
  %v2461 = vshrl.u32 %v2460, 7
  %v2462 = vsub.s32 %v2459, %v2461
  %v2463 = vrot.slane %v2449, %v2462
  %v2464 = vcombine.low %v2399, %v2415
  %v2465 = vcombine.high %v2399, %v2415
  %v2467 = vunpack.c.l.s4 1934713408
  %v2468 = vunpack.c.0.s8 %v2467
  %v2469 = vlaneseq
  %v2470 = vshrl.u32 %v2469, 7
  %v2471 = vsub.s32 %v2468, %v2470
  %v2472 = vrot.slane %v2464, %v2471
  %v2474 = vunpack.c.l.s4 1934713408
  %v2475 = vunpack.c.0.s8 %v2474
  %v2476 = vlaneseq
  %v2477 = vshrl.u32 %v2476, 7
  %v2478 = vsub.s32 %v2475, %v2477
  %v2479 = vrot.slane %v2465, %v2478
  %v2480 = vcombine.low %v2424, %v2440
  %v2481 = vcombine.high %v2424, %v2440
  %v2483 = vunpack.c.l.s4 1934713408
  %v2484 = vunpack.c.0.s8 %v2483
  %v2485 = vlaneseq
  %v2486 = vshrl.u32 %v2485, 7
  %v2487 = vsub.s32 %v2484, %v2486
  %v2488 = vrot.slane %v2480, %v2487
  %v2490 = vunpack.c.l.s4 1934713408
  %v2491 = vunpack.c.0.s8 %v2490
  %v2492 = vlaneseq
  %v2493 = vshrl.u32 %v2492, 7
  %v2494 = vsub.s32 %v2491, %v2493
  %v2495 = vrot.slane %v2481, %v2494
  %v2496 = vcombine.low %v2431, %v2447
  %v2497 = vcombine.high %v2431, %v2447
  %v2499 = vunpack.c.l.s4 1934713408
  %v2500 = vunpack.c.0.s8 %v2499
  %v2501 = vlaneseq
  %v2502 = vshrl.u32 %v2501, 7
  %v2503 = vsub.s32 %v2500, %v2502
  %v2504 = vrot.slane %v2496, %v2503
  %v2506 = vunpack.c.l.s4 1934713408
  %v2507 = vunpack.c.0.s8 %v2506
  %v2508 = vlaneseq
  %v2509 = vshrl.u32 %v2508, 7
  %v2510 = vsub.s32 %v2507, %v2509
  %v2511 = vrot.slane %v2497, %v2510
  %v2512 = vcombine.low %v2456, %v2488
  %v2513 = vcombine.high %v2456, %v2488
  %v2514 = vcombine.low %v2463, %v2495
  %v2515 = vcombine.high %v2463, %v2495
  %v2516 = vcombine.low %v2472, %v2504
  %v2517 = vcombine.high %v2472, %v2504
  %v2518 = vcombine.low %v2479, %v2511
  %v2519 = vcombine.high %v2479, %v2511
  %v2520 = vcombine.low %v734, %v756
  %v2521 = vcombine.high %v734, %v756
  %v2523 = vunpack.c.l.s4 1983009808
  %v2524 = vunpack.c.0.s8 %v2523
  %v2525 = vlaneseq
  %v2526 = vshrl.u32 %v2525, 7
  %v2527 = vsub.s32 %v2524, %v2526
  %v2528 = vrot.slane %v2520, %v2527
  %v2530 = vunpack.c.l.s4 1983009808
  %v2531 = vunpack.c.0.s8 %v2530
  %v2532 = vlaneseq
  %v2533 = vshrl.u32 %v2532, 7
  %v2534 = vsub.s32 %v2531, %v2533
  %v2535 = vrot.slane %v2521, %v2534
  %v2536 = vcombine.low %v745, %v767
  %v2537 = vcombine.high %v745, %v767
  %v2539 = vunpack.c.l.s4 1983009808
  %v2540 = vunpack.c.0.s8 %v2539
  %v2541 = vlaneseq
  %v2542 = vshrl.u32 %v2541, 7
  %v2543 = vsub.s32 %v2540, %v2542
  %v2544 = vrot.slane %v2536, %v2543
  %v2546 = vunpack.c.l.s4 1983009808
  %v2547 = vunpack.c.0.s8 %v2546
  %v2548 = vlaneseq
  %v2549 = vshrl.u32 %v2548, 7
  %v2550 = vsub.s32 %v2547, %v2549
  %v2551 = vrot.slane %v2537, %v2550
  %v2552 = vcombine.low %v778, %v800
  %v2553 = vcombine.high %v778, %v800
  %v2555 = vunpack.c.l.s4 1983009808
  %v2556 = vunpack.c.0.s8 %v2555
  %v2557 = vlaneseq
  %v2558 = vshrl.u32 %v2557, 7
  %v2559 = vsub.s32 %v2556, %v2558
  %v2560 = vrot.slane %v2552, %v2559
  %v2562 = vunpack.c.l.s4 1983009808
  %v2563 = vunpack.c.0.s8 %v2562
  %v2564 = vlaneseq
  %v2565 = vshrl.u32 %v2564, 7
  %v2566 = vsub.s32 %v2563, %v2565
  %v2567 = vrot.slane %v2553, %v2566
  %v2568 = vcombine.low %v789, %v811
  %v2569 = vcombine.high %v789, %v811
  %v2571 = vunpack.c.l.s4 1983009808
  %v2572 = vunpack.c.0.s8 %v2571
  %v2573 = vlaneseq
  %v2574 = vshrl.u32 %v2573, 7
  %v2575 = vsub.s32 %v2572, %v2574
  %v2576 = vrot.slane %v2568, %v2575
  %v2578 = vunpack.c.l.s4 1983009808
  %v2579 = vunpack.c.0.s8 %v2578
  %v2580 = vlaneseq
  %v2581 = vshrl.u32 %v2580, 7
  %v2582 = vsub.s32 %v2579, %v2581
  %v2583 = vrot.slane %v2569, %v2582
  %v2584 = vcombine.low %v2528, %v2544
  %v2585 = vcombine.high %v2528, %v2544
  %v2587 = vunpack.c.l.s4 1934713408
  %v2588 = vunpack.c.0.s8 %v2587
  %v2589 = vlaneseq
  %v2590 = vshrl.u32 %v2589, 7
  %v2591 = vsub.s32 %v2588, %v2590
  %v2592 = vrot.slane %v2584, %v2591
  %v2594 = vunpack.c.l.s4 1934713408
  %v2595 = vunpack.c.0.s8 %v2594
  %v2596 = vlaneseq
  %v2597 = vshrl.u32 %v2596, 7
  %v2598 = vsub.s32 %v2595, %v2597
  %v2599 = vrot.slane %v2585, %v2598
  %v2600 = vcombine.low %v2535, %v2551
  %v2601 = vcombine.high %v2535, %v2551
  %v2603 = vunpack.c.l.s4 1934713408
  %v2604 = vunpack.c.0.s8 %v2603
  %v2605 = vlaneseq
  %v2606 = vshrl.u32 %v2605, 7
  %v2607 = vsub.s32 %v2604, %v2606
  %v2608 = vrot.slane %v2600, %v2607
  %v2610 = vunpack.c.l.s4 1934713408
  %v2611 = vunpack.c.0.s8 %v2610
  %v2612 = vlaneseq
  %v2613 = vshrl.u32 %v2612, 7
  %v2614 = vsub.s32 %v2611, %v2613
  %v2615 = vrot.slane %v2601, %v2614
  %v2616 = vcombine.low %v2560, %v2576
  %v2617 = vcombine.high %v2560, %v2576
  %v2619 = vunpack.c.l.s4 1934713408
  %v2620 = vunpack.c.0.s8 %v2619
  %v2621 = vlaneseq
  %v2622 = vshrl.u32 %v2621, 7
  %v2623 = vsub.s32 %v2620, %v2622
  %v2624 = vrot.slane %v2616, %v2623
  %v2626 = vunpack.c.l.s4 1934713408
  %v2627 = vunpack.c.0.s8 %v2626
  %v2628 = vlaneseq
  %v2629 = vshrl.u32 %v2628, 7
  %v2630 = vsub.s32 %v2627, %v2629
  %v2631 = vrot.slane %v2617, %v2630
  %v2632 = vcombine.low %v2567, %v2583
  %v2633 = vcombine.high %v2567, %v2583
  %v2635 = vunpack.c.l.s4 1934713408
  %v2636 = vunpack.c.0.s8 %v2635
  %v2637 = vlaneseq
  %v2638 = vshrl.u32 %v2637, 7
  %v2639 = vsub.s32 %v2636, %v2638
  %v2640 = vrot.slane %v2632, %v2639
  %v2642 = vunpack.c.l.s4 1934713408
  %v2643 = vunpack.c.0.s8 %v2642
  %v2644 = vlaneseq
  %v2645 = vshrl.u32 %v2644, 7
  %v2646 = vsub.s32 %v2643, %v2645
  %v2647 = vrot.slane %v2633, %v2646
  %v2648 = vcombine.low %v2592, %v2624
  %v2649 = vcombine.high %v2592, %v2624
  %v2650 = vcombine.low %v2599, %v2631
  %v2651 = vcombine.high %v2599, %v2631
  %v2652 = vcombine.low %v2608, %v2640
  %v2653 = vcombine.high %v2608, %v2640
  %v2654 = vcombine.low %v2615, %v2647
  %v2655 = vcombine.high %v2615, %v2647
  %v2656 = vcombine.low %v822, %v844
  %v2657 = vcombine.high %v822, %v844
  %v2659 = vunpack.c.l.s4 1983009808
  %v2660 = vunpack.c.0.s8 %v2659
  %v2661 = vlaneseq
  %v2662 = vshrl.u32 %v2661, 7
  %v2663 = vsub.s32 %v2660, %v2662
  %v2664 = vrot.slane %v2656, %v2663
  %v2666 = vunpack.c.l.s4 1983009808
  %v2667 = vunpack.c.0.s8 %v2666
  %v2668 = vlaneseq
  %v2669 = vshrl.u32 %v2668, 7
  %v2670 = vsub.s32 %v2667, %v2669
  %v2671 = vrot.slane %v2657, %v2670
  %v2672 = vcombine.low %v833, %v855
  %v2673 = vcombine.high %v833, %v855
  %v2675 = vunpack.c.l.s4 1983009808
  %v2676 = vunpack.c.0.s8 %v2675
  %v2677 = vlaneseq
  %v2678 = vshrl.u32 %v2677, 7
  %v2679 = vsub.s32 %v2676, %v2678
  %v2680 = vrot.slane %v2672, %v2679
  %v2682 = vunpack.c.l.s4 1983009808
  %v2683 = vunpack.c.0.s8 %v2682
  %v2684 = vlaneseq
  %v2685 = vshrl.u32 %v2684, 7
  %v2686 = vsub.s32 %v2683, %v2685
  %v2687 = vrot.slane %v2673, %v2686
  %v2688 = vcombine.low %v866, %v888
  %v2689 = vcombine.high %v866, %v888
  %v2691 = vunpack.c.l.s4 1983009808
  %v2692 = vunpack.c.0.s8 %v2691
  %v2693 = vlaneseq
  %v2694 = vshrl.u32 %v2693, 7
  %v2695 = vsub.s32 %v2692, %v2694
  %v2696 = vrot.slane %v2688, %v2695
  %v2698 = vunpack.c.l.s4 1983009808
  %v2699 = vunpack.c.0.s8 %v2698
  %v2700 = vlaneseq
  %v2701 = vshrl.u32 %v2700, 7
  %v2702 = vsub.s32 %v2699, %v2701
  %v2703 = vrot.slane %v2689, %v2702
  %v2704 = vcombine.low %v877, %v899
  %v2705 = vcombine.high %v877, %v899
  %v2707 = vunpack.c.l.s4 1983009808
  %v2708 = vunpack.c.0.s8 %v2707
  %v2709 = vlaneseq
  %v2710 = vshrl.u32 %v2709, 7
  %v2711 = vsub.s32 %v2708, %v2710
  %v2712 = vrot.slane %v2704, %v2711
  %v2714 = vunpack.c.l.s4 1983009808
  %v2715 = vunpack.c.0.s8 %v2714
  %v2716 = vlaneseq
  %v2717 = vshrl.u32 %v2716, 7
  %v2718 = vsub.s32 %v2715, %v2717
  %v2719 = vrot.slane %v2705, %v2718
  %v2720 = vcombine.low %v2664, %v2680
  %v2721 = vcombine.high %v2664, %v2680
  %v2723 = vunpack.c.l.s4 1934713408
  %v2724 = vunpack.c.0.s8 %v2723
  %v2725 = vlaneseq
  %v2726 = vshrl.u32 %v2725, 7
  %v2727 = vsub.s32 %v2724, %v2726
  %v2728 = vrot.slane %v2720, %v2727
  %v2730 = vunpack.c.l.s4 1934713408
  %v2731 = vunpack.c.0.s8 %v2730
  %v2732 = vlaneseq
  %v2733 = vshrl.u32 %v2732, 7
  %v2734 = vsub.s32 %v2731, %v2733
  %v2735 = vrot.slane %v2721, %v2734
  %v2736 = vcombine.low %v2671, %v2687
  %v2737 = vcombine.high %v2671, %v2687
  %v2739 = vunpack.c.l.s4 1934713408
  %v2740 = vunpack.c.0.s8 %v2739
  %v2741 = vlaneseq
  %v2742 = vshrl.u32 %v2741, 7
  %v2743 = vsub.s32 %v2740, %v2742
  %v2744 = vrot.slane %v2736, %v2743
  %v2746 = vunpack.c.l.s4 1934713408
  %v2747 = vunpack.c.0.s8 %v2746
  %v2748 = vlaneseq
  %v2749 = vshrl.u32 %v2748, 7
  %v2750 = vsub.s32 %v2747, %v2749
  %v2751 = vrot.slane %v2737, %v2750
  %v2752 = vcombine.low %v2696, %v2712
  %v2753 = vcombine.high %v2696, %v2712
  %v2755 = vunpack.c.l.s4 1934713408
  %v2756 = vunpack.c.0.s8 %v2755
  %v2757 = vlaneseq
  %v2758 = vshrl.u32 %v2757, 7
  %v2759 = vsub.s32 %v2756, %v2758
  %v2760 = vrot.slane %v2752, %v2759
  %v2762 = vunpack.c.l.s4 1934713408
  %v2763 = vunpack.c.0.s8 %v2762
  %v2764 = vlaneseq
  %v2765 = vshrl.u32 %v2764, 7
  %v2766 = vsub.s32 %v2763, %v2765
  %v2767 = vrot.slane %v2753, %v2766
  %v2768 = vcombine.low %v2703, %v2719
  %v2769 = vcombine.high %v2703, %v2719
  %v2771 = vunpack.c.l.s4 1934713408
  %v2772 = vunpack.c.0.s8 %v2771
  %v2773 = vlaneseq
  %v2774 = vshrl.u32 %v2773, 7
  %v2775 = vsub.s32 %v2772, %v2774
  %v2776 = vrot.slane %v2768, %v2775
  %v2778 = vunpack.c.l.s4 1934713408
  %v2779 = vunpack.c.0.s8 %v2778
  %v2780 = vlaneseq
  %v2781 = vshrl.u32 %v2780, 7
  %v2782 = vsub.s32 %v2779, %v2781
  %v2783 = vrot.slane %v2769, %v2782
  %v2784 = vcombine.low %v2728, %v2760
  %v2785 = vcombine.high %v2728, %v2760
  %v2786 = vcombine.low %v2735, %v2767
  %v2787 = vcombine.high %v2735, %v2767
  %v2788 = vcombine.low %v2744, %v2776
  %v2789 = vcombine.high %v2744, %v2776
  %v2790 = vcombine.low %v2751, %v2783
  %v2791 = vcombine.high %v2751, %v2783
  %v2792 = vcombine.low %v910, %v932
  %v2793 = vcombine.high %v910, %v932
  %v2795 = vunpack.c.l.s4 1983009808
  %v2796 = vunpack.c.0.s8 %v2795
  %v2797 = vlaneseq
  %v2798 = vshrl.u32 %v2797, 7
  %v2799 = vsub.s32 %v2796, %v2798
  %v2800 = vrot.slane %v2792, %v2799
  %v2802 = vunpack.c.l.s4 1983009808
  %v2803 = vunpack.c.0.s8 %v2802
  %v2804 = vlaneseq
  %v2805 = vshrl.u32 %v2804, 7
  %v2806 = vsub.s32 %v2803, %v2805
  %v2807 = vrot.slane %v2793, %v2806
  %v2808 = vcombine.low %v921, %v943
  %v2809 = vcombine.high %v921, %v943
  %v2811 = vunpack.c.l.s4 1983009808
  %v2812 = vunpack.c.0.s8 %v2811
  %v2813 = vlaneseq
  %v2814 = vshrl.u32 %v2813, 7
  %v2815 = vsub.s32 %v2812, %v2814
  %v2816 = vrot.slane %v2808, %v2815
  %v2818 = vunpack.c.l.s4 1983009808
  %v2819 = vunpack.c.0.s8 %v2818
  %v2820 = vlaneseq
  %v2821 = vshrl.u32 %v2820, 7
  %v2822 = vsub.s32 %v2819, %v2821
  %v2823 = vrot.slane %v2809, %v2822
  %v2824 = vcombine.low %v954, %v976
  %v2825 = vcombine.high %v954, %v976
  %v2827 = vunpack.c.l.s4 1983009808
  %v2828 = vunpack.c.0.s8 %v2827
  %v2829 = vlaneseq
  %v2830 = vshrl.u32 %v2829, 7
  %v2831 = vsub.s32 %v2828, %v2830
  %v2832 = vrot.slane %v2824, %v2831
  %v2834 = vunpack.c.l.s4 1983009808
  %v2835 = vunpack.c.0.s8 %v2834
  %v2836 = vlaneseq
  %v2837 = vshrl.u32 %v2836, 7
  %v2838 = vsub.s32 %v2835, %v2837
  %v2839 = vrot.slane %v2825, %v2838
  %v2840 = vcombine.low %v965, %v987
  %v2841 = vcombine.high %v965, %v987
  %v2843 = vunpack.c.l.s4 1983009808
  %v2844 = vunpack.c.0.s8 %v2843
  %v2845 = vlaneseq
  %v2846 = vshrl.u32 %v2845, 7
  %v2847 = vsub.s32 %v2844, %v2846
  %v2848 = vrot.slane %v2840, %v2847
  %v2850 = vunpack.c.l.s4 1983009808
  %v2851 = vunpack.c.0.s8 %v2850
  %v2852 = vlaneseq
  %v2853 = vshrl.u32 %v2852, 7
  %v2854 = vsub.s32 %v2851, %v2853
  %v2855 = vrot.slane %v2841, %v2854
  %v2856 = vcombine.low %v2800, %v2816
  %v2857 = vcombine.high %v2800, %v2816
  %v2859 = vunpack.c.l.s4 1934713408
  %v2860 = vunpack.c.0.s8 %v2859
  %v2861 = vlaneseq
  %v2862 = vshrl.u32 %v2861, 7
  %v2863 = vsub.s32 %v2860, %v2862
  %v2864 = vrot.slane %v2856, %v2863
  %v2866 = vunpack.c.l.s4 1934713408
  %v2867 = vunpack.c.0.s8 %v2866
  %v2868 = vlaneseq
  %v2869 = vshrl.u32 %v2868, 7
  %v2870 = vsub.s32 %v2867, %v2869
  %v2871 = vrot.slane %v2857, %v2870
  %v2872 = vcombine.low %v2807, %v2823
  %v2873 = vcombine.high %v2807, %v2823
  %v2875 = vunpack.c.l.s4 1934713408
  %v2876 = vunpack.c.0.s8 %v2875
  %v2877 = vlaneseq
  %v2878 = vshrl.u32 %v2877, 7
  %v2879 = vsub.s32 %v2876, %v2878
  %v2880 = vrot.slane %v2872, %v2879
  %v2882 = vunpack.c.l.s4 1934713408
  %v2883 = vunpack.c.0.s8 %v2882
  %v2884 = vlaneseq
  %v2885 = vshrl.u32 %v2884, 7
  %v2886 = vsub.s32 %v2883, %v2885
  %v2887 = vrot.slane %v2873, %v2886
  %v2888 = vcombine.low %v2832, %v2848
  %v2889 = vcombine.high %v2832, %v2848
  %v2891 = vunpack.c.l.s4 1934713408
  %v2892 = vunpack.c.0.s8 %v2891
  %v2893 = vlaneseq
  %v2894 = vshrl.u32 %v2893, 7
  %v2895 = vsub.s32 %v2892, %v2894
  %v2896 = vrot.slane %v2888, %v2895
  %v2898 = vunpack.c.l.s4 1934713408
  %v2899 = vunpack.c.0.s8 %v2898
  %v2900 = vlaneseq
  %v2901 = vshrl.u32 %v2900, 7
  %v2902 = vsub.s32 %v2899, %v2901
  %v2903 = vrot.slane %v2889, %v2902
  %v2904 = vcombine.low %v2839, %v2855
  %v2905 = vcombine.high %v2839, %v2855
  %v2907 = vunpack.c.l.s4 1934713408
  %v2908 = vunpack.c.0.s8 %v2907
  %v2909 = vlaneseq
  %v2910 = vshrl.u32 %v2909, 7
  %v2911 = vsub.s32 %v2908, %v2910
  %v2912 = vrot.slane %v2904, %v2911
  %v2914 = vunpack.c.l.s4 1934713408
  %v2915 = vunpack.c.0.s8 %v2914
  %v2916 = vlaneseq
  %v2917 = vshrl.u32 %v2916, 7
  %v2918 = vsub.s32 %v2915, %v2917
  %v2919 = vrot.slane %v2905, %v2918
  %v2920 = vcombine.low %v2864, %v2896
  %v2921 = vcombine.high %v2864, %v2896
  %v2922 = vcombine.low %v2871, %v2903
  %v2923 = vcombine.high %v2871, %v2903
  %v2924 = vcombine.low %v2880, %v2912
  %v2925 = vcombine.high %v2880, %v2912
  %v2926 = vcombine.low %v2887, %v2919
  %v2927 = vcombine.high %v2887, %v2919
  %v2928 = vcombine.low %v998, %v1020
  %v2929 = vcombine.high %v998, %v1020
  %v2931 = vunpack.c.l.s4 1983009808
  %v2932 = vunpack.c.0.s8 %v2931
  %v2933 = vlaneseq
  %v2934 = vshrl.u32 %v2933, 7
  %v2935 = vsub.s32 %v2932, %v2934
  %v2936 = vrot.slane %v2928, %v2935
  %v2938 = vunpack.c.l.s4 1983009808
  %v2939 = vunpack.c.0.s8 %v2938
  %v2940 = vlaneseq
  %v2941 = vshrl.u32 %v2940, 7
  %v2942 = vsub.s32 %v2939, %v2941
  %v2943 = vrot.slane %v2929, %v2942
  %v2944 = vcombine.low %v1009, %v1031
  %v2945 = vcombine.high %v1009, %v1031
  %v2947 = vunpack.c.l.s4 1983009808
  %v2948 = vunpack.c.0.s8 %v2947
  %v2949 = vlaneseq
  %v2950 = vshrl.u32 %v2949, 7
  %v2951 = vsub.s32 %v2948, %v2950
  %v2952 = vrot.slane %v2944, %v2951
  %v2954 = vunpack.c.l.s4 1983009808
  %v2955 = vunpack.c.0.s8 %v2954
  %v2956 = vlaneseq
  %v2957 = vshrl.u32 %v2956, 7
  %v2958 = vsub.s32 %v2955, %v2957
  %v2959 = vrot.slane %v2945, %v2958
  %v2960 = vcombine.low %v1042, %v1064
  %v2961 = vcombine.high %v1042, %v1064
  %v2963 = vunpack.c.l.s4 1983009808
  %v2964 = vunpack.c.0.s8 %v2963
  %v2965 = vlaneseq
  %v2966 = vshrl.u32 %v2965, 7
  %v2967 = vsub.s32 %v2964, %v2966
  %v2968 = vrot.slane %v2960, %v2967
  %v2970 = vunpack.c.l.s4 1983009808
  %v2971 = vunpack.c.0.s8 %v2970
  %v2972 = vlaneseq
  %v2973 = vshrl.u32 %v2972, 7
  %v2974 = vsub.s32 %v2971, %v2973
  %v2975 = vrot.slane %v2961, %v2974
  %v2976 = vcombine.low %v1053, %v1075
  %v2977 = vcombine.high %v1053, %v1075
  %v2979 = vunpack.c.l.s4 1983009808
  %v2980 = vunpack.c.0.s8 %v2979
  %v2981 = vlaneseq
  %v2982 = vshrl.u32 %v2981, 7
  %v2983 = vsub.s32 %v2980, %v2982
  %v2984 = vrot.slane %v2976, %v2983
  %v2986 = vunpack.c.l.s4 1983009808
  %v2987 = vunpack.c.0.s8 %v2986
  %v2988 = vlaneseq
  %v2989 = vshrl.u32 %v2988, 7
  %v2990 = vsub.s32 %v2987, %v2989
  %v2991 = vrot.slane %v2977, %v2990
  %v2992 = vcombine.low %v2936, %v2952
  %v2993 = vcombine.high %v2936, %v2952
  %v2995 = vunpack.c.l.s4 1934713408
  %v2996 = vunpack.c.0.s8 %v2995
  %v2997 = vlaneseq
  %v2998 = vshrl.u32 %v2997, 7
  %v2999 = vsub.s32 %v2996, %v2998
  %v3000 = vrot.slane %v2992, %v2999
  %v3002 = vunpack.c.l.s4 1934713408
  %v3003 = vunpack.c.0.s8 %v3002
  %v3004 = vlaneseq
  %v3005 = vshrl.u32 %v3004, 7
  %v3006 = vsub.s32 %v3003, %v3005
  %v3007 = vrot.slane %v2993, %v3006
  %v3008 = vcombine.low %v2943, %v2959
  %v3009 = vcombine.high %v2943, %v2959
  %v3011 = vunpack.c.l.s4 1934713408
  %v3012 = vunpack.c.0.s8 %v3011
  %v3013 = vlaneseq
  %v3014 = vshrl.u32 %v3013, 7
  %v3015 = vsub.s32 %v3012, %v3014
  %v3016 = vrot.slane %v3008, %v3015
  %v3018 = vunpack.c.l.s4 1934713408
  %v3019 = vunpack.c.0.s8 %v3018
  %v3020 = vlaneseq
  %v3021 = vshrl.u32 %v3020, 7
  %v3022 = vsub.s32 %v3019, %v3021
  %v3023 = vrot.slane %v3009, %v3022
  %v3024 = vcombine.low %v2968, %v2984
  %v3025 = vcombine.high %v2968, %v2984
  %v3027 = vunpack.c.l.s4 1934713408
  %v3028 = vunpack.c.0.s8 %v3027
  %v3029 = vlaneseq
  %v3030 = vshrl.u32 %v3029, 7
  %v3031 = vsub.s32 %v3028, %v3030
  %v3032 = vrot.slane %v3024, %v3031
  %v3034 = vunpack.c.l.s4 1934713408
  %v3035 = vunpack.c.0.s8 %v3034
  %v3036 = vlaneseq
  %v3037 = vshrl.u32 %v3036, 7
  %v3038 = vsub.s32 %v3035, %v3037
  %v3039 = vrot.slane %v3025, %v3038
  %v3040 = vcombine.low %v2975, %v2991
  %v3041 = vcombine.high %v2975, %v2991
  %v3043 = vunpack.c.l.s4 1934713408
  %v3044 = vunpack.c.0.s8 %v3043
  %v3045 = vlaneseq
  %v3046 = vshrl.u32 %v3045, 7
  %v3047 = vsub.s32 %v3044, %v3046
  %v3048 = vrot.slane %v3040, %v3047
  %v3050 = vunpack.c.l.s4 1934713408
  %v3051 = vunpack.c.0.s8 %v3050
  %v3052 = vlaneseq
  %v3053 = vshrl.u32 %v3052, 7
  %v3054 = vsub.s32 %v3051, %v3053
  %v3055 = vrot.slane %v3041, %v3054
  %v3056 = vcombine.low %v3000, %v3032
  %v3057 = vcombine.high %v3000, %v3032
  %v3058 = vcombine.low %v3007, %v3039
  %v3059 = vcombine.high %v3007, %v3039
  %v3060 = vcombine.low %v3016, %v3048
  %v3061 = vcombine.high %v3016, %v3048
  %v3062 = vcombine.low %v3023, %v3055
  %v3063 = vcombine.high %v3023, %v3055
  %v3064 = vcombine.low %v1086, %v1108
  %v3065 = vcombine.high %v1086, %v1108
  %v3067 = vunpack.c.l.s4 1983009808
  %v3068 = vunpack.c.0.s8 %v3067
  %v3069 = vlaneseq
  %v3070 = vshrl.u32 %v3069, 7
  %v3071 = vsub.s32 %v3068, %v3070
  %v3072 = vrot.slane %v3064, %v3071
  %v3074 = vunpack.c.l.s4 1983009808
  %v3075 = vunpack.c.0.s8 %v3074
  %v3076 = vlaneseq
  %v3077 = vshrl.u32 %v3076, 7
  %v3078 = vsub.s32 %v3075, %v3077
  %v3079 = vrot.slane %v3065, %v3078
  %v3080 = vcombine.low %v1097, %v1119
  %v3081 = vcombine.high %v1097, %v1119
  %v3083 = vunpack.c.l.s4 1983009808
  %v3084 = vunpack.c.0.s8 %v3083
  %v3085 = vlaneseq
  %v3086 = vshrl.u32 %v3085, 7
  %v3087 = vsub.s32 %v3084, %v3086
  %v3088 = vrot.slane %v3080, %v3087
  %v3090 = vunpack.c.l.s4 1983009808
  %v3091 = vunpack.c.0.s8 %v3090
  %v3092 = vlaneseq
  %v3093 = vshrl.u32 %v3092, 7
  %v3094 = vsub.s32 %v3091, %v3093
  %v3095 = vrot.slane %v3081, %v3094
  %v3096 = vcombine.low %v1130, %v1152
  %v3097 = vcombine.high %v1130, %v1152
  %v3099 = vunpack.c.l.s4 1983009808
  %v3100 = vunpack.c.0.s8 %v3099
  %v3101 = vlaneseq
  %v3102 = vshrl.u32 %v3101, 7
  %v3103 = vsub.s32 %v3100, %v3102
  %v3104 = vrot.slane %v3096, %v3103
  %v3106 = vunpack.c.l.s4 1983009808
  %v3107 = vunpack.c.0.s8 %v3106
  %v3108 = vlaneseq
  %v3109 = vshrl.u32 %v3108, 7
  %v3110 = vsub.s32 %v3107, %v3109
  %v3111 = vrot.slane %v3097, %v3110
  %v3112 = vcombine.low %v1141, %v1163
  %v3113 = vcombine.high %v1141, %v1163
  %v3115 = vunpack.c.l.s4 1983009808
  %v3116 = vunpack.c.0.s8 %v3115
  %v3117 = vlaneseq
  %v3118 = vshrl.u32 %v3117, 7
  %v3119 = vsub.s32 %v3116, %v3118
  %v3120 = vrot.slane %v3112, %v3119
  %v3122 = vunpack.c.l.s4 1983009808
  %v3123 = vunpack.c.0.s8 %v3122
  %v3124 = vlaneseq
  %v3125 = vshrl.u32 %v3124, 7
  %v3126 = vsub.s32 %v3123, %v3125
  %v3127 = vrot.slane %v3113, %v3126
  %v3128 = vcombine.low %v3072, %v3088
  %v3129 = vcombine.high %v3072, %v3088
  %v3131 = vunpack.c.l.s4 1934713408
  %v3132 = vunpack.c.0.s8 %v3131
  %v3133 = vlaneseq
  %v3134 = vshrl.u32 %v3133, 7
  %v3135 = vsub.s32 %v3132, %v3134
  %v3136 = vrot.slane %v3128, %v3135
  %v3138 = vunpack.c.l.s4 1934713408
  %v3139 = vunpack.c.0.s8 %v3138
  %v3140 = vlaneseq
  %v3141 = vshrl.u32 %v3140, 7
  %v3142 = vsub.s32 %v3139, %v3141
  %v3143 = vrot.slane %v3129, %v3142
  %v3144 = vcombine.low %v3079, %v3095
  %v3145 = vcombine.high %v3079, %v3095
  %v3147 = vunpack.c.l.s4 1934713408
  %v3148 = vunpack.c.0.s8 %v3147
  %v3149 = vlaneseq
  %v3150 = vshrl.u32 %v3149, 7
  %v3151 = vsub.s32 %v3148, %v3150
  %v3152 = vrot.slane %v3144, %v3151
  %v3154 = vunpack.c.l.s4 1934713408
  %v3155 = vunpack.c.0.s8 %v3154
  %v3156 = vlaneseq
  %v3157 = vshrl.u32 %v3156, 7
  %v3158 = vsub.s32 %v3155, %v3157
  %v3159 = vrot.slane %v3145, %v3158
  %v3160 = vcombine.low %v3104, %v3120
  %v3161 = vcombine.high %v3104, %v3120
  %v3163 = vunpack.c.l.s4 1934713408
  %v3164 = vunpack.c.0.s8 %v3163
  %v3165 = vlaneseq
  %v3166 = vshrl.u32 %v3165, 7
  %v3167 = vsub.s32 %v3164, %v3166
  %v3168 = vrot.slane %v3160, %v3167
  %v3170 = vunpack.c.l.s4 1934713408
  %v3171 = vunpack.c.0.s8 %v3170
  %v3172 = vlaneseq
  %v3173 = vshrl.u32 %v3172, 7
  %v3174 = vsub.s32 %v3171, %v3173
  %v3175 = vrot.slane %v3161, %v3174
  %v3176 = vcombine.low %v3111, %v3127
  %v3177 = vcombine.high %v3111, %v3127
  %v3179 = vunpack.c.l.s4 1934713408
  %v3180 = vunpack.c.0.s8 %v3179
  %v3181 = vlaneseq
  %v3182 = vshrl.u32 %v3181, 7
  %v3183 = vsub.s32 %v3180, %v3182
  %v3184 = vrot.slane %v3176, %v3183
  %v3186 = vunpack.c.l.s4 1934713408
  %v3187 = vunpack.c.0.s8 %v3186
  %v3188 = vlaneseq
  %v3189 = vshrl.u32 %v3188, 7
  %v3190 = vsub.s32 %v3187, %v3189
  %v3191 = vrot.slane %v3177, %v3190
  %v3192 = vcombine.low %v3136, %v3168
  %v3193 = vcombine.high %v3136, %v3168
  %v3194 = vcombine.low %v3143, %v3175
  %v3195 = vcombine.high %v3143, %v3175
  %v3196 = vcombine.low %v3152, %v3184
  %v3197 = vcombine.high %v3152, %v3184
  %v3198 = vcombine.low %v3159, %v3191
  %v3199 = vcombine.high %v3159, %v3191
  %v3200 = vcombine.low %v1174, %v1196
  %v3201 = vcombine.high %v1174, %v1196
  %v3203 = vunpack.c.l.s4 1983009808
  %v3204 = vunpack.c.0.s8 %v3203
  %v3205 = vlaneseq
  %v3206 = vshrl.u32 %v3205, 7
  %v3207 = vsub.s32 %v3204, %v3206
  %v3208 = vrot.slane %v3200, %v3207
  %v3210 = vunpack.c.l.s4 1983009808
  %v3211 = vunpack.c.0.s8 %v3210
  %v3212 = vlaneseq
  %v3213 = vshrl.u32 %v3212, 7
  %v3214 = vsub.s32 %v3211, %v3213
  %v3215 = vrot.slane %v3201, %v3214
  %v3216 = vcombine.low %v1185, %v1207
  %v3217 = vcombine.high %v1185, %v1207
  %v3219 = vunpack.c.l.s4 1983009808
  %v3220 = vunpack.c.0.s8 %v3219
  %v3221 = vlaneseq
  %v3222 = vshrl.u32 %v3221, 7
  %v3223 = vsub.s32 %v3220, %v3222
  %v3224 = vrot.slane %v3216, %v3223
  %v3226 = vunpack.c.l.s4 1983009808
  %v3227 = vunpack.c.0.s8 %v3226
  %v3228 = vlaneseq
  %v3229 = vshrl.u32 %v3228, 7
  %v3230 = vsub.s32 %v3227, %v3229
  %v3231 = vrot.slane %v3217, %v3230
  %v3232 = vcombine.low %v1218, %v1240
  %v3233 = vcombine.high %v1218, %v1240
  %v3235 = vunpack.c.l.s4 1983009808
  %v3236 = vunpack.c.0.s8 %v3235
  %v3237 = vlaneseq
  %v3238 = vshrl.u32 %v3237, 7
  %v3239 = vsub.s32 %v3236, %v3238
  %v3240 = vrot.slane %v3232, %v3239
  %v3242 = vunpack.c.l.s4 1983009808
  %v3243 = vunpack.c.0.s8 %v3242
  %v3244 = vlaneseq
  %v3245 = vshrl.u32 %v3244, 7
  %v3246 = vsub.s32 %v3243, %v3245
  %v3247 = vrot.slane %v3233, %v3246
  %v3248 = vcombine.low %v1229, %v1251
  %v3249 = vcombine.high %v1229, %v1251
  %v3251 = vunpack.c.l.s4 1983009808
  %v3252 = vunpack.c.0.s8 %v3251
  %v3253 = vlaneseq
  %v3254 = vshrl.u32 %v3253, 7
  %v3255 = vsub.s32 %v3252, %v3254
  %v3256 = vrot.slane %v3248, %v3255
  %v3258 = vunpack.c.l.s4 1983009808
  %v3259 = vunpack.c.0.s8 %v3258
  %v3260 = vlaneseq
  %v3261 = vshrl.u32 %v3260, 7
  %v3262 = vsub.s32 %v3259, %v3261
  %v3263 = vrot.slane %v3249, %v3262
  %v3264 = vcombine.low %v3208, %v3224
  %v3265 = vcombine.high %v3208, %v3224
  %v3267 = vunpack.c.l.s4 1934713408
  %v3268 = vunpack.c.0.s8 %v3267
  %v3269 = vlaneseq
  %v3270 = vshrl.u32 %v3269, 7
  %v3271 = vsub.s32 %v3268, %v3270
  %v3272 = vrot.slane %v3264, %v3271
  %v3274 = vunpack.c.l.s4 1934713408
  %v3275 = vunpack.c.0.s8 %v3274
  %v3276 = vlaneseq
  %v3277 = vshrl.u32 %v3276, 7
  %v3278 = vsub.s32 %v3275, %v3277
  %v3279 = vrot.slane %v3265, %v3278
  %v3280 = vcombine.low %v3215, %v3231
  %v3281 = vcombine.high %v3215, %v3231
  %v3283 = vunpack.c.l.s4 1934713408
  %v3284 = vunpack.c.0.s8 %v3283
  %v3285 = vlaneseq
  %v3286 = vshrl.u32 %v3285, 7
  %v3287 = vsub.s32 %v3284, %v3286
  %v3288 = vrot.slane %v3280, %v3287
  %v3290 = vunpack.c.l.s4 1934713408
  %v3291 = vunpack.c.0.s8 %v3290
  %v3292 = vlaneseq
  %v3293 = vshrl.u32 %v3292, 7
  %v3294 = vsub.s32 %v3291, %v3293
  %v3295 = vrot.slane %v3281, %v3294
  %v3296 = vcombine.low %v3240, %v3256
  %v3297 = vcombine.high %v3240, %v3256
  %v3299 = vunpack.c.l.s4 1934713408
  %v3300 = vunpack.c.0.s8 %v3299
  %v3301 = vlaneseq
  %v3302 = vshrl.u32 %v3301, 7
  %v3303 = vsub.s32 %v3300, %v3302
  %v3304 = vrot.slane %v3296, %v3303
  %v3306 = vunpack.c.l.s4 1934713408
  %v3307 = vunpack.c.0.s8 %v3306
  %v3308 = vlaneseq
  %v3309 = vshrl.u32 %v3308, 7
  %v3310 = vsub.s32 %v3307, %v3309
  %v3311 = vrot.slane %v3297, %v3310
  %v3312 = vcombine.low %v3247, %v3263
  %v3313 = vcombine.high %v3247, %v3263
  %v3315 = vunpack.c.l.s4 1934713408
  %v3316 = vunpack.c.0.s8 %v3315
  %v3317 = vlaneseq
  %v3318 = vshrl.u32 %v3317, 7
  %v3319 = vsub.s32 %v3316, %v3318
  %v3320 = vrot.slane %v3312, %v3319
  %v3322 = vunpack.c.l.s4 1934713408
  %v3323 = vunpack.c.0.s8 %v3322
  %v3324 = vlaneseq
  %v3325 = vshrl.u32 %v3324, 7
  %v3326 = vsub.s32 %v3323, %v3325
  %v3327 = vrot.slane %v3313, %v3326
  %v3328 = vcombine.low %v3272, %v3304
  %v3329 = vcombine.high %v3272, %v3304
  %v3330 = vcombine.low %v3279, %v3311
  %v3331 = vcombine.high %v3279, %v3311
  %v3332 = vcombine.low %v3288, %v3320
  %v3333 = vcombine.high %v3288, %v3320
  %v3334 = vcombine.low %v3295, %v3327
  %v3335 = vcombine.high %v3295, %v3327
  %v3336 = vcombine.low %v1262, %v1284
  %v3337 = vcombine.high %v1262, %v1284
  %v3339 = vunpack.c.l.s4 1983009808
  %v3340 = vunpack.c.0.s8 %v3339
  %v3341 = vlaneseq
  %v3342 = vshrl.u32 %v3341, 7
  %v3343 = vsub.s32 %v3340, %v3342
  %v3344 = vrot.slane %v3336, %v3343
  %v3346 = vunpack.c.l.s4 1983009808
  %v3347 = vunpack.c.0.s8 %v3346
  %v3348 = vlaneseq
  %v3349 = vshrl.u32 %v3348, 7
  %v3350 = vsub.s32 %v3347, %v3349
  %v3351 = vrot.slane %v3337, %v3350
  %v3352 = vcombine.low %v1273, %v1295
  %v3353 = vcombine.high %v1273, %v1295
  %v3355 = vunpack.c.l.s4 1983009808
  %v3356 = vunpack.c.0.s8 %v3355
  %v3357 = vlaneseq
  %v3358 = vshrl.u32 %v3357, 7
  %v3359 = vsub.s32 %v3356, %v3358
  %v3360 = vrot.slane %v3352, %v3359
  %v3362 = vunpack.c.l.s4 1983009808
  %v3363 = vunpack.c.0.s8 %v3362
  %v3364 = vlaneseq
  %v3365 = vshrl.u32 %v3364, 7
  %v3366 = vsub.s32 %v3363, %v3365
  %v3367 = vrot.slane %v3353, %v3366
  %v3368 = vcombine.low %v1306, %v1328
  %v3369 = vcombine.high %v1306, %v1328
  %v3371 = vunpack.c.l.s4 1983009808
  %v3372 = vunpack.c.0.s8 %v3371
  %v3373 = vlaneseq
  %v3374 = vshrl.u32 %v3373, 7
  %v3375 = vsub.s32 %v3372, %v3374
  %v3376 = vrot.slane %v3368, %v3375
  %v3378 = vunpack.c.l.s4 1983009808
  %v3379 = vunpack.c.0.s8 %v3378
  %v3380 = vlaneseq
  %v3381 = vshrl.u32 %v3380, 7
  %v3382 = vsub.s32 %v3379, %v3381
  %v3383 = vrot.slane %v3369, %v3382
  %v3384 = vcombine.low %v1317, %v1339
  %v3385 = vcombine.high %v1317, %v1339
  %v3387 = vunpack.c.l.s4 1983009808
  %v3388 = vunpack.c.0.s8 %v3387
  %v3389 = vlaneseq
  %v3390 = vshrl.u32 %v3389, 7
  %v3391 = vsub.s32 %v3388, %v3390
  %v3392 = vrot.slane %v3384, %v3391
  %v3394 = vunpack.c.l.s4 1983009808
  %v3395 = vunpack.c.0.s8 %v3394
  %v3396 = vlaneseq
  %v3397 = vshrl.u32 %v3396, 7
  %v3398 = vsub.s32 %v3395, %v3397
  %v3399 = vrot.slane %v3385, %v3398
  %v3400 = vcombine.low %v3344, %v3360
  %v3401 = vcombine.high %v3344, %v3360
  %v3403 = vunpack.c.l.s4 1934713408
  %v3404 = vunpack.c.0.s8 %v3403
  %v3405 = vlaneseq
  %v3406 = vshrl.u32 %v3405, 7
  %v3407 = vsub.s32 %v3404, %v3406
  %v3408 = vrot.slane %v3400, %v3407
  %v3410 = vunpack.c.l.s4 1934713408
  %v3411 = vunpack.c.0.s8 %v3410
  %v3412 = vlaneseq
  %v3413 = vshrl.u32 %v3412, 7
  %v3414 = vsub.s32 %v3411, %v3413
  %v3415 = vrot.slane %v3401, %v3414
  %v3416 = vcombine.low %v3351, %v3367
  %v3417 = vcombine.high %v3351, %v3367
  %v3419 = vunpack.c.l.s4 1934713408
  %v3420 = vunpack.c.0.s8 %v3419
  %v3421 = vlaneseq
  %v3422 = vshrl.u32 %v3421, 7
  %v3423 = vsub.s32 %v3420, %v3422
  %v3424 = vrot.slane %v3416, %v3423
  %v3426 = vunpack.c.l.s4 1934713408
  %v3427 = vunpack.c.0.s8 %v3426
  %v3428 = vlaneseq
  %v3429 = vshrl.u32 %v3428, 7
  %v3430 = vsub.s32 %v3427, %v3429
  %v3431 = vrot.slane %v3417, %v3430
  %v3432 = vcombine.low %v3376, %v3392
  %v3433 = vcombine.high %v3376, %v3392
  %v3435 = vunpack.c.l.s4 1934713408
  %v3436 = vunpack.c.0.s8 %v3435
  %v3437 = vlaneseq
  %v3438 = vshrl.u32 %v3437, 7
  %v3439 = vsub.s32 %v3436, %v3438
  %v3440 = vrot.slane %v3432, %v3439
  %v3442 = vunpack.c.l.s4 1934713408
  %v3443 = vunpack.c.0.s8 %v3442
  %v3444 = vlaneseq
  %v3445 = vshrl.u32 %v3444, 7
  %v3446 = vsub.s32 %v3443, %v3445
  %v3447 = vrot.slane %v3433, %v3446
  %v3448 = vcombine.low %v3383, %v3399
  %v3449 = vcombine.high %v3383, %v3399
  %v3451 = vunpack.c.l.s4 1934713408
  %v3452 = vunpack.c.0.s8 %v3451
  %v3453 = vlaneseq
  %v3454 = vshrl.u32 %v3453, 7
  %v3455 = vsub.s32 %v3452, %v3454
  %v3456 = vrot.slane %v3448, %v3455
  %v3458 = vunpack.c.l.s4 1934713408
  %v3459 = vunpack.c.0.s8 %v3458
  %v3460 = vlaneseq
  %v3461 = vshrl.u32 %v3460, 7
  %v3462 = vsub.s32 %v3459, %v3461
  %v3463 = vrot.slane %v3449, %v3462
  %v3464 = vcombine.low %v3408, %v3440
  %v3465 = vcombine.high %v3408, %v3440
  %v3466 = vcombine.low %v3415, %v3447
  %v3467 = vcombine.high %v3415, %v3447
  %v3468 = vcombine.low %v3424, %v3456
  %v3469 = vcombine.high %v3424, %v3456
  %v3470 = vcombine.low %v3431, %v3463
  %v3471 = vcombine.high %v3431, %v3463
  %v3472 = vcombine.low %v1350, %v1372
  %v3473 = vcombine.high %v1350, %v1372
  %v3475 = vunpack.c.l.s4 1983009808
  %v3476 = vunpack.c.0.s8 %v3475
  %v3477 = vlaneseq
  %v3478 = vshrl.u32 %v3477, 7
  %v3479 = vsub.s32 %v3476, %v3478
  %v3480 = vrot.slane %v3472, %v3479
  %v3482 = vunpack.c.l.s4 1983009808
  %v3483 = vunpack.c.0.s8 %v3482
  %v3484 = vlaneseq
  %v3485 = vshrl.u32 %v3484, 7
  %v3486 = vsub.s32 %v3483, %v3485
  %v3487 = vrot.slane %v3473, %v3486
  %v3488 = vcombine.low %v1361, %v1383
  %v3489 = vcombine.high %v1361, %v1383
  %v3491 = vunpack.c.l.s4 1983009808
  %v3492 = vunpack.c.0.s8 %v3491
  %v3493 = vlaneseq
  %v3494 = vshrl.u32 %v3493, 7
  %v3495 = vsub.s32 %v3492, %v3494
  %v3496 = vrot.slane %v3488, %v3495
  %v3498 = vunpack.c.l.s4 1983009808
  %v3499 = vunpack.c.0.s8 %v3498
  %v3500 = vlaneseq
  %v3501 = vshrl.u32 %v3500, 7
  %v3502 = vsub.s32 %v3499, %v3501
  %v3503 = vrot.slane %v3489, %v3502
  %v3504 = vcombine.low %v1394, %v1416
  %v3505 = vcombine.high %v1394, %v1416
  %v3507 = vunpack.c.l.s4 1983009808
  %v3508 = vunpack.c.0.s8 %v3507
  %v3509 = vlaneseq
  %v3510 = vshrl.u32 %v3509, 7
  %v3511 = vsub.s32 %v3508, %v3510
  %v3512 = vrot.slane %v3504, %v3511
  %v3514 = vunpack.c.l.s4 1983009808
  %v3515 = vunpack.c.0.s8 %v3514
  %v3516 = vlaneseq
  %v3517 = vshrl.u32 %v3516, 7
  %v3518 = vsub.s32 %v3515, %v3517
  %v3519 = vrot.slane %v3505, %v3518
  %v3520 = vcombine.low %v1405, %v1427
  %v3521 = vcombine.high %v1405, %v1427
  %v3523 = vunpack.c.l.s4 1983009808
  %v3524 = vunpack.c.0.s8 %v3523
  %v3525 = vlaneseq
  %v3526 = vshrl.u32 %v3525, 7
  %v3527 = vsub.s32 %v3524, %v3526
  %v3528 = vrot.slane %v3520, %v3527
  %v3530 = vunpack.c.l.s4 1983009808
  %v3531 = vunpack.c.0.s8 %v3530
  %v3532 = vlaneseq
  %v3533 = vshrl.u32 %v3532, 7
  %v3534 = vsub.s32 %v3531, %v3533
  %v3535 = vrot.slane %v3521, %v3534
  %v3536 = vcombine.low %v3480, %v3496
  %v3537 = vcombine.high %v3480, %v3496
  %v3539 = vunpack.c.l.s4 1934713408
  %v3540 = vunpack.c.0.s8 %v3539
  %v3541 = vlaneseq
  %v3542 = vshrl.u32 %v3541, 7
  %v3543 = vsub.s32 %v3540, %v3542
  %v3544 = vrot.slane %v3536, %v3543
  %v3546 = vunpack.c.l.s4 1934713408
  %v3547 = vunpack.c.0.s8 %v3546
  %v3548 = vlaneseq
  %v3549 = vshrl.u32 %v3548, 7
  %v3550 = vsub.s32 %v3547, %v3549
  %v3551 = vrot.slane %v3537, %v3550
  %v3552 = vcombine.low %v3487, %v3503
  %v3553 = vcombine.high %v3487, %v3503
  %v3555 = vunpack.c.l.s4 1934713408
  %v3556 = vunpack.c.0.s8 %v3555
  %v3557 = vlaneseq
  %v3558 = vshrl.u32 %v3557, 7
  %v3559 = vsub.s32 %v3556, %v3558
  %v3560 = vrot.slane %v3552, %v3559
  %v3562 = vunpack.c.l.s4 1934713408
  %v3563 = vunpack.c.0.s8 %v3562
  %v3564 = vlaneseq
  %v3565 = vshrl.u32 %v3564, 7
  %v3566 = vsub.s32 %v3563, %v3565
  %v3567 = vrot.slane %v3553, %v3566
  %v3568 = vcombine.low %v3512, %v3528
  %v3569 = vcombine.high %v3512, %v3528
  %v3571 = vunpack.c.l.s4 1934713408
  %v3572 = vunpack.c.0.s8 %v3571
  %v3573 = vlaneseq
  %v3574 = vshrl.u32 %v3573, 7
  %v3575 = vsub.s32 %v3572, %v3574
  %v3576 = vrot.slane %v3568, %v3575
  %v3578 = vunpack.c.l.s4 1934713408
  %v3579 = vunpack.c.0.s8 %v3578
  %v3580 = vlaneseq
  %v3581 = vshrl.u32 %v3580, 7
  %v3582 = vsub.s32 %v3579, %v3581
  %v3583 = vrot.slane %v3569, %v3582
  %v3584 = vcombine.low %v3519, %v3535
  %v3585 = vcombine.high %v3519, %v3535
  %v3587 = vunpack.c.l.s4 1934713408
  %v3588 = vunpack.c.0.s8 %v3587
  %v3589 = vlaneseq
  %v3590 = vshrl.u32 %v3589, 7
  %v3591 = vsub.s32 %v3588, %v3590
  %v3592 = vrot.slane %v3584, %v3591
  %v3594 = vunpack.c.l.s4 1934713408
  %v3595 = vunpack.c.0.s8 %v3594
  %v3596 = vlaneseq
  %v3597 = vshrl.u32 %v3596, 7
  %v3598 = vsub.s32 %v3595, %v3597
  %v3599 = vrot.slane %v3585, %v3598
  %v3600 = vcombine.low %v3544, %v3576
  %v3601 = vcombine.high %v3544, %v3576
  %v3602 = vcombine.low %v3551, %v3583
  %v3603 = vcombine.high %v3551, %v3583
  %v3604 = vcombine.low %v3560, %v3592
  %v3605 = vcombine.high %v3560, %v3592
  %v3606 = vcombine.low %v3567, %v3599
  %v3607 = vcombine.high %v3567, %v3599
  %v3608 = vcombine.low %v34, %v56
  %v3609 = vcombine.high %v34, %v56
  %v3611 = vunpack.c.l.s4 1983009808
  %v3612 = vunpack.c.0.s8 %v3611
  %v3613 = vlaneseq
  %v3614 = vshrl.u32 %v3613, 7
  %v3615 = vsub.s32 %v3612, %v3614
  %v3616 = vrot.slane %v3608, %v3615
  %v3618 = vunpack.c.l.s4 1983009808
  %v3619 = vunpack.c.0.s8 %v3618
  %v3620 = vlaneseq
  %v3621 = vshrl.u32 %v3620, 7
  %v3622 = vsub.s32 %v3619, %v3621
  %v3623 = vrot.slane %v3609, %v3622
  %v3624 = vcombine.low %v45, %v67
  %v3625 = vcombine.high %v45, %v67
  %v3627 = vunpack.c.l.s4 1983009808
  %v3628 = vunpack.c.0.s8 %v3627
  %v3629 = vlaneseq
  %v3630 = vshrl.u32 %v3629, 7
  %v3631 = vsub.s32 %v3628, %v3630
  %v3632 = vrot.slane %v3624, %v3631
  %v3634 = vunpack.c.l.s4 1983009808
  %v3635 = vunpack.c.0.s8 %v3634
  %v3636 = vlaneseq
  %v3637 = vshrl.u32 %v3636, 7
  %v3638 = vsub.s32 %v3635, %v3637
  %v3639 = vrot.slane %v3625, %v3638
  %v3640 = vcombine.low %v78, %v100
  %v3641 = vcombine.high %v78, %v100
  %v3643 = vunpack.c.l.s4 1983009808
  %v3644 = vunpack.c.0.s8 %v3643
  %v3645 = vlaneseq
  %v3646 = vshrl.u32 %v3645, 7
  %v3647 = vsub.s32 %v3644, %v3646
  %v3648 = vrot.slane %v3640, %v3647
  %v3650 = vunpack.c.l.s4 1983009808
  %v3651 = vunpack.c.0.s8 %v3650
  %v3652 = vlaneseq
  %v3653 = vshrl.u32 %v3652, 7
  %v3654 = vsub.s32 %v3651, %v3653
  %v3655 = vrot.slane %v3641, %v3654
  %v3656 = vcombine.low %v89, %v111
  %v3657 = vcombine.high %v89, %v111
  %v3659 = vunpack.c.l.s4 1983009808
  %v3660 = vunpack.c.0.s8 %v3659
  %v3661 = vlaneseq
  %v3662 = vshrl.u32 %v3661, 7
  %v3663 = vsub.s32 %v3660, %v3662
  %v3664 = vrot.slane %v3656, %v3663
  %v3666 = vunpack.c.l.s4 1983009808
  %v3667 = vunpack.c.0.s8 %v3666
  %v3668 = vlaneseq
  %v3669 = vshrl.u32 %v3668, 7
  %v3670 = vsub.s32 %v3667, %v3669
  %v3671 = vrot.slane %v3657, %v3670
  %v3672 = vcombine.low %v3616, %v3632
  %v3673 = vcombine.high %v3616, %v3632
  %v3675 = vunpack.c.l.s4 1934713408
  %v3676 = vunpack.c.0.s8 %v3675
  %v3677 = vlaneseq
  %v3678 = vshrl.u32 %v3677, 7
  %v3679 = vsub.s32 %v3676, %v3678
  %v3680 = vrot.slane %v3672, %v3679
  %v3682 = vunpack.c.l.s4 1934713408
  %v3683 = vunpack.c.0.s8 %v3682
  %v3684 = vlaneseq
  %v3685 = vshrl.u32 %v3684, 7
  %v3686 = vsub.s32 %v3683, %v3685
  %v3687 = vrot.slane %v3673, %v3686
  %v3688 = vcombine.low %v3623, %v3639
  %v3689 = vcombine.high %v3623, %v3639
  %v3691 = vunpack.c.l.s4 1934713408
  %v3692 = vunpack.c.0.s8 %v3691
  %v3693 = vlaneseq
  %v3694 = vshrl.u32 %v3693, 7
  %v3695 = vsub.s32 %v3692, %v3694
  %v3696 = vrot.slane %v3688, %v3695
  %v3698 = vunpack.c.l.s4 1934713408
  %v3699 = vunpack.c.0.s8 %v3698
  %v3700 = vlaneseq
  %v3701 = vshrl.u32 %v3700, 7
  %v3702 = vsub.s32 %v3699, %v3701
  %v3703 = vrot.slane %v3689, %v3702
  %v3704 = vcombine.low %v3648, %v3664
  %v3705 = vcombine.high %v3648, %v3664
  %v3707 = vunpack.c.l.s4 1934713408
  %v3708 = vunpack.c.0.s8 %v3707
  %v3709 = vlaneseq
  %v3710 = vshrl.u32 %v3709, 7
  %v3711 = vsub.s32 %v3708, %v3710
  %v3712 = vrot.slane %v3704, %v3711
  %v3714 = vunpack.c.l.s4 1934713408
  %v3715 = vunpack.c.0.s8 %v3714
  %v3716 = vlaneseq
  %v3717 = vshrl.u32 %v3716, 7
  %v3718 = vsub.s32 %v3715, %v3717
  %v3719 = vrot.slane %v3705, %v3718
  %v3720 = vcombine.low %v3655, %v3671
  %v3721 = vcombine.high %v3655, %v3671
  %v3723 = vunpack.c.l.s4 1934713408
  %v3724 = vunpack.c.0.s8 %v3723
  %v3725 = vlaneseq
  %v3726 = vshrl.u32 %v3725, 7
  %v3727 = vsub.s32 %v3724, %v3726
  %v3728 = vrot.slane %v3720, %v3727
  %v3730 = vunpack.c.l.s4 1934713408
  %v3731 = vunpack.c.0.s8 %v3730
  %v3732 = vlaneseq
  %v3733 = vshrl.u32 %v3732, 7
  %v3734 = vsub.s32 %v3731, %v3733
  %v3735 = vrot.slane %v3721, %v3734
  %v3736 = vcombine.low %v3680, %v3712
  %v3737 = vcombine.high %v3680, %v3712
  %v3738 = vcombine.low %v3687, %v3719
  %v3739 = vcombine.high %v3687, %v3719
  %v3740 = vcombine.low %v3696, %v3728
  %v3741 = vcombine.high %v3696, %v3728
  %v3742 = vcombine.low %v3703, %v3735
  %v3743 = vcombine.high %v3703, %v3735
  %v3744 = vcombine.low %v122, %v144
  %v3745 = vcombine.high %v122, %v144
  %v3747 = vunpack.c.l.s4 1983009808
  %v3748 = vunpack.c.0.s8 %v3747
  %v3749 = vlaneseq
  %v3750 = vshrl.u32 %v3749, 7
  %v3751 = vsub.s32 %v3748, %v3750
  %v3752 = vrot.slane %v3744, %v3751
  %v3754 = vunpack.c.l.s4 1983009808
  %v3755 = vunpack.c.0.s8 %v3754
  %v3756 = vlaneseq
  %v3757 = vshrl.u32 %v3756, 7
  %v3758 = vsub.s32 %v3755, %v3757
  %v3759 = vrot.slane %v3745, %v3758
  %v3760 = vcombine.low %v133, %v155
  %v3761 = vcombine.high %v133, %v155
  %v3763 = vunpack.c.l.s4 1983009808
  %v3764 = vunpack.c.0.s8 %v3763
  %v3765 = vlaneseq
  %v3766 = vshrl.u32 %v3765, 7
  %v3767 = vsub.s32 %v3764, %v3766
  %v3768 = vrot.slane %v3760, %v3767
  %v3770 = vunpack.c.l.s4 1983009808
  %v3771 = vunpack.c.0.s8 %v3770
  %v3772 = vlaneseq
  %v3773 = vshrl.u32 %v3772, 7
  %v3774 = vsub.s32 %v3771, %v3773
  %v3775 = vrot.slane %v3761, %v3774
  %v3776 = vcombine.low %v166, %v188
  %v3777 = vcombine.high %v166, %v188
  %v3779 = vunpack.c.l.s4 1983009808
  %v3780 = vunpack.c.0.s8 %v3779
  %v3781 = vlaneseq
  %v3782 = vshrl.u32 %v3781, 7
  %v3783 = vsub.s32 %v3780, %v3782
  %v3784 = vrot.slane %v3776, %v3783
  %v3786 = vunpack.c.l.s4 1983009808
  %v3787 = vunpack.c.0.s8 %v3786
  %v3788 = vlaneseq
  %v3789 = vshrl.u32 %v3788, 7
  %v3790 = vsub.s32 %v3787, %v3789
  %v3791 = vrot.slane %v3777, %v3790
  %v3792 = vcombine.low %v177, %v199
  %v3793 = vcombine.high %v177, %v199
  %v3795 = vunpack.c.l.s4 1983009808
  %v3796 = vunpack.c.0.s8 %v3795
  %v3797 = vlaneseq
  %v3798 = vshrl.u32 %v3797, 7
  %v3799 = vsub.s32 %v3796, %v3798
  %v3800 = vrot.slane %v3792, %v3799
  %v3802 = vunpack.c.l.s4 1983009808
  %v3803 = vunpack.c.0.s8 %v3802
  %v3804 = vlaneseq
  %v3805 = vshrl.u32 %v3804, 7
  %v3806 = vsub.s32 %v3803, %v3805
  %v3807 = vrot.slane %v3793, %v3806
  %v3808 = vcombine.low %v3752, %v3768
  %v3809 = vcombine.high %v3752, %v3768
  %v3811 = vunpack.c.l.s4 1934713408
  %v3812 = vunpack.c.0.s8 %v3811
  %v3813 = vlaneseq
  %v3814 = vshrl.u32 %v3813, 7
  %v3815 = vsub.s32 %v3812, %v3814
  %v3816 = vrot.slane %v3808, %v3815
  %v3818 = vunpack.c.l.s4 1934713408
  %v3819 = vunpack.c.0.s8 %v3818
  %v3820 = vlaneseq
  %v3821 = vshrl.u32 %v3820, 7
  %v3822 = vsub.s32 %v3819, %v3821
  %v3823 = vrot.slane %v3809, %v3822
  %v3824 = vcombine.low %v3759, %v3775
  %v3825 = vcombine.high %v3759, %v3775
  %v3827 = vunpack.c.l.s4 1934713408
  %v3828 = vunpack.c.0.s8 %v3827
  %v3829 = vlaneseq
  %v3830 = vshrl.u32 %v3829, 7
  %v3831 = vsub.s32 %v3828, %v3830
  %v3832 = vrot.slane %v3824, %v3831
  %v3834 = vunpack.c.l.s4 1934713408
  %v3835 = vunpack.c.0.s8 %v3834
  %v3836 = vlaneseq
  %v3837 = vshrl.u32 %v3836, 7
  %v3838 = vsub.s32 %v3835, %v3837
  %v3839 = vrot.slane %v3825, %v3838
  %v3840 = vcombine.low %v3784, %v3800
  %v3841 = vcombine.high %v3784, %v3800
  %v3843 = vunpack.c.l.s4 1934713408
  %v3844 = vunpack.c.0.s8 %v3843
  %v3845 = vlaneseq
  %v3846 = vshrl.u32 %v3845, 7
  %v3847 = vsub.s32 %v3844, %v3846
  %v3848 = vrot.slane %v3840, %v3847
  %v3850 = vunpack.c.l.s4 1934713408
  %v3851 = vunpack.c.0.s8 %v3850
  %v3852 = vlaneseq
  %v3853 = vshrl.u32 %v3852, 7
  %v3854 = vsub.s32 %v3851, %v3853
  %v3855 = vrot.slane %v3841, %v3854
  %v3856 = vcombine.low %v3791, %v3807
  %v3857 = vcombine.high %v3791, %v3807
  %v3859 = vunpack.c.l.s4 1934713408
  %v3860 = vunpack.c.0.s8 %v3859
  %v3861 = vlaneseq
  %v3862 = vshrl.u32 %v3861, 7
  %v3863 = vsub.s32 %v3860, %v3862
  %v3864 = vrot.slane %v3856, %v3863
  %v3866 = vunpack.c.l.s4 1934713408
  %v3867 = vunpack.c.0.s8 %v3866
  %v3868 = vlaneseq
  %v3869 = vshrl.u32 %v3868, 7
  %v3870 = vsub.s32 %v3867, %v3869
  %v3871 = vrot.slane %v3857, %v3870
  %v3872 = vcombine.low %v3816, %v3848
  %v3873 = vcombine.high %v3816, %v3848
  %v3874 = vcombine.low %v3823, %v3855
  %v3875 = vcombine.high %v3823, %v3855
  %v3876 = vcombine.low %v3832, %v3864
  %v3877 = vcombine.high %v3832, %v3864
  %v3878 = vcombine.low %v3839, %v3871
  %v3879 = vcombine.high %v3839, %v3871
  %v3880 = vcombine.low %v210, %v232
  %v3881 = vcombine.high %v210, %v232
  %v3883 = vunpack.c.l.s4 1983009808
  %v3884 = vunpack.c.0.s8 %v3883
  %v3885 = vlaneseq
  %v3886 = vshrl.u32 %v3885, 7
  %v3887 = vsub.s32 %v3884, %v3886
  %v3888 = vrot.slane %v3880, %v3887
  %v3890 = vunpack.c.l.s4 1983009808
  %v3891 = vunpack.c.0.s8 %v3890
  %v3892 = vlaneseq
  %v3893 = vshrl.u32 %v3892, 7
  %v3894 = vsub.s32 %v3891, %v3893
  %v3895 = vrot.slane %v3881, %v3894
  %v3896 = vcombine.low %v221, %v243
  %v3897 = vcombine.high %v221, %v243
  %v3899 = vunpack.c.l.s4 1983009808
  %v3900 = vunpack.c.0.s8 %v3899
  %v3901 = vlaneseq
  %v3902 = vshrl.u32 %v3901, 7
  %v3903 = vsub.s32 %v3900, %v3902
  %v3904 = vrot.slane %v3896, %v3903
  %v3906 = vunpack.c.l.s4 1983009808
  %v3907 = vunpack.c.0.s8 %v3906
  %v3908 = vlaneseq
  %v3909 = vshrl.u32 %v3908, 7
  %v3910 = vsub.s32 %v3907, %v3909
  %v3911 = vrot.slane %v3897, %v3910
  %v3912 = vcombine.low %v254, %v276
  %v3913 = vcombine.high %v254, %v276
  %v3915 = vunpack.c.l.s4 1983009808
  %v3916 = vunpack.c.0.s8 %v3915
  %v3917 = vlaneseq
  %v3918 = vshrl.u32 %v3917, 7
  %v3919 = vsub.s32 %v3916, %v3918
  %v3920 = vrot.slane %v3912, %v3919
  %v3922 = vunpack.c.l.s4 1983009808
  %v3923 = vunpack.c.0.s8 %v3922
  %v3924 = vlaneseq
  %v3925 = vshrl.u32 %v3924, 7
  %v3926 = vsub.s32 %v3923, %v3925
  %v3927 = vrot.slane %v3913, %v3926
  %v3928 = vcombine.low %v265, %v287
  %v3929 = vcombine.high %v265, %v287
  %v3931 = vunpack.c.l.s4 1983009808
  %v3932 = vunpack.c.0.s8 %v3931
  %v3933 = vlaneseq
  %v3934 = vshrl.u32 %v3933, 7
  %v3935 = vsub.s32 %v3932, %v3934
  %v3936 = vrot.slane %v3928, %v3935
  %v3938 = vunpack.c.l.s4 1983009808
  %v3939 = vunpack.c.0.s8 %v3938
  %v3940 = vlaneseq
  %v3941 = vshrl.u32 %v3940, 7
  %v3942 = vsub.s32 %v3939, %v3941
  %v3943 = vrot.slane %v3929, %v3942
  %v3944 = vcombine.low %v3888, %v3904
  %v3945 = vcombine.high %v3888, %v3904
  %v3947 = vunpack.c.l.s4 1934713408
  %v3948 = vunpack.c.0.s8 %v3947
  %v3949 = vlaneseq
  %v3950 = vshrl.u32 %v3949, 7
  %v3951 = vsub.s32 %v3948, %v3950
  %v3952 = vrot.slane %v3944, %v3951
  %v3954 = vunpack.c.l.s4 1934713408
  %v3955 = vunpack.c.0.s8 %v3954
  %v3956 = vlaneseq
  %v3957 = vshrl.u32 %v3956, 7
  %v3958 = vsub.s32 %v3955, %v3957
  %v3959 = vrot.slane %v3945, %v3958
  %v3960 = vcombine.low %v3895, %v3911
  %v3961 = vcombine.high %v3895, %v3911
  %v3963 = vunpack.c.l.s4 1934713408
  %v3964 = vunpack.c.0.s8 %v3963
  %v3965 = vlaneseq
  %v3966 = vshrl.u32 %v3965, 7
  %v3967 = vsub.s32 %v3964, %v3966
  %v3968 = vrot.slane %v3960, %v3967
  %v3970 = vunpack.c.l.s4 1934713408
  %v3971 = vunpack.c.0.s8 %v3970
  %v3972 = vlaneseq
  %v3973 = vshrl.u32 %v3972, 7
  %v3974 = vsub.s32 %v3971, %v3973
  %v3975 = vrot.slane %v3961, %v3974
  %v3976 = vcombine.low %v3920, %v3936
  %v3977 = vcombine.high %v3920, %v3936
  %v3979 = vunpack.c.l.s4 1934713408
  %v3980 = vunpack.c.0.s8 %v3979
  %v3981 = vlaneseq
  %v3982 = vshrl.u32 %v3981, 7
  %v3983 = vsub.s32 %v3980, %v3982
  %v3984 = vrot.slane %v3976, %v3983
  %v3986 = vunpack.c.l.s4 1934713408
  %v3987 = vunpack.c.0.s8 %v3986
  %v3988 = vlaneseq
  %v3989 = vshrl.u32 %v3988, 7
  %v3990 = vsub.s32 %v3987, %v3989
  %v3991 = vrot.slane %v3977, %v3990
  %v3992 = vcombine.low %v3927, %v3943
  %v3993 = vcombine.high %v3927, %v3943
  %v3995 = vunpack.c.l.s4 1934713408
  %v3996 = vunpack.c.0.s8 %v3995
  %v3997 = vlaneseq
  %v3998 = vshrl.u32 %v3997, 7
  %v3999 = vsub.s32 %v3996, %v3998
  %v4000 = vrot.slane %v3992, %v3999
  %v4002 = vunpack.c.l.s4 1934713408
  %v4003 = vunpack.c.0.s8 %v4002
  %v4004 = vlaneseq
  %v4005 = vshrl.u32 %v4004, 7
  %v4006 = vsub.s32 %v4003, %v4005
  %v4007 = vrot.slane %v3993, %v4006
  %v4008 = vcombine.low %v3952, %v3984
  %v4009 = vcombine.high %v3952, %v3984
  %v4010 = vcombine.low %v3959, %v3991
  %v4011 = vcombine.high %v3959, %v3991
  %v4012 = vcombine.low %v3968, %v4000
  %v4013 = vcombine.high %v3968, %v4000
  %v4014 = vcombine.low %v3975, %v4007
  %v4015 = vcombine.high %v3975, %v4007
  %v4016 = vcombine.low %v298, %v320
  %v4017 = vcombine.high %v298, %v320
  %v4019 = vunpack.c.l.s4 1983009808
  %v4020 = vunpack.c.0.s8 %v4019
  %v4021 = vlaneseq
  %v4022 = vshrl.u32 %v4021, 7
  %v4023 = vsub.s32 %v4020, %v4022
  %v4024 = vrot.slane %v4016, %v4023
  %v4026 = vunpack.c.l.s4 1983009808
  %v4027 = vunpack.c.0.s8 %v4026
  %v4028 = vlaneseq
  %v4029 = vshrl.u32 %v4028, 7
  %v4030 = vsub.s32 %v4027, %v4029
  %v4031 = vrot.slane %v4017, %v4030
  %v4032 = vcombine.low %v309, %v331
  %v4033 = vcombine.high %v309, %v331
  %v4035 = vunpack.c.l.s4 1983009808
  %v4036 = vunpack.c.0.s8 %v4035
  %v4037 = vlaneseq
  %v4038 = vshrl.u32 %v4037, 7
  %v4039 = vsub.s32 %v4036, %v4038
  %v4040 = vrot.slane %v4032, %v4039
  %v4042 = vunpack.c.l.s4 1983009808
  %v4043 = vunpack.c.0.s8 %v4042
  %v4044 = vlaneseq
  %v4045 = vshrl.u32 %v4044, 7
  %v4046 = vsub.s32 %v4043, %v4045
  %v4047 = vrot.slane %v4033, %v4046
  %v4048 = vcombine.low %v342, %v364
  %v4049 = vcombine.high %v342, %v364
  %v4051 = vunpack.c.l.s4 1983009808
  %v4052 = vunpack.c.0.s8 %v4051
  %v4053 = vlaneseq
  %v4054 = vshrl.u32 %v4053, 7
  %v4055 = vsub.s32 %v4052, %v4054
  %v4056 = vrot.slane %v4048, %v4055
  %v4058 = vunpack.c.l.s4 1983009808
  %v4059 = vunpack.c.0.s8 %v4058
  %v4060 = vlaneseq
  %v4061 = vshrl.u32 %v4060, 7
  %v4062 = vsub.s32 %v4059, %v4061
  %v4063 = vrot.slane %v4049, %v4062
  %v4064 = vcombine.low %v353, %v375
  %v4065 = vcombine.high %v353, %v375
  %v4067 = vunpack.c.l.s4 1983009808
  %v4068 = vunpack.c.0.s8 %v4067
  %v4069 = vlaneseq
  %v4070 = vshrl.u32 %v4069, 7
  %v4071 = vsub.s32 %v4068, %v4070
  %v4072 = vrot.slane %v4064, %v4071
  %v4074 = vunpack.c.l.s4 1983009808
  %v4075 = vunpack.c.0.s8 %v4074
  %v4076 = vlaneseq
  %v4077 = vshrl.u32 %v4076, 7
  %v4078 = vsub.s32 %v4075, %v4077
  %v4079 = vrot.slane %v4065, %v4078
  %v4080 = vcombine.low %v4024, %v4040
  %v4081 = vcombine.high %v4024, %v4040
  %v4083 = vunpack.c.l.s4 1934713408
  %v4084 = vunpack.c.0.s8 %v4083
  %v4085 = vlaneseq
  %v4086 = vshrl.u32 %v4085, 7
  %v4087 = vsub.s32 %v4084, %v4086
  %v4088 = vrot.slane %v4080, %v4087
  %v4090 = vunpack.c.l.s4 1934713408
  %v4091 = vunpack.c.0.s8 %v4090
  %v4092 = vlaneseq
  %v4093 = vshrl.u32 %v4092, 7
  %v4094 = vsub.s32 %v4091, %v4093
  %v4095 = vrot.slane %v4081, %v4094
  %v4096 = vcombine.low %v4031, %v4047
  %v4097 = vcombine.high %v4031, %v4047
  %v4099 = vunpack.c.l.s4 1934713408
  %v4100 = vunpack.c.0.s8 %v4099
  %v4101 = vlaneseq
  %v4102 = vshrl.u32 %v4101, 7
  %v4103 = vsub.s32 %v4100, %v4102
  %v4104 = vrot.slane %v4096, %v4103
  %v4106 = vunpack.c.l.s4 1934713408
  %v4107 = vunpack.c.0.s8 %v4106
  %v4108 = vlaneseq
  %v4109 = vshrl.u32 %v4108, 7
  %v4110 = vsub.s32 %v4107, %v4109
  %v4111 = vrot.slane %v4097, %v4110
  %v4112 = vcombine.low %v4056, %v4072
  %v4113 = vcombine.high %v4056, %v4072
  %v4115 = vunpack.c.l.s4 1934713408
  %v4116 = vunpack.c.0.s8 %v4115
  %v4117 = vlaneseq
  %v4118 = vshrl.u32 %v4117, 7
  %v4119 = vsub.s32 %v4116, %v4118
  %v4120 = vrot.slane %v4112, %v4119
  %v4122 = vunpack.c.l.s4 1934713408
  %v4123 = vunpack.c.0.s8 %v4122
  %v4124 = vlaneseq
  %v4125 = vshrl.u32 %v4124, 7
  %v4126 = vsub.s32 %v4123, %v4125
  %v4127 = vrot.slane %v4113, %v4126
  %v4128 = vcombine.low %v4063, %v4079
  %v4129 = vcombine.high %v4063, %v4079
  %v4131 = vunpack.c.l.s4 1934713408
  %v4132 = vunpack.c.0.s8 %v4131
  %v4133 = vlaneseq
  %v4134 = vshrl.u32 %v4133, 7
  %v4135 = vsub.s32 %v4132, %v4134
  %v4136 = vrot.slane %v4128, %v4135
  %v4138 = vunpack.c.l.s4 1934713408
  %v4139 = vunpack.c.0.s8 %v4138
  %v4140 = vlaneseq
  %v4141 = vshrl.u32 %v4140, 7
  %v4142 = vsub.s32 %v4139, %v4141
  %v4143 = vrot.slane %v4129, %v4142
  %v4144 = vcombine.low %v4088, %v4120
  %v4145 = vcombine.high %v4088, %v4120
  %v4146 = vcombine.low %v4095, %v4127
  %v4147 = vcombine.high %v4095, %v4127
  %v4148 = vcombine.low %v4104, %v4136
  %v4149 = vcombine.high %v4104, %v4136
  %v4150 = vcombine.low %v4111, %v4143
  %v4151 = vcombine.high %v4111, %v4143
  %v4152 = vcombine.low %v386, %v408
  %v4153 = vcombine.high %v386, %v408
  %v4155 = vunpack.c.l.s4 1983009808
  %v4156 = vunpack.c.0.s8 %v4155
  %v4157 = vlaneseq
  %v4158 = vshrl.u32 %v4157, 7
  %v4159 = vsub.s32 %v4156, %v4158
  %v4160 = vrot.slane %v4152, %v4159
  %v4162 = vunpack.c.l.s4 1983009808
  %v4163 = vunpack.c.0.s8 %v4162
  %v4164 = vlaneseq
  %v4165 = vshrl.u32 %v4164, 7
  %v4166 = vsub.s32 %v4163, %v4165
  %v4167 = vrot.slane %v4153, %v4166
  %v4168 = vcombine.low %v397, %v419
  %v4169 = vcombine.high %v397, %v419
  %v4171 = vunpack.c.l.s4 1983009808
  %v4172 = vunpack.c.0.s8 %v4171
  %v4173 = vlaneseq
  %v4174 = vshrl.u32 %v4173, 7
  %v4175 = vsub.s32 %v4172, %v4174
  %v4176 = vrot.slane %v4168, %v4175
  %v4178 = vunpack.c.l.s4 1983009808
  %v4179 = vunpack.c.0.s8 %v4178
  %v4180 = vlaneseq
  %v4181 = vshrl.u32 %v4180, 7
  %v4182 = vsub.s32 %v4179, %v4181
  %v4183 = vrot.slane %v4169, %v4182
  %v4184 = vcombine.low %v430, %v452
  %v4185 = vcombine.high %v430, %v452
  %v4187 = vunpack.c.l.s4 1983009808
  %v4188 = vunpack.c.0.s8 %v4187
  %v4189 = vlaneseq
  %v4190 = vshrl.u32 %v4189, 7
  %v4191 = vsub.s32 %v4188, %v4190
  %v4192 = vrot.slane %v4184, %v4191
  %v4194 = vunpack.c.l.s4 1983009808
  %v4195 = vunpack.c.0.s8 %v4194
  %v4196 = vlaneseq
  %v4197 = vshrl.u32 %v4196, 7
  %v4198 = vsub.s32 %v4195, %v4197
  %v4199 = vrot.slane %v4185, %v4198
  %v4200 = vcombine.low %v441, %v463
  %v4201 = vcombine.high %v441, %v463
  %v4203 = vunpack.c.l.s4 1983009808
  %v4204 = vunpack.c.0.s8 %v4203
  %v4205 = vlaneseq
  %v4206 = vshrl.u32 %v4205, 7
  %v4207 = vsub.s32 %v4204, %v4206
  %v4208 = vrot.slane %v4200, %v4207
  %v4210 = vunpack.c.l.s4 1983009808
  %v4211 = vunpack.c.0.s8 %v4210
  %v4212 = vlaneseq
  %v4213 = vshrl.u32 %v4212, 7
  %v4214 = vsub.s32 %v4211, %v4213
  %v4215 = vrot.slane %v4201, %v4214
  %v4216 = vcombine.low %v4160, %v4176
  %v4217 = vcombine.high %v4160, %v4176
  %v4219 = vunpack.c.l.s4 1934713408
  %v4220 = vunpack.c.0.s8 %v4219
  %v4221 = vlaneseq
  %v4222 = vshrl.u32 %v4221, 7
  %v4223 = vsub.s32 %v4220, %v4222
  %v4224 = vrot.slane %v4216, %v4223
  %v4226 = vunpack.c.l.s4 1934713408
  %v4227 = vunpack.c.0.s8 %v4226
  %v4228 = vlaneseq
  %v4229 = vshrl.u32 %v4228, 7
  %v4230 = vsub.s32 %v4227, %v4229
  %v4231 = vrot.slane %v4217, %v4230
  %v4232 = vcombine.low %v4167, %v4183
  %v4233 = vcombine.high %v4167, %v4183
  %v4235 = vunpack.c.l.s4 1934713408
  %v4236 = vunpack.c.0.s8 %v4235
  %v4237 = vlaneseq
  %v4238 = vshrl.u32 %v4237, 7
  %v4239 = vsub.s32 %v4236, %v4238
  %v4240 = vrot.slane %v4232, %v4239
  %v4242 = vunpack.c.l.s4 1934713408
  %v4243 = vunpack.c.0.s8 %v4242
  %v4244 = vlaneseq
  %v4245 = vshrl.u32 %v4244, 7
  %v4246 = vsub.s32 %v4243, %v4245
  %v4247 = vrot.slane %v4233, %v4246
  %v4248 = vcombine.low %v4192, %v4208
  %v4249 = vcombine.high %v4192, %v4208
  %v4251 = vunpack.c.l.s4 1934713408
  %v4252 = vunpack.c.0.s8 %v4251
  %v4253 = vlaneseq
  %v4254 = vshrl.u32 %v4253, 7
  %v4255 = vsub.s32 %v4252, %v4254
  %v4256 = vrot.slane %v4248, %v4255
  %v4258 = vunpack.c.l.s4 1934713408
  %v4259 = vunpack.c.0.s8 %v4258
  %v4260 = vlaneseq
  %v4261 = vshrl.u32 %v4260, 7
  %v4262 = vsub.s32 %v4259, %v4261
  %v4263 = vrot.slane %v4249, %v4262
  %v4264 = vcombine.low %v4199, %v4215
  %v4265 = vcombine.high %v4199, %v4215
  %v4267 = vunpack.c.l.s4 1934713408
  %v4268 = vunpack.c.0.s8 %v4267
  %v4269 = vlaneseq
  %v4270 = vshrl.u32 %v4269, 7
  %v4271 = vsub.s32 %v4268, %v4270
  %v4272 = vrot.slane %v4264, %v4271
  %v4274 = vunpack.c.l.s4 1934713408
  %v4275 = vunpack.c.0.s8 %v4274
  %v4276 = vlaneseq
  %v4277 = vshrl.u32 %v4276, 7
  %v4278 = vsub.s32 %v4275, %v4277
  %v4279 = vrot.slane %v4265, %v4278
  %v4280 = vcombine.low %v4224, %v4256
  %v4281 = vcombine.high %v4224, %v4256
  %v4282 = vcombine.low %v4231, %v4263
  %v4283 = vcombine.high %v4231, %v4263
  %v4284 = vcombine.low %v4240, %v4272
  %v4285 = vcombine.high %v4240, %v4272
  %v4286 = vcombine.low %v4247, %v4279
  %v4287 = vcombine.high %v4247, %v4279
  %v4288 = vcombine.low %v474, %v496
  %v4289 = vcombine.high %v474, %v496
  %v4291 = vunpack.c.l.s4 1983009808
  %v4292 = vunpack.c.0.s8 %v4291
  %v4293 = vlaneseq
  %v4294 = vshrl.u32 %v4293, 7
  %v4295 = vsub.s32 %v4292, %v4294
  %v4296 = vrot.slane %v4288, %v4295
  %v4298 = vunpack.c.l.s4 1983009808
  %v4299 = vunpack.c.0.s8 %v4298
  %v4300 = vlaneseq
  %v4301 = vshrl.u32 %v4300, 7
  %v4302 = vsub.s32 %v4299, %v4301
  %v4303 = vrot.slane %v4289, %v4302
  %v4304 = vcombine.low %v485, %v507
  %v4305 = vcombine.high %v485, %v507
  %v4307 = vunpack.c.l.s4 1983009808
  %v4308 = vunpack.c.0.s8 %v4307
  %v4309 = vlaneseq
  %v4310 = vshrl.u32 %v4309, 7
  %v4311 = vsub.s32 %v4308, %v4310
  %v4312 = vrot.slane %v4304, %v4311
  %v4314 = vunpack.c.l.s4 1983009808
  %v4315 = vunpack.c.0.s8 %v4314
  %v4316 = vlaneseq
  %v4317 = vshrl.u32 %v4316, 7
  %v4318 = vsub.s32 %v4315, %v4317
  %v4319 = vrot.slane %v4305, %v4318
  %v4320 = vcombine.low %v518, %v540
  %v4321 = vcombine.high %v518, %v540
  %v4323 = vunpack.c.l.s4 1983009808
  %v4324 = vunpack.c.0.s8 %v4323
  %v4325 = vlaneseq
  %v4326 = vshrl.u32 %v4325, 7
  %v4327 = vsub.s32 %v4324, %v4326
  %v4328 = vrot.slane %v4320, %v4327
  %v4330 = vunpack.c.l.s4 1983009808
  %v4331 = vunpack.c.0.s8 %v4330
  %v4332 = vlaneseq
  %v4333 = vshrl.u32 %v4332, 7
  %v4334 = vsub.s32 %v4331, %v4333
  %v4335 = vrot.slane %v4321, %v4334
  %v4336 = vcombine.low %v529, %v551
  %v4337 = vcombine.high %v529, %v551
  %v4339 = vunpack.c.l.s4 1983009808
  %v4340 = vunpack.c.0.s8 %v4339
  %v4341 = vlaneseq
  %v4342 = vshrl.u32 %v4341, 7
  %v4343 = vsub.s32 %v4340, %v4342
  %v4344 = vrot.slane %v4336, %v4343
  %v4346 = vunpack.c.l.s4 1983009808
  %v4347 = vunpack.c.0.s8 %v4346
  %v4348 = vlaneseq
  %v4349 = vshrl.u32 %v4348, 7
  %v4350 = vsub.s32 %v4347, %v4349
  %v4351 = vrot.slane %v4337, %v4350
  %v4352 = vcombine.low %v4296, %v4312
  %v4353 = vcombine.high %v4296, %v4312
  %v4355 = vunpack.c.l.s4 1934713408
  %v4356 = vunpack.c.0.s8 %v4355
  %v4357 = vlaneseq
  %v4358 = vshrl.u32 %v4357, 7
  %v4359 = vsub.s32 %v4356, %v4358
  %v4360 = vrot.slane %v4352, %v4359
  %v4362 = vunpack.c.l.s4 1934713408
  %v4363 = vunpack.c.0.s8 %v4362
  %v4364 = vlaneseq
  %v4365 = vshrl.u32 %v4364, 7
  %v4366 = vsub.s32 %v4363, %v4365
  %v4367 = vrot.slane %v4353, %v4366
  %v4368 = vcombine.low %v4303, %v4319
  %v4369 = vcombine.high %v4303, %v4319
  %v4371 = vunpack.c.l.s4 1934713408
  %v4372 = vunpack.c.0.s8 %v4371
  %v4373 = vlaneseq
  %v4374 = vshrl.u32 %v4373, 7
  %v4375 = vsub.s32 %v4372, %v4374
  %v4376 = vrot.slane %v4368, %v4375
  %v4378 = vunpack.c.l.s4 1934713408
  %v4379 = vunpack.c.0.s8 %v4378
  %v4380 = vlaneseq
  %v4381 = vshrl.u32 %v4380, 7
  %v4382 = vsub.s32 %v4379, %v4381
  %v4383 = vrot.slane %v4369, %v4382
  %v4384 = vcombine.low %v4328, %v4344
  %v4385 = vcombine.high %v4328, %v4344
  %v4387 = vunpack.c.l.s4 1934713408
  %v4388 = vunpack.c.0.s8 %v4387
  %v4389 = vlaneseq
  %v4390 = vshrl.u32 %v4389, 7
  %v4391 = vsub.s32 %v4388, %v4390
  %v4392 = vrot.slane %v4384, %v4391
  %v4394 = vunpack.c.l.s4 1934713408
  %v4395 = vunpack.c.0.s8 %v4394
  %v4396 = vlaneseq
  %v4397 = vshrl.u32 %v4396, 7
  %v4398 = vsub.s32 %v4395, %v4397
  %v4399 = vrot.slane %v4385, %v4398
  %v4400 = vcombine.low %v4335, %v4351
  %v4401 = vcombine.high %v4335, %v4351
  %v4403 = vunpack.c.l.s4 1934713408
  %v4404 = vunpack.c.0.s8 %v4403
  %v4405 = vlaneseq
  %v4406 = vshrl.u32 %v4405, 7
  %v4407 = vsub.s32 %v4404, %v4406
  %v4408 = vrot.slane %v4400, %v4407
  %v4410 = vunpack.c.l.s4 1934713408
  %v4411 = vunpack.c.0.s8 %v4410
  %v4412 = vlaneseq
  %v4413 = vshrl.u32 %v4412, 7
  %v4414 = vsub.s32 %v4411, %v4413
  %v4415 = vrot.slane %v4401, %v4414
  %v4416 = vcombine.low %v4360, %v4392
  %v4417 = vcombine.high %v4360, %v4392
  %v4418 = vcombine.low %v4367, %v4399
  %v4419 = vcombine.high %v4367, %v4399
  %v4420 = vcombine.low %v4376, %v4408
  %v4421 = vcombine.high %v4376, %v4408
  %v4422 = vcombine.low %v4383, %v4415
  %v4423 = vcombine.high %v4383, %v4415
  %v4424 = vcombine.low %v562, %v584
  %v4425 = vcombine.high %v562, %v584
  %v4427 = vunpack.c.l.s4 1983009808
  %v4428 = vunpack.c.0.s8 %v4427
  %v4429 = vlaneseq
  %v4430 = vshrl.u32 %v4429, 7
  %v4431 = vsub.s32 %v4428, %v4430
  %v4432 = vrot.slane %v4424, %v4431
  %v4434 = vunpack.c.l.s4 1983009808
  %v4435 = vunpack.c.0.s8 %v4434
  %v4436 = vlaneseq
  %v4437 = vshrl.u32 %v4436, 7
  %v4438 = vsub.s32 %v4435, %v4437
  %v4439 = vrot.slane %v4425, %v4438
  %v4440 = vcombine.low %v573, %v595
  %v4441 = vcombine.high %v573, %v595
  %v4443 = vunpack.c.l.s4 1983009808
  %v4444 = vunpack.c.0.s8 %v4443
  %v4445 = vlaneseq
  %v4446 = vshrl.u32 %v4445, 7
  %v4447 = vsub.s32 %v4444, %v4446
  %v4448 = vrot.slane %v4440, %v4447
  %v4450 = vunpack.c.l.s4 1983009808
  %v4451 = vunpack.c.0.s8 %v4450
  %v4452 = vlaneseq
  %v4453 = vshrl.u32 %v4452, 7
  %v4454 = vsub.s32 %v4451, %v4453
  %v4455 = vrot.slane %v4441, %v4454
  %v4456 = vcombine.low %v606, %v628
  %v4457 = vcombine.high %v606, %v628
  %v4459 = vunpack.c.l.s4 1983009808
  %v4460 = vunpack.c.0.s8 %v4459
  %v4461 = vlaneseq
  %v4462 = vshrl.u32 %v4461, 7
  %v4463 = vsub.s32 %v4460, %v4462
  %v4464 = vrot.slane %v4456, %v4463
  %v4466 = vunpack.c.l.s4 1983009808
  %v4467 = vunpack.c.0.s8 %v4466
  %v4468 = vlaneseq
  %v4469 = vshrl.u32 %v4468, 7
  %v4470 = vsub.s32 %v4467, %v4469
  %v4471 = vrot.slane %v4457, %v4470
  %v4472 = vcombine.low %v617, %v639
  %v4473 = vcombine.high %v617, %v639
  %v4475 = vunpack.c.l.s4 1983009808
  %v4476 = vunpack.c.0.s8 %v4475
  %v4477 = vlaneseq
  %v4478 = vshrl.u32 %v4477, 7
  %v4479 = vsub.s32 %v4476, %v4478
  %v4480 = vrot.slane %v4472, %v4479
  %v4482 = vunpack.c.l.s4 1983009808
  %v4483 = vunpack.c.0.s8 %v4482
  %v4484 = vlaneseq
  %v4485 = vshrl.u32 %v4484, 7
  %v4486 = vsub.s32 %v4483, %v4485
  %v4487 = vrot.slane %v4473, %v4486
  %v4488 = vcombine.low %v4432, %v4448
  %v4489 = vcombine.high %v4432, %v4448
  %v4491 = vunpack.c.l.s4 1934713408
  %v4492 = vunpack.c.0.s8 %v4491
  %v4493 = vlaneseq
  %v4494 = vshrl.u32 %v4493, 7
  %v4495 = vsub.s32 %v4492, %v4494
  %v4496 = vrot.slane %v4488, %v4495
  %v4498 = vunpack.c.l.s4 1934713408
  %v4499 = vunpack.c.0.s8 %v4498
  %v4500 = vlaneseq
  %v4501 = vshrl.u32 %v4500, 7
  %v4502 = vsub.s32 %v4499, %v4501
  %v4503 = vrot.slane %v4489, %v4502
  %v4504 = vcombine.low %v4439, %v4455
  %v4505 = vcombine.high %v4439, %v4455
  %v4507 = vunpack.c.l.s4 1934713408
  %v4508 = vunpack.c.0.s8 %v4507
  %v4509 = vlaneseq
  %v4510 = vshrl.u32 %v4509, 7
  %v4511 = vsub.s32 %v4508, %v4510
  %v4512 = vrot.slane %v4504, %v4511
  %v4514 = vunpack.c.l.s4 1934713408
  %v4515 = vunpack.c.0.s8 %v4514
  %v4516 = vlaneseq
  %v4517 = vshrl.u32 %v4516, 7
  %v4518 = vsub.s32 %v4515, %v4517
  %v4519 = vrot.slane %v4505, %v4518
  %v4520 = vcombine.low %v4464, %v4480
  %v4521 = vcombine.high %v4464, %v4480
  %v4523 = vunpack.c.l.s4 1934713408
  %v4524 = vunpack.c.0.s8 %v4523
  %v4525 = vlaneseq
  %v4526 = vshrl.u32 %v4525, 7
  %v4527 = vsub.s32 %v4524, %v4526
  %v4528 = vrot.slane %v4520, %v4527
  %v4530 = vunpack.c.l.s4 1934713408
  %v4531 = vunpack.c.0.s8 %v4530
  %v4532 = vlaneseq
  %v4533 = vshrl.u32 %v4532, 7
  %v4534 = vsub.s32 %v4531, %v4533
  %v4535 = vrot.slane %v4521, %v4534
  %v4536 = vcombine.low %v4471, %v4487
  %v4537 = vcombine.high %v4471, %v4487
  %v4539 = vunpack.c.l.s4 1934713408
  %v4540 = vunpack.c.0.s8 %v4539
  %v4541 = vlaneseq
  %v4542 = vshrl.u32 %v4541, 7
  %v4543 = vsub.s32 %v4540, %v4542
  %v4544 = vrot.slane %v4536, %v4543
  %v4546 = vunpack.c.l.s4 1934713408
  %v4547 = vunpack.c.0.s8 %v4546
  %v4548 = vlaneseq
  %v4549 = vshrl.u32 %v4548, 7
  %v4550 = vsub.s32 %v4547, %v4549
  %v4551 = vrot.slane %v4537, %v4550
  %v4552 = vcombine.low %v4496, %v4528
  %v4553 = vcombine.high %v4496, %v4528
  %v4554 = vcombine.low %v4503, %v4535
  %v4555 = vcombine.high %v4503, %v4535
  %v4556 = vcombine.low %v4512, %v4544
  %v4557 = vcombine.high %v4512, %v4544
  %v4558 = vcombine.low %v4519, %v4551
  %v4559 = vcombine.high %v4519, %v4551
  %v4560 = vcombine.low %v650, %v672
  %v4561 = vcombine.high %v650, %v672
  %v4563 = vunpack.c.l.s4 1983009808
  %v4564 = vunpack.c.0.s8 %v4563
  %v4565 = vlaneseq
  %v4566 = vshrl.u32 %v4565, 7
  %v4567 = vsub.s32 %v4564, %v4566
  %v4568 = vrot.slane %v4560, %v4567
  %v4570 = vunpack.c.l.s4 1983009808
  %v4571 = vunpack.c.0.s8 %v4570
  %v4572 = vlaneseq
  %v4573 = vshrl.u32 %v4572, 7
  %v4574 = vsub.s32 %v4571, %v4573
  %v4575 = vrot.slane %v4561, %v4574
  %v4576 = vcombine.low %v661, %v683
  %v4577 = vcombine.high %v661, %v683
  %v4579 = vunpack.c.l.s4 1983009808
  %v4580 = vunpack.c.0.s8 %v4579
  %v4581 = vlaneseq
  %v4582 = vshrl.u32 %v4581, 7
  %v4583 = vsub.s32 %v4580, %v4582
  %v4584 = vrot.slane %v4576, %v4583
  %v4586 = vunpack.c.l.s4 1983009808
  %v4587 = vunpack.c.0.s8 %v4586
  %v4588 = vlaneseq
  %v4589 = vshrl.u32 %v4588, 7
  %v4590 = vsub.s32 %v4587, %v4589
  %v4591 = vrot.slane %v4577, %v4590
  %v4592 = vcombine.low %v694, %v716
  %v4593 = vcombine.high %v694, %v716
  %v4595 = vunpack.c.l.s4 1983009808
  %v4596 = vunpack.c.0.s8 %v4595
  %v4597 = vlaneseq
  %v4598 = vshrl.u32 %v4597, 7
  %v4599 = vsub.s32 %v4596, %v4598
  %v4600 = vrot.slane %v4592, %v4599
  %v4602 = vunpack.c.l.s4 1983009808
  %v4603 = vunpack.c.0.s8 %v4602
  %v4604 = vlaneseq
  %v4605 = vshrl.u32 %v4604, 7
  %v4606 = vsub.s32 %v4603, %v4605
  %v4607 = vrot.slane %v4593, %v4606
  %v4608 = vcombine.low %v705, %v727
  %v4609 = vcombine.high %v705, %v727
  %v4611 = vunpack.c.l.s4 1983009808
  %v4612 = vunpack.c.0.s8 %v4611
  %v4613 = vlaneseq
  %v4614 = vshrl.u32 %v4613, 7
  %v4615 = vsub.s32 %v4612, %v4614
  %v4616 = vrot.slane %v4608, %v4615
  %v4618 = vunpack.c.l.s4 1983009808
  %v4619 = vunpack.c.0.s8 %v4618
  %v4620 = vlaneseq
  %v4621 = vshrl.u32 %v4620, 7
  %v4622 = vsub.s32 %v4619, %v4621
  %v4623 = vrot.slane %v4609, %v4622
  %v4624 = vcombine.low %v4568, %v4584
  %v4625 = vcombine.high %v4568, %v4584
  %v4627 = vunpack.c.l.s4 1934713408
  %v4628 = vunpack.c.0.s8 %v4627
  %v4629 = vlaneseq
  %v4630 = vshrl.u32 %v4629, 7
  %v4631 = vsub.s32 %v4628, %v4630
  %v4632 = vrot.slane %v4624, %v4631
  %v4634 = vunpack.c.l.s4 1934713408
  %v4635 = vunpack.c.0.s8 %v4634
  %v4636 = vlaneseq
  %v4637 = vshrl.u32 %v4636, 7
  %v4638 = vsub.s32 %v4635, %v4637
  %v4639 = vrot.slane %v4625, %v4638
  %v4640 = vcombine.low %v4575, %v4591
  %v4641 = vcombine.high %v4575, %v4591
  %v4643 = vunpack.c.l.s4 1934713408
  %v4644 = vunpack.c.0.s8 %v4643
  %v4645 = vlaneseq
  %v4646 = vshrl.u32 %v4645, 7
  %v4647 = vsub.s32 %v4644, %v4646
  %v4648 = vrot.slane %v4640, %v4647
  %v4650 = vunpack.c.l.s4 1934713408
  %v4651 = vunpack.c.0.s8 %v4650
  %v4652 = vlaneseq
  %v4653 = vshrl.u32 %v4652, 7
  %v4654 = vsub.s32 %v4651, %v4653
  %v4655 = vrot.slane %v4641, %v4654
  %v4656 = vcombine.low %v4600, %v4616
  %v4657 = vcombine.high %v4600, %v4616
  %v4659 = vunpack.c.l.s4 1934713408
  %v4660 = vunpack.c.0.s8 %v4659
  %v4661 = vlaneseq
  %v4662 = vshrl.u32 %v4661, 7
  %v4663 = vsub.s32 %v4660, %v4662
  %v4664 = vrot.slane %v4656, %v4663
  %v4666 = vunpack.c.l.s4 1934713408
  %v4667 = vunpack.c.0.s8 %v4666
  %v4668 = vlaneseq
  %v4669 = vshrl.u32 %v4668, 7
  %v4670 = vsub.s32 %v4667, %v4669
  %v4671 = vrot.slane %v4657, %v4670
  %v4672 = vcombine.low %v4607, %v4623
  %v4673 = vcombine.high %v4607, %v4623
  %v4675 = vunpack.c.l.s4 1934713408
  %v4676 = vunpack.c.0.s8 %v4675
  %v4677 = vlaneseq
  %v4678 = vshrl.u32 %v4677, 7
  %v4679 = vsub.s32 %v4676, %v4678
  %v4680 = vrot.slane %v4672, %v4679
  %v4682 = vunpack.c.l.s4 1934713408
  %v4683 = vunpack.c.0.s8 %v4682
  %v4684 = vlaneseq
  %v4685 = vshrl.u32 %v4684, 7
  %v4686 = vsub.s32 %v4683, %v4685
  %v4687 = vrot.slane %v4673, %v4686
  %v4688 = vcombine.low %v4632, %v4664
  %v4689 = vcombine.high %v4632, %v4664
  %v4690 = vcombine.low %v4639, %v4671
  %v4691 = vcombine.high %v4639, %v4671
  %v4692 = vcombine.low %v4648, %v4680
  %v4693 = vcombine.high %v4648, %v4680
  %v4694 = vcombine.low %v4655, %v4687
  %v4695 = vcombine.high %v4655, %v4687
  %v4696 = vcombine.low %v738, %v760
  %v4697 = vcombine.high %v738, %v760
  %v4699 = vunpack.c.l.s4 1983009808
  %v4700 = vunpack.c.0.s8 %v4699
  %v4701 = vlaneseq
  %v4702 = vshrl.u32 %v4701, 7
  %v4703 = vsub.s32 %v4700, %v4702
  %v4704 = vrot.slane %v4696, %v4703
  %v4706 = vunpack.c.l.s4 1983009808
  %v4707 = vunpack.c.0.s8 %v4706
  %v4708 = vlaneseq
  %v4709 = vshrl.u32 %v4708, 7
  %v4710 = vsub.s32 %v4707, %v4709
  %v4711 = vrot.slane %v4697, %v4710
  %v4712 = vcombine.low %v749, %v771
  %v4713 = vcombine.high %v749, %v771
  %v4715 = vunpack.c.l.s4 1983009808
  %v4716 = vunpack.c.0.s8 %v4715
  %v4717 = vlaneseq
  %v4718 = vshrl.u32 %v4717, 7
  %v4719 = vsub.s32 %v4716, %v4718
  %v4720 = vrot.slane %v4712, %v4719
  %v4722 = vunpack.c.l.s4 1983009808
  %v4723 = vunpack.c.0.s8 %v4722
  %v4724 = vlaneseq
  %v4725 = vshrl.u32 %v4724, 7
  %v4726 = vsub.s32 %v4723, %v4725
  %v4727 = vrot.slane %v4713, %v4726
  %v4728 = vcombine.low %v782, %v804
  %v4729 = vcombine.high %v782, %v804
  %v4731 = vunpack.c.l.s4 1983009808
  %v4732 = vunpack.c.0.s8 %v4731
  %v4733 = vlaneseq
  %v4734 = vshrl.u32 %v4733, 7
  %v4735 = vsub.s32 %v4732, %v4734
  %v4736 = vrot.slane %v4728, %v4735
  %v4738 = vunpack.c.l.s4 1983009808
  %v4739 = vunpack.c.0.s8 %v4738
  %v4740 = vlaneseq
  %v4741 = vshrl.u32 %v4740, 7
  %v4742 = vsub.s32 %v4739, %v4741
  %v4743 = vrot.slane %v4729, %v4742
  %v4744 = vcombine.low %v793, %v815
  %v4745 = vcombine.high %v793, %v815
  %v4747 = vunpack.c.l.s4 1983009808
  %v4748 = vunpack.c.0.s8 %v4747
  %v4749 = vlaneseq
  %v4750 = vshrl.u32 %v4749, 7
  %v4751 = vsub.s32 %v4748, %v4750
  %v4752 = vrot.slane %v4744, %v4751
  %v4754 = vunpack.c.l.s4 1983009808
  %v4755 = vunpack.c.0.s8 %v4754
  %v4756 = vlaneseq
  %v4757 = vshrl.u32 %v4756, 7
  %v4758 = vsub.s32 %v4755, %v4757
  %v4759 = vrot.slane %v4745, %v4758
  %v4760 = vcombine.low %v4704, %v4720
  %v4761 = vcombine.high %v4704, %v4720
  %v4763 = vunpack.c.l.s4 1934713408
  %v4764 = vunpack.c.0.s8 %v4763
  %v4765 = vlaneseq
  %v4766 = vshrl.u32 %v4765, 7
  %v4767 = vsub.s32 %v4764, %v4766
  %v4768 = vrot.slane %v4760, %v4767
  %v4770 = vunpack.c.l.s4 1934713408
  %v4771 = vunpack.c.0.s8 %v4770
  %v4772 = vlaneseq
  %v4773 = vshrl.u32 %v4772, 7
  %v4774 = vsub.s32 %v4771, %v4773
  %v4775 = vrot.slane %v4761, %v4774
  %v4776 = vcombine.low %v4711, %v4727
  %v4777 = vcombine.high %v4711, %v4727
  %v4779 = vunpack.c.l.s4 1934713408
  %v4780 = vunpack.c.0.s8 %v4779
  %v4781 = vlaneseq
  %v4782 = vshrl.u32 %v4781, 7
  %v4783 = vsub.s32 %v4780, %v4782
  %v4784 = vrot.slane %v4776, %v4783
  %v4786 = vunpack.c.l.s4 1934713408
  %v4787 = vunpack.c.0.s8 %v4786
  %v4788 = vlaneseq
  %v4789 = vshrl.u32 %v4788, 7
  %v4790 = vsub.s32 %v4787, %v4789
  %v4791 = vrot.slane %v4777, %v4790
  %v4792 = vcombine.low %v4736, %v4752
  %v4793 = vcombine.high %v4736, %v4752
  %v4795 = vunpack.c.l.s4 1934713408
  %v4796 = vunpack.c.0.s8 %v4795
  %v4797 = vlaneseq
  %v4798 = vshrl.u32 %v4797, 7
  %v4799 = vsub.s32 %v4796, %v4798
  %v4800 = vrot.slane %v4792, %v4799
  %v4802 = vunpack.c.l.s4 1934713408
  %v4803 = vunpack.c.0.s8 %v4802
  %v4804 = vlaneseq
  %v4805 = vshrl.u32 %v4804, 7
  %v4806 = vsub.s32 %v4803, %v4805
  %v4807 = vrot.slane %v4793, %v4806
  %v4808 = vcombine.low %v4743, %v4759
  %v4809 = vcombine.high %v4743, %v4759
  %v4811 = vunpack.c.l.s4 1934713408
  %v4812 = vunpack.c.0.s8 %v4811
  %v4813 = vlaneseq
  %v4814 = vshrl.u32 %v4813, 7
  %v4815 = vsub.s32 %v4812, %v4814
  %v4816 = vrot.slane %v4808, %v4815
  %v4818 = vunpack.c.l.s4 1934713408
  %v4819 = vunpack.c.0.s8 %v4818
  %v4820 = vlaneseq
  %v4821 = vshrl.u32 %v4820, 7
  %v4822 = vsub.s32 %v4819, %v4821
  %v4823 = vrot.slane %v4809, %v4822
  %v4824 = vcombine.low %v4768, %v4800
  %v4825 = vcombine.high %v4768, %v4800
  %v4826 = vcombine.low %v4775, %v4807
  %v4827 = vcombine.high %v4775, %v4807
  %v4828 = vcombine.low %v4784, %v4816
  %v4829 = vcombine.high %v4784, %v4816
  %v4830 = vcombine.low %v4791, %v4823
  %v4831 = vcombine.high %v4791, %v4823
  %v4832 = vcombine.low %v826, %v848
  %v4833 = vcombine.high %v826, %v848
  %v4835 = vunpack.c.l.s4 1983009808
  %v4836 = vunpack.c.0.s8 %v4835
  %v4837 = vlaneseq
  %v4838 = vshrl.u32 %v4837, 7
  %v4839 = vsub.s32 %v4836, %v4838
  %v4840 = vrot.slane %v4832, %v4839
  %v4842 = vunpack.c.l.s4 1983009808
  %v4843 = vunpack.c.0.s8 %v4842
  %v4844 = vlaneseq
  %v4845 = vshrl.u32 %v4844, 7
  %v4846 = vsub.s32 %v4843, %v4845
  %v4847 = vrot.slane %v4833, %v4846
  %v4848 = vcombine.low %v837, %v859
  %v4849 = vcombine.high %v837, %v859
  %v4851 = vunpack.c.l.s4 1983009808
  %v4852 = vunpack.c.0.s8 %v4851
  %v4853 = vlaneseq
  %v4854 = vshrl.u32 %v4853, 7
  %v4855 = vsub.s32 %v4852, %v4854
  %v4856 = vrot.slane %v4848, %v4855
  %v4858 = vunpack.c.l.s4 1983009808
  %v4859 = vunpack.c.0.s8 %v4858
  %v4860 = vlaneseq
  %v4861 = vshrl.u32 %v4860, 7
  %v4862 = vsub.s32 %v4859, %v4861
  %v4863 = vrot.slane %v4849, %v4862
  %v4864 = vcombine.low %v870, %v892
  %v4865 = vcombine.high %v870, %v892
  %v4867 = vunpack.c.l.s4 1983009808
  %v4868 = vunpack.c.0.s8 %v4867
  %v4869 = vlaneseq
  %v4870 = vshrl.u32 %v4869, 7
  %v4871 = vsub.s32 %v4868, %v4870
  %v4872 = vrot.slane %v4864, %v4871
  %v4874 = vunpack.c.l.s4 1983009808
  %v4875 = vunpack.c.0.s8 %v4874
  %v4876 = vlaneseq
  %v4877 = vshrl.u32 %v4876, 7
  %v4878 = vsub.s32 %v4875, %v4877
  %v4879 = vrot.slane %v4865, %v4878
  %v4880 = vcombine.low %v881, %v903
  %v4881 = vcombine.high %v881, %v903
  %v4883 = vunpack.c.l.s4 1983009808
  %v4884 = vunpack.c.0.s8 %v4883
  %v4885 = vlaneseq
  %v4886 = vshrl.u32 %v4885, 7
  %v4887 = vsub.s32 %v4884, %v4886
  %v4888 = vrot.slane %v4880, %v4887
  %v4890 = vunpack.c.l.s4 1983009808
  %v4891 = vunpack.c.0.s8 %v4890
  %v4892 = vlaneseq
  %v4893 = vshrl.u32 %v4892, 7
  %v4894 = vsub.s32 %v4891, %v4893
  %v4895 = vrot.slane %v4881, %v4894
  %v4896 = vcombine.low %v4840, %v4856
  %v4897 = vcombine.high %v4840, %v4856
  %v4899 = vunpack.c.l.s4 1934713408
  %v4900 = vunpack.c.0.s8 %v4899
  %v4901 = vlaneseq
  %v4902 = vshrl.u32 %v4901, 7
  %v4903 = vsub.s32 %v4900, %v4902
  %v4904 = vrot.slane %v4896, %v4903
  %v4906 = vunpack.c.l.s4 1934713408
  %v4907 = vunpack.c.0.s8 %v4906
  %v4908 = vlaneseq
  %v4909 = vshrl.u32 %v4908, 7
  %v4910 = vsub.s32 %v4907, %v4909
  %v4911 = vrot.slane %v4897, %v4910
  %v4912 = vcombine.low %v4847, %v4863
  %v4913 = vcombine.high %v4847, %v4863
  %v4915 = vunpack.c.l.s4 1934713408
  %v4916 = vunpack.c.0.s8 %v4915
  %v4917 = vlaneseq
  %v4918 = vshrl.u32 %v4917, 7
  %v4919 = vsub.s32 %v4916, %v4918
  %v4920 = vrot.slane %v4912, %v4919
  %v4922 = vunpack.c.l.s4 1934713408
  %v4923 = vunpack.c.0.s8 %v4922
  %v4924 = vlaneseq
  %v4925 = vshrl.u32 %v4924, 7
  %v4926 = vsub.s32 %v4923, %v4925
  %v4927 = vrot.slane %v4913, %v4926
  %v4928 = vcombine.low %v4872, %v4888
  %v4929 = vcombine.high %v4872, %v4888
  %v4931 = vunpack.c.l.s4 1934713408
  %v4932 = vunpack.c.0.s8 %v4931
  %v4933 = vlaneseq
  %v4934 = vshrl.u32 %v4933, 7
  %v4935 = vsub.s32 %v4932, %v4934
  %v4936 = vrot.slane %v4928, %v4935
  %v4938 = vunpack.c.l.s4 1934713408
  %v4939 = vunpack.c.0.s8 %v4938
  %v4940 = vlaneseq
  %v4941 = vshrl.u32 %v4940, 7
  %v4942 = vsub.s32 %v4939, %v4941
  %v4943 = vrot.slane %v4929, %v4942
  %v4944 = vcombine.low %v4879, %v4895
  %v4945 = vcombine.high %v4879, %v4895
  %v4947 = vunpack.c.l.s4 1934713408
  %v4948 = vunpack.c.0.s8 %v4947
  %v4949 = vlaneseq
  %v4950 = vshrl.u32 %v4949, 7
  %v4951 = vsub.s32 %v4948, %v4950
  %v4952 = vrot.slane %v4944, %v4951
  %v4954 = vunpack.c.l.s4 1934713408
  %v4955 = vunpack.c.0.s8 %v4954
  %v4956 = vlaneseq
  %v4957 = vshrl.u32 %v4956, 7
  %v4958 = vsub.s32 %v4955, %v4957
  %v4959 = vrot.slane %v4945, %v4958
  %v4960 = vcombine.low %v4904, %v4936
  %v4961 = vcombine.high %v4904, %v4936
  %v4962 = vcombine.low %v4911, %v4943
  %v4963 = vcombine.high %v4911, %v4943
  %v4964 = vcombine.low %v4920, %v4952
  %v4965 = vcombine.high %v4920, %v4952
  %v4966 = vcombine.low %v4927, %v4959
  %v4967 = vcombine.high %v4927, %v4959
  %v4968 = vcombine.low %v914, %v936
  %v4969 = vcombine.high %v914, %v936
  %v4971 = vunpack.c.l.s4 1983009808
  %v4972 = vunpack.c.0.s8 %v4971
  %v4973 = vlaneseq
  %v4974 = vshrl.u32 %v4973, 7
  %v4975 = vsub.s32 %v4972, %v4974
  %v4976 = vrot.slane %v4968, %v4975
  %v4978 = vunpack.c.l.s4 1983009808
  %v4979 = vunpack.c.0.s8 %v4978
  %v4980 = vlaneseq
  %v4981 = vshrl.u32 %v4980, 7
  %v4982 = vsub.s32 %v4979, %v4981
  %v4983 = vrot.slane %v4969, %v4982
  %v4984 = vcombine.low %v925, %v947
  %v4985 = vcombine.high %v925, %v947
  %v4987 = vunpack.c.l.s4 1983009808
  %v4988 = vunpack.c.0.s8 %v4987
  %v4989 = vlaneseq
  %v4990 = vshrl.u32 %v4989, 7
  %v4991 = vsub.s32 %v4988, %v4990
  %v4992 = vrot.slane %v4984, %v4991
  %v4994 = vunpack.c.l.s4 1983009808
  %v4995 = vunpack.c.0.s8 %v4994
  %v4996 = vlaneseq
  %v4997 = vshrl.u32 %v4996, 7
  %v4998 = vsub.s32 %v4995, %v4997
  %v4999 = vrot.slane %v4985, %v4998
  %v5000 = vcombine.low %v958, %v980
  %v5001 = vcombine.high %v958, %v980
  %v5003 = vunpack.c.l.s4 1983009808
  %v5004 = vunpack.c.0.s8 %v5003
  %v5005 = vlaneseq
  %v5006 = vshrl.u32 %v5005, 7
  %v5007 = vsub.s32 %v5004, %v5006
  %v5008 = vrot.slane %v5000, %v5007
  %v5010 = vunpack.c.l.s4 1983009808
  %v5011 = vunpack.c.0.s8 %v5010
  %v5012 = vlaneseq
  %v5013 = vshrl.u32 %v5012, 7
  %v5014 = vsub.s32 %v5011, %v5013
  %v5015 = vrot.slane %v5001, %v5014
  %v5016 = vcombine.low %v969, %v991
  %v5017 = vcombine.high %v969, %v991
  %v5019 = vunpack.c.l.s4 1983009808
  %v5020 = vunpack.c.0.s8 %v5019
  %v5021 = vlaneseq
  %v5022 = vshrl.u32 %v5021, 7
  %v5023 = vsub.s32 %v5020, %v5022
  %v5024 = vrot.slane %v5016, %v5023
  %v5026 = vunpack.c.l.s4 1983009808
  %v5027 = vunpack.c.0.s8 %v5026
  %v5028 = vlaneseq
  %v5029 = vshrl.u32 %v5028, 7
  %v5030 = vsub.s32 %v5027, %v5029
  %v5031 = vrot.slane %v5017, %v5030
  %v5032 = vcombine.low %v4976, %v4992
  %v5033 = vcombine.high %v4976, %v4992
  %v5035 = vunpack.c.l.s4 1934713408
  %v5036 = vunpack.c.0.s8 %v5035
  %v5037 = vlaneseq
  %v5038 = vshrl.u32 %v5037, 7
  %v5039 = vsub.s32 %v5036, %v5038
  %v5040 = vrot.slane %v5032, %v5039
  %v5042 = vunpack.c.l.s4 1934713408
  %v5043 = vunpack.c.0.s8 %v5042
  %v5044 = vlaneseq
  %v5045 = vshrl.u32 %v5044, 7
  %v5046 = vsub.s32 %v5043, %v5045
  %v5047 = vrot.slane %v5033, %v5046
  %v5048 = vcombine.low %v4983, %v4999
  %v5049 = vcombine.high %v4983, %v4999
  %v5051 = vunpack.c.l.s4 1934713408
  %v5052 = vunpack.c.0.s8 %v5051
  %v5053 = vlaneseq
  %v5054 = vshrl.u32 %v5053, 7
  %v5055 = vsub.s32 %v5052, %v5054
  %v5056 = vrot.slane %v5048, %v5055
  %v5058 = vunpack.c.l.s4 1934713408
  %v5059 = vunpack.c.0.s8 %v5058
  %v5060 = vlaneseq
  %v5061 = vshrl.u32 %v5060, 7
  %v5062 = vsub.s32 %v5059, %v5061
  %v5063 = vrot.slane %v5049, %v5062
  %v5064 = vcombine.low %v5008, %v5024
  %v5065 = vcombine.high %v5008, %v5024
  %v5067 = vunpack.c.l.s4 1934713408
  %v5068 = vunpack.c.0.s8 %v5067
  %v5069 = vlaneseq
  %v5070 = vshrl.u32 %v5069, 7
  %v5071 = vsub.s32 %v5068, %v5070
  %v5072 = vrot.slane %v5064, %v5071
  %v5074 = vunpack.c.l.s4 1934713408
  %v5075 = vunpack.c.0.s8 %v5074
  %v5076 = vlaneseq
  %v5077 = vshrl.u32 %v5076, 7
  %v5078 = vsub.s32 %v5075, %v5077
  %v5079 = vrot.slane %v5065, %v5078
  %v5080 = vcombine.low %v5015, %v5031
  %v5081 = vcombine.high %v5015, %v5031
  %v5083 = vunpack.c.l.s4 1934713408
  %v5084 = vunpack.c.0.s8 %v5083
  %v5085 = vlaneseq
  %v5086 = vshrl.u32 %v5085, 7
  %v5087 = vsub.s32 %v5084, %v5086
  %v5088 = vrot.slane %v5080, %v5087
  %v5090 = vunpack.c.l.s4 1934713408
  %v5091 = vunpack.c.0.s8 %v5090
  %v5092 = vlaneseq
  %v5093 = vshrl.u32 %v5092, 7
  %v5094 = vsub.s32 %v5091, %v5093
  %v5095 = vrot.slane %v5081, %v5094
  %v5096 = vcombine.low %v5040, %v5072
  %v5097 = vcombine.high %v5040, %v5072
  %v5098 = vcombine.low %v5047, %v5079
  %v5099 = vcombine.high %v5047, %v5079
  %v5100 = vcombine.low %v5056, %v5088
  %v5101 = vcombine.high %v5056, %v5088
  %v5102 = vcombine.low %v5063, %v5095
  %v5103 = vcombine.high %v5063, %v5095
  %v5104 = vcombine.low %v1002, %v1024
  %v5105 = vcombine.high %v1002, %v1024
  %v5107 = vunpack.c.l.s4 1983009808
  %v5108 = vunpack.c.0.s8 %v5107
  %v5109 = vlaneseq
  %v5110 = vshrl.u32 %v5109, 7
  %v5111 = vsub.s32 %v5108, %v5110
  %v5112 = vrot.slane %v5104, %v5111
  %v5114 = vunpack.c.l.s4 1983009808
  %v5115 = vunpack.c.0.s8 %v5114
  %v5116 = vlaneseq
  %v5117 = vshrl.u32 %v5116, 7
  %v5118 = vsub.s32 %v5115, %v5117
  %v5119 = vrot.slane %v5105, %v5118
  %v5120 = vcombine.low %v1013, %v1035
  %v5121 = vcombine.high %v1013, %v1035
  %v5123 = vunpack.c.l.s4 1983009808
  %v5124 = vunpack.c.0.s8 %v5123
  %v5125 = vlaneseq
  %v5126 = vshrl.u32 %v5125, 7
  %v5127 = vsub.s32 %v5124, %v5126
  %v5128 = vrot.slane %v5120, %v5127
  %v5130 = vunpack.c.l.s4 1983009808
  %v5131 = vunpack.c.0.s8 %v5130
  %v5132 = vlaneseq
  %v5133 = vshrl.u32 %v5132, 7
  %v5134 = vsub.s32 %v5131, %v5133
  %v5135 = vrot.slane %v5121, %v5134
  %v5136 = vcombine.low %v1046, %v1068
  %v5137 = vcombine.high %v1046, %v1068
  %v5139 = vunpack.c.l.s4 1983009808
  %v5140 = vunpack.c.0.s8 %v5139
  %v5141 = vlaneseq
  %v5142 = vshrl.u32 %v5141, 7
  %v5143 = vsub.s32 %v5140, %v5142
  %v5144 = vrot.slane %v5136, %v5143
  %v5146 = vunpack.c.l.s4 1983009808
  %v5147 = vunpack.c.0.s8 %v5146
  %v5148 = vlaneseq
  %v5149 = vshrl.u32 %v5148, 7
  %v5150 = vsub.s32 %v5147, %v5149
  %v5151 = vrot.slane %v5137, %v5150
  %v5152 = vcombine.low %v1057, %v1079
  %v5153 = vcombine.high %v1057, %v1079
  %v5155 = vunpack.c.l.s4 1983009808
  %v5156 = vunpack.c.0.s8 %v5155
  %v5157 = vlaneseq
  %v5158 = vshrl.u32 %v5157, 7
  %v5159 = vsub.s32 %v5156, %v5158
  %v5160 = vrot.slane %v5152, %v5159
  %v5162 = vunpack.c.l.s4 1983009808
  %v5163 = vunpack.c.0.s8 %v5162
  %v5164 = vlaneseq
  %v5165 = vshrl.u32 %v5164, 7
  %v5166 = vsub.s32 %v5163, %v5165
  %v5167 = vrot.slane %v5153, %v5166
  %v5168 = vcombine.low %v5112, %v5128
  %v5169 = vcombine.high %v5112, %v5128
  %v5171 = vunpack.c.l.s4 1934713408
  %v5172 = vunpack.c.0.s8 %v5171
  %v5173 = vlaneseq
  %v5174 = vshrl.u32 %v5173, 7
  %v5175 = vsub.s32 %v5172, %v5174
  %v5176 = vrot.slane %v5168, %v5175
  %v5178 = vunpack.c.l.s4 1934713408
  %v5179 = vunpack.c.0.s8 %v5178
  %v5180 = vlaneseq
  %v5181 = vshrl.u32 %v5180, 7
  %v5182 = vsub.s32 %v5179, %v5181
  %v5183 = vrot.slane %v5169, %v5182
  %v5184 = vcombine.low %v5119, %v5135
  %v5185 = vcombine.high %v5119, %v5135
  %v5187 = vunpack.c.l.s4 1934713408
  %v5188 = vunpack.c.0.s8 %v5187
  %v5189 = vlaneseq
  %v5190 = vshrl.u32 %v5189, 7
  %v5191 = vsub.s32 %v5188, %v5190
  %v5192 = vrot.slane %v5184, %v5191
  %v5194 = vunpack.c.l.s4 1934713408
  %v5195 = vunpack.c.0.s8 %v5194
  %v5196 = vlaneseq
  %v5197 = vshrl.u32 %v5196, 7
  %v5198 = vsub.s32 %v5195, %v5197
  %v5199 = vrot.slane %v5185, %v5198
  %v5200 = vcombine.low %v5144, %v5160
  %v5201 = vcombine.high %v5144, %v5160
  %v5203 = vunpack.c.l.s4 1934713408
  %v5204 = vunpack.c.0.s8 %v5203
  %v5205 = vlaneseq
  %v5206 = vshrl.u32 %v5205, 7
  %v5207 = vsub.s32 %v5204, %v5206
  %v5208 = vrot.slane %v5200, %v5207
  %v5210 = vunpack.c.l.s4 1934713408
  %v5211 = vunpack.c.0.s8 %v5210
  %v5212 = vlaneseq
  %v5213 = vshrl.u32 %v5212, 7
  %v5214 = vsub.s32 %v5211, %v5213
  %v5215 = vrot.slane %v5201, %v5214
  %v5216 = vcombine.low %v5151, %v5167
  %v5217 = vcombine.high %v5151, %v5167
  %v5219 = vunpack.c.l.s4 1934713408
  %v5220 = vunpack.c.0.s8 %v5219
  %v5221 = vlaneseq
  %v5222 = vshrl.u32 %v5221, 7
  %v5223 = vsub.s32 %v5220, %v5222
  %v5224 = vrot.slane %v5216, %v5223
  %v5226 = vunpack.c.l.s4 1934713408
  %v5227 = vunpack.c.0.s8 %v5226
  %v5228 = vlaneseq
  %v5229 = vshrl.u32 %v5228, 7
  %v5230 = vsub.s32 %v5227, %v5229
  %v5231 = vrot.slane %v5217, %v5230
  %v5232 = vcombine.low %v5176, %v5208
  %v5233 = vcombine.high %v5176, %v5208
  %v5234 = vcombine.low %v5183, %v5215
  %v5235 = vcombine.high %v5183, %v5215
  %v5236 = vcombine.low %v5192, %v5224
  %v5237 = vcombine.high %v5192, %v5224
  %v5238 = vcombine.low %v5199, %v5231
  %v5239 = vcombine.high %v5199, %v5231
  %v5240 = vcombine.low %v1090, %v1112
  %v5241 = vcombine.high %v1090, %v1112
  %v5243 = vunpack.c.l.s4 1983009808
  %v5244 = vunpack.c.0.s8 %v5243
  %v5245 = vlaneseq
  %v5246 = vshrl.u32 %v5245, 7
  %v5247 = vsub.s32 %v5244, %v5246
  %v5248 = vrot.slane %v5240, %v5247
  %v5250 = vunpack.c.l.s4 1983009808
  %v5251 = vunpack.c.0.s8 %v5250
  %v5252 = vlaneseq
  %v5253 = vshrl.u32 %v5252, 7
  %v5254 = vsub.s32 %v5251, %v5253
  %v5255 = vrot.slane %v5241, %v5254
  %v5256 = vcombine.low %v1101, %v1123
  %v5257 = vcombine.high %v1101, %v1123
  %v5259 = vunpack.c.l.s4 1983009808
  %v5260 = vunpack.c.0.s8 %v5259
  %v5261 = vlaneseq
  %v5262 = vshrl.u32 %v5261, 7
  %v5263 = vsub.s32 %v5260, %v5262
  %v5264 = vrot.slane %v5256, %v5263
  %v5266 = vunpack.c.l.s4 1983009808
  %v5267 = vunpack.c.0.s8 %v5266
  %v5268 = vlaneseq
  %v5269 = vshrl.u32 %v5268, 7
  %v5270 = vsub.s32 %v5267, %v5269
  %v5271 = vrot.slane %v5257, %v5270
  %v5272 = vcombine.low %v1134, %v1156
  %v5273 = vcombine.high %v1134, %v1156
  %v5275 = vunpack.c.l.s4 1983009808
  %v5276 = vunpack.c.0.s8 %v5275
  %v5277 = vlaneseq
  %v5278 = vshrl.u32 %v5277, 7
  %v5279 = vsub.s32 %v5276, %v5278
  %v5280 = vrot.slane %v5272, %v5279
  %v5282 = vunpack.c.l.s4 1983009808
  %v5283 = vunpack.c.0.s8 %v5282
  %v5284 = vlaneseq
  %v5285 = vshrl.u32 %v5284, 7
  %v5286 = vsub.s32 %v5283, %v5285
  %v5287 = vrot.slane %v5273, %v5286
  %v5288 = vcombine.low %v1145, %v1167
  %v5289 = vcombine.high %v1145, %v1167
  %v5291 = vunpack.c.l.s4 1983009808
  %v5292 = vunpack.c.0.s8 %v5291
  %v5293 = vlaneseq
  %v5294 = vshrl.u32 %v5293, 7
  %v5295 = vsub.s32 %v5292, %v5294
  %v5296 = vrot.slane %v5288, %v5295
  %v5298 = vunpack.c.l.s4 1983009808
  %v5299 = vunpack.c.0.s8 %v5298
  %v5300 = vlaneseq
  %v5301 = vshrl.u32 %v5300, 7
  %v5302 = vsub.s32 %v5299, %v5301
  %v5303 = vrot.slane %v5289, %v5302
  %v5304 = vcombine.low %v5248, %v5264
  %v5305 = vcombine.high %v5248, %v5264
  %v5307 = vunpack.c.l.s4 1934713408
  %v5308 = vunpack.c.0.s8 %v5307
  %v5309 = vlaneseq
  %v5310 = vshrl.u32 %v5309, 7
  %v5311 = vsub.s32 %v5308, %v5310
  %v5312 = vrot.slane %v5304, %v5311
  %v5314 = vunpack.c.l.s4 1934713408
  %v5315 = vunpack.c.0.s8 %v5314
  %v5316 = vlaneseq
  %v5317 = vshrl.u32 %v5316, 7
  %v5318 = vsub.s32 %v5315, %v5317
  %v5319 = vrot.slane %v5305, %v5318
  %v5320 = vcombine.low %v5255, %v5271
  %v5321 = vcombine.high %v5255, %v5271
  %v5323 = vunpack.c.l.s4 1934713408
  %v5324 = vunpack.c.0.s8 %v5323
  %v5325 = vlaneseq
  %v5326 = vshrl.u32 %v5325, 7
  %v5327 = vsub.s32 %v5324, %v5326
  %v5328 = vrot.slane %v5320, %v5327
  %v5330 = vunpack.c.l.s4 1934713408
  %v5331 = vunpack.c.0.s8 %v5330
  %v5332 = vlaneseq
  %v5333 = vshrl.u32 %v5332, 7
  %v5334 = vsub.s32 %v5331, %v5333
  %v5335 = vrot.slane %v5321, %v5334
  %v5336 = vcombine.low %v5280, %v5296
  %v5337 = vcombine.high %v5280, %v5296
  %v5339 = vunpack.c.l.s4 1934713408
  %v5340 = vunpack.c.0.s8 %v5339
  %v5341 = vlaneseq
  %v5342 = vshrl.u32 %v5341, 7
  %v5343 = vsub.s32 %v5340, %v5342
  %v5344 = vrot.slane %v5336, %v5343
  %v5346 = vunpack.c.l.s4 1934713408
  %v5347 = vunpack.c.0.s8 %v5346
  %v5348 = vlaneseq
  %v5349 = vshrl.u32 %v5348, 7
  %v5350 = vsub.s32 %v5347, %v5349
  %v5351 = vrot.slane %v5337, %v5350
  %v5352 = vcombine.low %v5287, %v5303
  %v5353 = vcombine.high %v5287, %v5303
  %v5355 = vunpack.c.l.s4 1934713408
  %v5356 = vunpack.c.0.s8 %v5355
  %v5357 = vlaneseq
  %v5358 = vshrl.u32 %v5357, 7
  %v5359 = vsub.s32 %v5356, %v5358
  %v5360 = vrot.slane %v5352, %v5359
  %v5362 = vunpack.c.l.s4 1934713408
  %v5363 = vunpack.c.0.s8 %v5362
  %v5364 = vlaneseq
  %v5365 = vshrl.u32 %v5364, 7
  %v5366 = vsub.s32 %v5363, %v5365
  %v5367 = vrot.slane %v5353, %v5366
  %v5368 = vcombine.low %v5312, %v5344
  %v5369 = vcombine.high %v5312, %v5344
  %v5370 = vcombine.low %v5319, %v5351
  %v5371 = vcombine.high %v5319, %v5351
  %v5372 = vcombine.low %v5328, %v5360
  %v5373 = vcombine.high %v5328, %v5360
  %v5374 = vcombine.low %v5335, %v5367
  %v5375 = vcombine.high %v5335, %v5367
  %v5376 = vcombine.low %v1178, %v1200
  %v5377 = vcombine.high %v1178, %v1200
  %v5379 = vunpack.c.l.s4 1983009808
  %v5380 = vunpack.c.0.s8 %v5379
  %v5381 = vlaneseq
  %v5382 = vshrl.u32 %v5381, 7
  %v5383 = vsub.s32 %v5380, %v5382
  %v5384 = vrot.slane %v5376, %v5383
  %v5386 = vunpack.c.l.s4 1983009808
  %v5387 = vunpack.c.0.s8 %v5386
  %v5388 = vlaneseq
  %v5389 = vshrl.u32 %v5388, 7
  %v5390 = vsub.s32 %v5387, %v5389
  %v5391 = vrot.slane %v5377, %v5390
  %v5392 = vcombine.low %v1189, %v1211
  %v5393 = vcombine.high %v1189, %v1211
  %v5395 = vunpack.c.l.s4 1983009808
  %v5396 = vunpack.c.0.s8 %v5395
  %v5397 = vlaneseq
  %v5398 = vshrl.u32 %v5397, 7
  %v5399 = vsub.s32 %v5396, %v5398
  %v5400 = vrot.slane %v5392, %v5399
  %v5402 = vunpack.c.l.s4 1983009808
  %v5403 = vunpack.c.0.s8 %v5402
  %v5404 = vlaneseq
  %v5405 = vshrl.u32 %v5404, 7
  %v5406 = vsub.s32 %v5403, %v5405
  %v5407 = vrot.slane %v5393, %v5406
  %v5408 = vcombine.low %v1222, %v1244
  %v5409 = vcombine.high %v1222, %v1244
  %v5411 = vunpack.c.l.s4 1983009808
  %v5412 = vunpack.c.0.s8 %v5411
  %v5413 = vlaneseq
  %v5414 = vshrl.u32 %v5413, 7
  %v5415 = vsub.s32 %v5412, %v5414
  %v5416 = vrot.slane %v5408, %v5415
  %v5418 = vunpack.c.l.s4 1983009808
  %v5419 = vunpack.c.0.s8 %v5418
  %v5420 = vlaneseq
  %v5421 = vshrl.u32 %v5420, 7
  %v5422 = vsub.s32 %v5419, %v5421
  %v5423 = vrot.slane %v5409, %v5422
  %v5424 = vcombine.low %v1233, %v1255
  %v5425 = vcombine.high %v1233, %v1255
  %v5427 = vunpack.c.l.s4 1983009808
  %v5428 = vunpack.c.0.s8 %v5427
  %v5429 = vlaneseq
  %v5430 = vshrl.u32 %v5429, 7
  %v5431 = vsub.s32 %v5428, %v5430
  %v5432 = vrot.slane %v5424, %v5431
  %v5434 = vunpack.c.l.s4 1983009808
  %v5435 = vunpack.c.0.s8 %v5434
  %v5436 = vlaneseq
  %v5437 = vshrl.u32 %v5436, 7
  %v5438 = vsub.s32 %v5435, %v5437
  %v5439 = vrot.slane %v5425, %v5438
  %v5440 = vcombine.low %v5384, %v5400
  %v5441 = vcombine.high %v5384, %v5400
  %v5443 = vunpack.c.l.s4 1934713408
  %v5444 = vunpack.c.0.s8 %v5443
  %v5445 = vlaneseq
  %v5446 = vshrl.u32 %v5445, 7
  %v5447 = vsub.s32 %v5444, %v5446
  %v5448 = vrot.slane %v5440, %v5447
  %v5450 = vunpack.c.l.s4 1934713408
  %v5451 = vunpack.c.0.s8 %v5450
  %v5452 = vlaneseq
  %v5453 = vshrl.u32 %v5452, 7
  %v5454 = vsub.s32 %v5451, %v5453
  %v5455 = vrot.slane %v5441, %v5454
  %v5456 = vcombine.low %v5391, %v5407
  %v5457 = vcombine.high %v5391, %v5407
  %v5459 = vunpack.c.l.s4 1934713408
  %v5460 = vunpack.c.0.s8 %v5459
  %v5461 = vlaneseq
  %v5462 = vshrl.u32 %v5461, 7
  %v5463 = vsub.s32 %v5460, %v5462
  %v5464 = vrot.slane %v5456, %v5463
  %v5466 = vunpack.c.l.s4 1934713408
  %v5467 = vunpack.c.0.s8 %v5466
  %v5468 = vlaneseq
  %v5469 = vshrl.u32 %v5468, 7
  %v5470 = vsub.s32 %v5467, %v5469
  %v5471 = vrot.slane %v5457, %v5470
  %v5472 = vcombine.low %v5416, %v5432
  %v5473 = vcombine.high %v5416, %v5432
  %v5475 = vunpack.c.l.s4 1934713408
  %v5476 = vunpack.c.0.s8 %v5475
  %v5477 = vlaneseq
  %v5478 = vshrl.u32 %v5477, 7
  %v5479 = vsub.s32 %v5476, %v5478
  %v5480 = vrot.slane %v5472, %v5479
  %v5482 = vunpack.c.l.s4 1934713408
  %v5483 = vunpack.c.0.s8 %v5482
  %v5484 = vlaneseq
  %v5485 = vshrl.u32 %v5484, 7
  %v5486 = vsub.s32 %v5483, %v5485
  %v5487 = vrot.slane %v5473, %v5486
  %v5488 = vcombine.low %v5423, %v5439
  %v5489 = vcombine.high %v5423, %v5439
  %v5491 = vunpack.c.l.s4 1934713408
  %v5492 = vunpack.c.0.s8 %v5491
  %v5493 = vlaneseq
  %v5494 = vshrl.u32 %v5493, 7
  %v5495 = vsub.s32 %v5492, %v5494
  %v5496 = vrot.slane %v5488, %v5495
  %v5498 = vunpack.c.l.s4 1934713408
  %v5499 = vunpack.c.0.s8 %v5498
  %v5500 = vlaneseq
  %v5501 = vshrl.u32 %v5500, 7
  %v5502 = vsub.s32 %v5499, %v5501
  %v5503 = vrot.slane %v5489, %v5502
  %v5504 = vcombine.low %v5448, %v5480
  %v5505 = vcombine.high %v5448, %v5480
  %v5506 = vcombine.low %v5455, %v5487
  %v5507 = vcombine.high %v5455, %v5487
  %v5508 = vcombine.low %v5464, %v5496
  %v5509 = vcombine.high %v5464, %v5496
  %v5510 = vcombine.low %v5471, %v5503
  %v5511 = vcombine.high %v5471, %v5503
  %v5512 = vcombine.low %v1266, %v1288
  %v5513 = vcombine.high %v1266, %v1288
  %v5515 = vunpack.c.l.s4 1983009808
  %v5516 = vunpack.c.0.s8 %v5515
  %v5517 = vlaneseq
  %v5518 = vshrl.u32 %v5517, 7
  %v5519 = vsub.s32 %v5516, %v5518
  %v5520 = vrot.slane %v5512, %v5519
  %v5522 = vunpack.c.l.s4 1983009808
  %v5523 = vunpack.c.0.s8 %v5522
  %v5524 = vlaneseq
  %v5525 = vshrl.u32 %v5524, 7
  %v5526 = vsub.s32 %v5523, %v5525
  %v5527 = vrot.slane %v5513, %v5526
  %v5528 = vcombine.low %v1277, %v1299
  %v5529 = vcombine.high %v1277, %v1299
  %v5531 = vunpack.c.l.s4 1983009808
  %v5532 = vunpack.c.0.s8 %v5531
  %v5533 = vlaneseq
  %v5534 = vshrl.u32 %v5533, 7
  %v5535 = vsub.s32 %v5532, %v5534
  %v5536 = vrot.slane %v5528, %v5535
  %v5538 = vunpack.c.l.s4 1983009808
  %v5539 = vunpack.c.0.s8 %v5538
  %v5540 = vlaneseq
  %v5541 = vshrl.u32 %v5540, 7
  %v5542 = vsub.s32 %v5539, %v5541
  %v5543 = vrot.slane %v5529, %v5542
  %v5544 = vcombine.low %v1310, %v1332
  %v5545 = vcombine.high %v1310, %v1332
  %v5547 = vunpack.c.l.s4 1983009808
  %v5548 = vunpack.c.0.s8 %v5547
  %v5549 = vlaneseq
  %v5550 = vshrl.u32 %v5549, 7
  %v5551 = vsub.s32 %v5548, %v5550
  %v5552 = vrot.slane %v5544, %v5551
  %v5554 = vunpack.c.l.s4 1983009808
  %v5555 = vunpack.c.0.s8 %v5554
  %v5556 = vlaneseq
  %v5557 = vshrl.u32 %v5556, 7
  %v5558 = vsub.s32 %v5555, %v5557
  %v5559 = vrot.slane %v5545, %v5558
  %v5560 = vcombine.low %v1321, %v1343
  %v5561 = vcombine.high %v1321, %v1343
  %v5563 = vunpack.c.l.s4 1983009808
  %v5564 = vunpack.c.0.s8 %v5563
  %v5565 = vlaneseq
  %v5566 = vshrl.u32 %v5565, 7
  %v5567 = vsub.s32 %v5564, %v5566
  %v5568 = vrot.slane %v5560, %v5567
  %v5570 = vunpack.c.l.s4 1983009808
  %v5571 = vunpack.c.0.s8 %v5570
  %v5572 = vlaneseq
  %v5573 = vshrl.u32 %v5572, 7
  %v5574 = vsub.s32 %v5571, %v5573
  %v5575 = vrot.slane %v5561, %v5574
  %v5576 = vcombine.low %v5520, %v5536
  %v5577 = vcombine.high %v5520, %v5536
  %v5579 = vunpack.c.l.s4 1934713408
  %v5580 = vunpack.c.0.s8 %v5579
  %v5581 = vlaneseq
  %v5582 = vshrl.u32 %v5581, 7
  %v5583 = vsub.s32 %v5580, %v5582
  %v5584 = vrot.slane %v5576, %v5583
  %v5586 = vunpack.c.l.s4 1934713408
  %v5587 = vunpack.c.0.s8 %v5586
  %v5588 = vlaneseq
  %v5589 = vshrl.u32 %v5588, 7
  %v5590 = vsub.s32 %v5587, %v5589
  %v5591 = vrot.slane %v5577, %v5590
  %v5592 = vcombine.low %v5527, %v5543
  %v5593 = vcombine.high %v5527, %v5543
  %v5595 = vunpack.c.l.s4 1934713408
  %v5596 = vunpack.c.0.s8 %v5595
  %v5597 = vlaneseq
  %v5598 = vshrl.u32 %v5597, 7
  %v5599 = vsub.s32 %v5596, %v5598
  %v5600 = vrot.slane %v5592, %v5599
  %v5602 = vunpack.c.l.s4 1934713408
  %v5603 = vunpack.c.0.s8 %v5602
  %v5604 = vlaneseq
  %v5605 = vshrl.u32 %v5604, 7
  %v5606 = vsub.s32 %v5603, %v5605
  %v5607 = vrot.slane %v5593, %v5606
  %v5608 = vcombine.low %v5552, %v5568
  %v5609 = vcombine.high %v5552, %v5568
  %v5611 = vunpack.c.l.s4 1934713408
  %v5612 = vunpack.c.0.s8 %v5611
  %v5613 = vlaneseq
  %v5614 = vshrl.u32 %v5613, 7
  %v5615 = vsub.s32 %v5612, %v5614
  %v5616 = vrot.slane %v5608, %v5615
  %v5618 = vunpack.c.l.s4 1934713408
  %v5619 = vunpack.c.0.s8 %v5618
  %v5620 = vlaneseq
  %v5621 = vshrl.u32 %v5620, 7
  %v5622 = vsub.s32 %v5619, %v5621
  %v5623 = vrot.slane %v5609, %v5622
  %v5624 = vcombine.low %v5559, %v5575
  %v5625 = vcombine.high %v5559, %v5575
  %v5627 = vunpack.c.l.s4 1934713408
  %v5628 = vunpack.c.0.s8 %v5627
  %v5629 = vlaneseq
  %v5630 = vshrl.u32 %v5629, 7
  %v5631 = vsub.s32 %v5628, %v5630
  %v5632 = vrot.slane %v5624, %v5631
  %v5634 = vunpack.c.l.s4 1934713408
  %v5635 = vunpack.c.0.s8 %v5634
  %v5636 = vlaneseq
  %v5637 = vshrl.u32 %v5636, 7
  %v5638 = vsub.s32 %v5635, %v5637
  %v5639 = vrot.slane %v5625, %v5638
  %v5640 = vcombine.low %v5584, %v5616
  %v5641 = vcombine.high %v5584, %v5616
  %v5642 = vcombine.low %v5591, %v5623
  %v5643 = vcombine.high %v5591, %v5623
  %v5644 = vcombine.low %v5600, %v5632
  %v5645 = vcombine.high %v5600, %v5632
  %v5646 = vcombine.low %v5607, %v5639
  %v5647 = vcombine.high %v5607, %v5639
  %v5648 = vcombine.low %v1354, %v1376
  %v5649 = vcombine.high %v1354, %v1376
  %v5651 = vunpack.c.l.s4 1983009808
  %v5652 = vunpack.c.0.s8 %v5651
  %v5653 = vlaneseq
  %v5654 = vshrl.u32 %v5653, 7
  %v5655 = vsub.s32 %v5652, %v5654
  %v5656 = vrot.slane %v5648, %v5655
  %v5658 = vunpack.c.l.s4 1983009808
  %v5659 = vunpack.c.0.s8 %v5658
  %v5660 = vlaneseq
  %v5661 = vshrl.u32 %v5660, 7
  %v5662 = vsub.s32 %v5659, %v5661
  %v5663 = vrot.slane %v5649, %v5662
  %v5664 = vcombine.low %v1365, %v1387
  %v5665 = vcombine.high %v1365, %v1387
  %v5667 = vunpack.c.l.s4 1983009808
  %v5668 = vunpack.c.0.s8 %v5667
  %v5669 = vlaneseq
  %v5670 = vshrl.u32 %v5669, 7
  %v5671 = vsub.s32 %v5668, %v5670
  %v5672 = vrot.slane %v5664, %v5671
  %v5674 = vunpack.c.l.s4 1983009808
  %v5675 = vunpack.c.0.s8 %v5674
  %v5676 = vlaneseq
  %v5677 = vshrl.u32 %v5676, 7
  %v5678 = vsub.s32 %v5675, %v5677
  %v5679 = vrot.slane %v5665, %v5678
  %v5680 = vcombine.low %v1398, %v1420
  %v5681 = vcombine.high %v1398, %v1420
  %v5683 = vunpack.c.l.s4 1983009808
  %v5684 = vunpack.c.0.s8 %v5683
  %v5685 = vlaneseq
  %v5686 = vshrl.u32 %v5685, 7
  %v5687 = vsub.s32 %v5684, %v5686
  %v5688 = vrot.slane %v5680, %v5687
  %v5690 = vunpack.c.l.s4 1983009808
  %v5691 = vunpack.c.0.s8 %v5690
  %v5692 = vlaneseq
  %v5693 = vshrl.u32 %v5692, 7
  %v5694 = vsub.s32 %v5691, %v5693
  %v5695 = vrot.slane %v5681, %v5694
  %v5696 = vcombine.low %v1409, %v1431
  %v5697 = vcombine.high %v1409, %v1431
  %v5699 = vunpack.c.l.s4 1983009808
  %v5700 = vunpack.c.0.s8 %v5699
  %v5701 = vlaneseq
  %v5702 = vshrl.u32 %v5701, 7
  %v5703 = vsub.s32 %v5700, %v5702
  %v5704 = vrot.slane %v5696, %v5703
  %v5706 = vunpack.c.l.s4 1983009808
  %v5707 = vunpack.c.0.s8 %v5706
  %v5708 = vlaneseq
  %v5709 = vshrl.u32 %v5708, 7
  %v5710 = vsub.s32 %v5707, %v5709
  %v5711 = vrot.slane %v5697, %v5710
  %v5712 = vcombine.low %v5656, %v5672
  %v5713 = vcombine.high %v5656, %v5672
  %v5715 = vunpack.c.l.s4 1934713408
  %v5716 = vunpack.c.0.s8 %v5715
  %v5717 = vlaneseq
  %v5718 = vshrl.u32 %v5717, 7
  %v5719 = vsub.s32 %v5716, %v5718
  %v5720 = vrot.slane %v5712, %v5719
  %v5722 = vunpack.c.l.s4 1934713408
  %v5723 = vunpack.c.0.s8 %v5722
  %v5724 = vlaneseq
  %v5725 = vshrl.u32 %v5724, 7
  %v5726 = vsub.s32 %v5723, %v5725
  %v5727 = vrot.slane %v5713, %v5726
  %v5728 = vcombine.low %v5663, %v5679
  %v5729 = vcombine.high %v5663, %v5679
  %v5731 = vunpack.c.l.s4 1934713408
  %v5732 = vunpack.c.0.s8 %v5731
  %v5733 = vlaneseq
  %v5734 = vshrl.u32 %v5733, 7
  %v5735 = vsub.s32 %v5732, %v5734
  %v5736 = vrot.slane %v5728, %v5735
  %v5738 = vunpack.c.l.s4 1934713408
  %v5739 = vunpack.c.0.s8 %v5738
  %v5740 = vlaneseq
  %v5741 = vshrl.u32 %v5740, 7
  %v5742 = vsub.s32 %v5739, %v5741
  %v5743 = vrot.slane %v5729, %v5742
  %v5744 = vcombine.low %v5688, %v5704
  %v5745 = vcombine.high %v5688, %v5704
  %v5747 = vunpack.c.l.s4 1934713408
  %v5748 = vunpack.c.0.s8 %v5747
  %v5749 = vlaneseq
  %v5750 = vshrl.u32 %v5749, 7
  %v5751 = vsub.s32 %v5748, %v5750
  %v5752 = vrot.slane %v5744, %v5751
  %v5754 = vunpack.c.l.s4 1934713408
  %v5755 = vunpack.c.0.s8 %v5754
  %v5756 = vlaneseq
  %v5757 = vshrl.u32 %v5756, 7
  %v5758 = vsub.s32 %v5755, %v5757
  %v5759 = vrot.slane %v5745, %v5758
  %v5760 = vcombine.low %v5695, %v5711
  %v5761 = vcombine.high %v5695, %v5711
  %v5763 = vunpack.c.l.s4 1934713408
  %v5764 = vunpack.c.0.s8 %v5763
  %v5765 = vlaneseq
  %v5766 = vshrl.u32 %v5765, 7
  %v5767 = vsub.s32 %v5764, %v5766
  %v5768 = vrot.slane %v5760, %v5767
  %v5770 = vunpack.c.l.s4 1934713408
  %v5771 = vunpack.c.0.s8 %v5770
  %v5772 = vlaneseq
  %v5773 = vshrl.u32 %v5772, 7
  %v5774 = vsub.s32 %v5771, %v5773
  %v5775 = vrot.slane %v5761, %v5774
  %v5776 = vcombine.low %v5720, %v5752
  %v5777 = vcombine.high %v5720, %v5752
  %v5778 = vcombine.low %v5727, %v5759
  %v5779 = vcombine.high %v5727, %v5759
  %v5780 = vcombine.low %v5736, %v5768
  %v5781 = vcombine.high %v5736, %v5768
  %v5782 = vcombine.low %v5743, %v5775
  %v5783 = vcombine.high %v5743, %v5775
  %5800 = vrot.lane.b32.xlu0 %v1561, 2
  %v5801 = vpop.permute.xlu0 %5800
  %5802 = vrot.lane.b32.xlu0 %v1697, 2
  %v5803 = vpop.permute.xlu0 %5802
  %5804 = vrot.lane.b32.xlu0 %v1833, 2
  %v5805 = vpop.permute.xlu0 %5804
  %5806 = vrot.lane.b32.xlu0 %v1969, 2
  %v5807 = vpop.permute.xlu0 %5806
  %5808 = vrot.lane.b32.xlu0 %v2105, 2
  %v5809 = vpop.permute.xlu0 %5808
  %5810 = vrot.lane.b32.xlu0 %v2241, 2
  %v5811 = vpop.permute.xlu0 %5810
  %5812 = vrot.lane.b32.xlu0 %v2377, 2
  %v5813 = vpop.permute.xlu0 %5812
  %5814 = vrot.lane.b32.xlu0 %v2513, 2
  %v5815 = vpop.permute.xlu0 %5814
  %5816 = vrot.lane.b32.xlu0 %v2649, 2
  %v5817 = vpop.permute.xlu0 %5816
  %5818 = vrot.lane.b32.xlu0 %v2785, 2
  %v5819 = vpop.permute.xlu0 %5818
  %5820 = vrot.lane.b32.xlu0 %v2921, 2
  %v5821 = vpop.permute.xlu0 %5820
  %5822 = vrot.lane.b32.xlu0 %v3057, 2
  %v5823 = vpop.permute.xlu0 %5822
  %5824 = vrot.lane.b32.xlu0 %v3193, 2
  %v5825 = vpop.permute.xlu0 %5824
  %5826 = vrot.lane.b32.xlu0 %v3329, 2
  %v5827 = vpop.permute.xlu0 %5826
  %5828 = vrot.lane.b32.xlu0 %v3465, 2
  %v5829 = vpop.permute.xlu0 %5828
  %5830 = vrot.lane.b32.xlu0 %v3601, 2
  %v5831 = vpop.permute.xlu0 %5830
  %5864 = vrot.lane.b32.xlu0 %v1562, 4
  %v5865 = vpop.permute.xlu0 %5864
  %5866 = vrot.lane.b32.xlu0 %v1698, 4
  %v5867 = vpop.permute.xlu0 %5866
  %5868 = vrot.lane.b32.xlu0 %v1834, 4
  %v5869 = vpop.permute.xlu0 %5868
  %5870 = vrot.lane.b32.xlu0 %v1970, 4
  %v5871 = vpop.permute.xlu0 %5870
  %5872 = vrot.lane.b32.xlu0 %v2106, 4
  %v5873 = vpop.permute.xlu0 %5872
  %5874 = vrot.lane.b32.xlu0 %v2242, 4
  %v5875 = vpop.permute.xlu0 %5874
  %5876 = vrot.lane.b32.xlu0 %v2378, 4
  %v5877 = vpop.permute.xlu0 %5876
  %5878 = vrot.lane.b32.xlu0 %v2514, 4
  %v5879 = vpop.permute.xlu0 %5878
  %5880 = vrot.lane.b32.xlu0 %v2650, 4
  %v5881 = vpop.permute.xlu0 %5880
  %5882 = vrot.lane.b32.xlu0 %v2786, 4
  %v5883 = vpop.permute.xlu0 %5882
  %5884 = vrot.lane.b32.xlu0 %v2922, 4
  %v5885 = vpop.permute.xlu0 %5884
  %5886 = vrot.lane.b32.xlu0 %v3058, 4
  %v5887 = vpop.permute.xlu0 %5886
  %5888 = vrot.lane.b32.xlu0 %v3194, 4
  %v5889 = vpop.permute.xlu0 %5888
  %5890 = vrot.lane.b32.xlu0 %v3330, 4
  %v5891 = vpop.permute.xlu0 %5890
  %5892 = vrot.lane.b32.xlu0 %v3466, 4
  %v5893 = vpop.permute.xlu0 %5892
  %5894 = vrot.lane.b32.xlu0 %v3602, 4
  %v5895 = vpop.permute.xlu0 %5894
  %5928 = vrot.lane.b32.xlu0 %v1563, 6
  %v5929 = vpop.permute.xlu0 %5928
  %5930 = vrot.lane.b32.xlu0 %v1699, 6
  %v5931 = vpop.permute.xlu0 %5930
  %5932 = vrot.lane.b32.xlu0 %v1835, 6
  %v5933 = vpop.permute.xlu0 %5932
  %5934 = vrot.lane.b32.xlu0 %v1971, 6
  %v5935 = vpop.permute.xlu0 %5934
  %5936 = vrot.lane.b32.xlu0 %v2107, 6
  %v5937 = vpop.permute.xlu0 %5936
  %5938 = vrot.lane.b32.xlu0 %v2243, 6
  %v5939 = vpop.permute.xlu0 %5938
  %5940 = vrot.lane.b32.xlu0 %v2379, 6
  %v5941 = vpop.permute.xlu0 %5940
  %5942 = vrot.lane.b32.xlu0 %v2515, 6
  %v5943 = vpop.permute.xlu0 %5942
  %5944 = vrot.lane.b32.xlu0 %v2651, 6
  %v5945 = vpop.permute.xlu0 %5944
  %5946 = vrot.lane.b32.xlu0 %v2787, 6
  %v5947 = vpop.permute.xlu0 %5946
  %5948 = vrot.lane.b32.xlu0 %v2923, 6
  %v5949 = vpop.permute.xlu0 %5948
  %5950 = vrot.lane.b32.xlu0 %v3059, 6
  %v5951 = vpop.permute.xlu0 %5950
  %5952 = vrot.lane.b32.xlu0 %v3195, 6
  %v5953 = vpop.permute.xlu0 %5952
  %5954 = vrot.lane.b32.xlu0 %v3331, 6
  %v5955 = vpop.permute.xlu0 %5954
  %5956 = vrot.lane.b32.xlu0 %v3467, 6
  %v5957 = vpop.permute.xlu0 %5956
  %5958 = vrot.lane.b32.xlu0 %v3603, 6
  %v5959 = vpop.permute.xlu0 %5958
  %5992 = vrot.lane.b32.xlu0 %v1564, 8
  %v5993 = vpop.permute.xlu0 %5992
  %5994 = vrot.lane.b32.xlu0 %v1700, 8
  %v5995 = vpop.permute.xlu0 %5994
  %5996 = vrot.lane.b32.xlu0 %v1836, 8
  %v5997 = vpop.permute.xlu0 %5996
  %5998 = vrot.lane.b32.xlu0 %v1972, 8
  %v5999 = vpop.permute.xlu0 %5998
  %6000 = vrot.lane.b32.xlu0 %v2108, 8
  %v6001 = vpop.permute.xlu0 %6000
  %6002 = vrot.lane.b32.xlu0 %v2244, 8
  %v6003 = vpop.permute.xlu0 %6002
  %6004 = vrot.lane.b32.xlu0 %v2380, 8
  %v6005 = vpop.permute.xlu0 %6004
  %6006 = vrot.lane.b32.xlu0 %v2516, 8
  %v6007 = vpop.permute.xlu0 %6006
  %6008 = vrot.lane.b32.xlu0 %v2652, 8
  %v6009 = vpop.permute.xlu0 %6008
  %6010 = vrot.lane.b32.xlu0 %v2788, 8
  %v6011 = vpop.permute.xlu0 %6010
  %6012 = vrot.lane.b32.xlu0 %v2924, 8
  %v6013 = vpop.permute.xlu0 %6012
  %6014 = vrot.lane.b32.xlu0 %v3060, 8
  %v6015 = vpop.permute.xlu0 %6014
  %6016 = vrot.lane.b32.xlu0 %v3196, 8
  %v6017 = vpop.permute.xlu0 %6016
  %6018 = vrot.lane.b32.xlu0 %v3332, 8
  %v6019 = vpop.permute.xlu0 %6018
  %6020 = vrot.lane.b32.xlu0 %v3468, 8
  %v6021 = vpop.permute.xlu0 %6020
  %6022 = vrot.lane.b32.xlu0 %v3604, 8
  %v6023 = vpop.permute.xlu0 %6022
  %6056 = vrot.lane.b32.xlu0 %v1565, 10
  %v6057 = vpop.permute.xlu0 %6056
  %6058 = vrot.lane.b32.xlu0 %v1701, 10
  %v6059 = vpop.permute.xlu0 %6058
  %6060 = vrot.lane.b32.xlu0 %v1837, 10
  %v6061 = vpop.permute.xlu0 %6060
  %6062 = vrot.lane.b32.xlu0 %v1973, 10
  %v6063 = vpop.permute.xlu0 %6062
  %6064 = vrot.lane.b32.xlu0 %v2109, 10
  %v6065 = vpop.permute.xlu0 %6064
  %6066 = vrot.lane.b32.xlu0 %v2245, 10
  %v6067 = vpop.permute.xlu0 %6066
  %6068 = vrot.lane.b32.xlu0 %v2381, 10
  %v6069 = vpop.permute.xlu0 %6068
  %6070 = vrot.lane.b32.xlu0 %v2517, 10
  %v6071 = vpop.permute.xlu0 %6070
  %6072 = vrot.lane.b32.xlu0 %v2653, 10
  %v6073 = vpop.permute.xlu0 %6072
  %6074 = vrot.lane.b32.xlu0 %v2789, 10
  %v6075 = vpop.permute.xlu0 %6074
  %6076 = vrot.lane.b32.xlu0 %v2925, 10
  %v6077 = vpop.permute.xlu0 %6076
  %6078 = vrot.lane.b32.xlu0 %v3061, 10
  %v6079 = vpop.permute.xlu0 %6078
  %6080 = vrot.lane.b32.xlu0 %v3197, 10
  %v6081 = vpop.permute.xlu0 %6080
  %6082 = vrot.lane.b32.xlu0 %v3333, 10
  %v6083 = vpop.permute.xlu0 %6082
  %6084 = vrot.lane.b32.xlu0 %v3469, 10
  %v6085 = vpop.permute.xlu0 %6084
  %6086 = vrot.lane.b32.xlu0 %v3605, 10
  %v6087 = vpop.permute.xlu0 %6086
  %6120 = vrot.lane.b32.xlu0 %v1566, 12
  %v6121 = vpop.permute.xlu0 %6120
  %6122 = vrot.lane.b32.xlu0 %v1702, 12
  %v6123 = vpop.permute.xlu0 %6122
  %6124 = vrot.lane.b32.xlu0 %v1838, 12
  %v6125 = vpop.permute.xlu0 %6124
  %6126 = vrot.lane.b32.xlu0 %v1974, 12
  %v6127 = vpop.permute.xlu0 %6126
  %6128 = vrot.lane.b32.xlu0 %v2110, 12
  %v6129 = vpop.permute.xlu0 %6128
  %6130 = vrot.lane.b32.xlu0 %v2246, 12
  %v6131 = vpop.permute.xlu0 %6130
  %6132 = vrot.lane.b32.xlu0 %v2382, 12
  %v6133 = vpop.permute.xlu0 %6132
  %6134 = vrot.lane.b32.xlu0 %v2518, 12
  %v6135 = vpop.permute.xlu0 %6134
  %6136 = vrot.lane.b32.xlu0 %v2654, 12
  %v6137 = vpop.permute.xlu0 %6136
  %6138 = vrot.lane.b32.xlu0 %v2790, 12
  %v6139 = vpop.permute.xlu0 %6138
  %6140 = vrot.lane.b32.xlu0 %v2926, 12
  %v6141 = vpop.permute.xlu0 %6140
  %6142 = vrot.lane.b32.xlu0 %v3062, 12
  %v6143 = vpop.permute.xlu0 %6142
  %6144 = vrot.lane.b32.xlu0 %v3198, 12
  %v6145 = vpop.permute.xlu0 %6144
  %6146 = vrot.lane.b32.xlu0 %v3334, 12
  %v6147 = vpop.permute.xlu0 %6146
  %6148 = vrot.lane.b32.xlu0 %v3470, 12
  %v6149 = vpop.permute.xlu0 %6148
  %6150 = vrot.lane.b32.xlu0 %v3606, 12
  %v6151 = vpop.permute.xlu0 %6150
  %6184 = vrot.lane.b32.xlu0 %v1567, 14
  %v6185 = vpop.permute.xlu0 %6184
  %6186 = vrot.lane.b32.xlu0 %v1703, 14
  %v6187 = vpop.permute.xlu0 %6186
  %6188 = vrot.lane.b32.xlu0 %v1839, 14
  %v6189 = vpop.permute.xlu0 %6188
  %6190 = vrot.lane.b32.xlu0 %v1975, 14
  %v6191 = vpop.permute.xlu0 %6190
  %6192 = vrot.lane.b32.xlu0 %v2111, 14
  %v6193 = vpop.permute.xlu0 %6192
  %6194 = vrot.lane.b32.xlu0 %v2247, 14
  %v6195 = vpop.permute.xlu0 %6194
  %6196 = vrot.lane.b32.xlu0 %v2383, 14
  %v6197 = vpop.permute.xlu0 %6196
  %6198 = vrot.lane.b32.xlu0 %v2519, 14
  %v6199 = vpop.permute.xlu0 %6198
  %6200 = vrot.lane.b32.xlu0 %v2655, 14
  %v6201 = vpop.permute.xlu0 %6200
  %6202 = vrot.lane.b32.xlu0 %v2791, 14
  %v6203 = vpop.permute.xlu0 %6202
  %6204 = vrot.lane.b32.xlu0 %v2927, 14
  %v6205 = vpop.permute.xlu0 %6204
  %6206 = vrot.lane.b32.xlu0 %v3063, 14
  %v6207 = vpop.permute.xlu0 %6206
  %6208 = vrot.lane.b32.xlu0 %v3199, 14
  %v6209 = vpop.permute.xlu0 %6208
  %6210 = vrot.lane.b32.xlu0 %v3335, 14
  %v6211 = vpop.permute.xlu0 %6210
  %6212 = vrot.lane.b32.xlu0 %v3471, 14
  %v6213 = vpop.permute.xlu0 %6212
  %6214 = vrot.lane.b32.xlu0 %v3607, 14
  %v6215 = vpop.permute.xlu0 %6214
  %6248 = vrot.lane.b32.xlu0 %v3736, 16
  %v6249 = vpop.permute.xlu0 %6248
  %6250 = vrot.lane.b32.xlu0 %v3872, 16
  %v6251 = vpop.permute.xlu0 %6250
  %6252 = vrot.lane.b32.xlu0 %v4008, 16
  %v6253 = vpop.permute.xlu0 %6252
  %6254 = vrot.lane.b32.xlu0 %v4144, 16
  %v6255 = vpop.permute.xlu0 %6254
  %6256 = vrot.lane.b32.xlu0 %v4280, 16
  %v6257 = vpop.permute.xlu0 %6256
  %6258 = vrot.lane.b32.xlu0 %v4416, 16
  %v6259 = vpop.permute.xlu0 %6258
  %6260 = vrot.lane.b32.xlu0 %v4552, 16
  %v6261 = vpop.permute.xlu0 %6260
  %6262 = vrot.lane.b32.xlu0 %v4688, 16
  %v6263 = vpop.permute.xlu0 %6262
  %6264 = vrot.lane.b32.xlu0 %v4824, 16
  %v6265 = vpop.permute.xlu0 %6264
  %6266 = vrot.lane.b32.xlu0 %v4960, 16
  %v6267 = vpop.permute.xlu0 %6266
  %6268 = vrot.lane.b32.xlu0 %v5096, 16
  %v6269 = vpop.permute.xlu0 %6268
  %6270 = vrot.lane.b32.xlu0 %v5232, 16
  %v6271 = vpop.permute.xlu0 %6270
  %6272 = vrot.lane.b32.xlu0 %v5368, 16
  %v6273 = vpop.permute.xlu0 %6272
  %6274 = vrot.lane.b32.xlu0 %v5504, 16
  %v6275 = vpop.permute.xlu0 %6274
  %6276 = vrot.lane.b32.xlu0 %v5640, 16
  %v6277 = vpop.permute.xlu0 %6276
  %6278 = vrot.lane.b32.xlu0 %v5776, 16
  %v6279 = vpop.permute.xlu0 %6278
  %6312 = vrot.lane.b32.xlu0 %v3737, 18
  %v6313 = vpop.permute.xlu0 %6312
  %6314 = vrot.lane.b32.xlu0 %v3873, 18
  %v6315 = vpop.permute.xlu0 %6314
  %6316 = vrot.lane.b32.xlu0 %v4009, 18
  %v6317 = vpop.permute.xlu0 %6316
  %6318 = vrot.lane.b32.xlu0 %v4145, 18
  %v6319 = vpop.permute.xlu0 %6318
  %6320 = vrot.lane.b32.xlu0 %v4281, 18
  %v6321 = vpop.permute.xlu0 %6320
  %6322 = vrot.lane.b32.xlu0 %v4417, 18
  %v6323 = vpop.permute.xlu0 %6322
  %6324 = vrot.lane.b32.xlu0 %v4553, 18
  %v6325 = vpop.permute.xlu0 %6324
  %6326 = vrot.lane.b32.xlu0 %v4689, 18
  %v6327 = vpop.permute.xlu0 %6326
  %6328 = vrot.lane.b32.xlu0 %v4825, 18
  %v6329 = vpop.permute.xlu0 %6328
  %6330 = vrot.lane.b32.xlu0 %v4961, 18
  %v6331 = vpop.permute.xlu0 %6330
  %6332 = vrot.lane.b32.xlu0 %v5097, 18
  %v6333 = vpop.permute.xlu0 %6332
  %6334 = vrot.lane.b32.xlu0 %v5233, 18
  %v6335 = vpop.permute.xlu0 %6334
  %6336 = vrot.lane.b32.xlu0 %v5369, 18
  %v6337 = vpop.permute.xlu0 %6336
  %6338 = vrot.lane.b32.xlu0 %v5505, 18
  %v6339 = vpop.permute.xlu0 %6338
  %6340 = vrot.lane.b32.xlu0 %v5641, 18
  %v6341 = vpop.permute.xlu0 %6340
  %6342 = vrot.lane.b32.xlu0 %v5777, 18
  %v6343 = vpop.permute.xlu0 %6342
  %6376 = vrot.lane.b32.xlu0 %v3738, 20
  %v6377 = vpop.permute.xlu0 %6376
  %6378 = vrot.lane.b32.xlu0 %v3874, 20
  %v6379 = vpop.permute.xlu0 %6378
  %6380 = vrot.lane.b32.xlu0 %v4010, 20
  %v6381 = vpop.permute.xlu0 %6380
  %6382 = vrot.lane.b32.xlu0 %v4146, 20
  %v6383 = vpop.permute.xlu0 %6382
  %6384 = vrot.lane.b32.xlu0 %v4282, 20
  %v6385 = vpop.permute.xlu0 %6384
  %6386 = vrot.lane.b32.xlu0 %v4418, 20
  %v6387 = vpop.permute.xlu0 %6386
  %6388 = vrot.lane.b32.xlu0 %v4554, 20
  %v6389 = vpop.permute.xlu0 %6388
  %6390 = vrot.lane.b32.xlu0 %v4690, 20
  %v6391 = vpop.permute.xlu0 %6390
  %6392 = vrot.lane.b32.xlu0 %v4826, 20
  %v6393 = vpop.permute.xlu0 %6392
  %6394 = vrot.lane.b32.xlu0 %v4962, 20
  %v6395 = vpop.permute.xlu0 %6394
  %6396 = vrot.lane.b32.xlu0 %v5098, 20
  %v6397 = vpop.permute.xlu0 %6396
  %6398 = vrot.lane.b32.xlu0 %v5234, 20
  %v6399 = vpop.permute.xlu0 %6398
  %6400 = vrot.lane.b32.xlu0 %v5370, 20
  %v6401 = vpop.permute.xlu0 %6400
  %6402 = vrot.lane.b32.xlu0 %v5506, 20
  %v6403 = vpop.permute.xlu0 %6402
  %6404 = vrot.lane.b32.xlu0 %v5642, 20
  %v6405 = vpop.permute.xlu0 %6404
  %6406 = vrot.lane.b32.xlu0 %v5778, 20
  %v6407 = vpop.permute.xlu0 %6406
  %6440 = vrot.lane.b32.xlu0 %v3739, 22
  %v6441 = vpop.permute.xlu0 %6440
  %6442 = vrot.lane.b32.xlu0 %v3875, 22
  %v6443 = vpop.permute.xlu0 %6442
  %6444 = vrot.lane.b32.xlu0 %v4011, 22
  %v6445 = vpop.permute.xlu0 %6444
  %6446 = vrot.lane.b32.xlu0 %v4147, 22
  %v6447 = vpop.permute.xlu0 %6446
  %6448 = vrot.lane.b32.xlu0 %v4283, 22
  %v6449 = vpop.permute.xlu0 %6448
  %6450 = vrot.lane.b32.xlu0 %v4419, 22
  %v6451 = vpop.permute.xlu0 %6450
  %6452 = vrot.lane.b32.xlu0 %v4555, 22
  %v6453 = vpop.permute.xlu0 %6452
  %6454 = vrot.lane.b32.xlu0 %v4691, 22
  %v6455 = vpop.permute.xlu0 %6454
  %6456 = vrot.lane.b32.xlu0 %v4827, 22
  %v6457 = vpop.permute.xlu0 %6456
  %6458 = vrot.lane.b32.xlu0 %v4963, 22
  %v6459 = vpop.permute.xlu0 %6458
  %6460 = vrot.lane.b32.xlu0 %v5099, 22
  %v6461 = vpop.permute.xlu0 %6460
  %6462 = vrot.lane.b32.xlu0 %v5235, 22
  %v6463 = vpop.permute.xlu0 %6462
  %6464 = vrot.lane.b32.xlu0 %v5371, 22
  %v6465 = vpop.permute.xlu0 %6464
  %6466 = vrot.lane.b32.xlu0 %v5507, 22
  %v6467 = vpop.permute.xlu0 %6466
  %6468 = vrot.lane.b32.xlu0 %v5643, 22
  %v6469 = vpop.permute.xlu0 %6468
  %6470 = vrot.lane.b32.xlu0 %v5779, 22
  %v6471 = vpop.permute.xlu0 %6470
  %6504 = vrot.lane.b32.xlu0 %v3740, 24
  %v6505 = vpop.permute.xlu0 %6504
  %6506 = vrot.lane.b32.xlu0 %v3876, 24
  %v6507 = vpop.permute.xlu0 %6506
  %6508 = vrot.lane.b32.xlu0 %v4012, 24
  %v6509 = vpop.permute.xlu0 %6508
  %6510 = vrot.lane.b32.xlu0 %v4148, 24
  %v6511 = vpop.permute.xlu0 %6510
  %6512 = vrot.lane.b32.xlu0 %v4284, 24
  %v6513 = vpop.permute.xlu0 %6512
  %6514 = vrot.lane.b32.xlu0 %v4420, 24
  %v6515 = vpop.permute.xlu0 %6514
  %6516 = vrot.lane.b32.xlu0 %v4556, 24
  %v6517 = vpop.permute.xlu0 %6516
  %6518 = vrot.lane.b32.xlu0 %v4692, 24
  %v6519 = vpop.permute.xlu0 %6518
  %6520 = vrot.lane.b32.xlu0 %v4828, 24
  %v6521 = vpop.permute.xlu0 %6520
  %6522 = vrot.lane.b32.xlu0 %v4964, 24
  %v6523 = vpop.permute.xlu0 %6522
  %6524 = vrot.lane.b32.xlu0 %v5100, 24
  %v6525 = vpop.permute.xlu0 %6524
  %6526 = vrot.lane.b32.xlu0 %v5236, 24
  %v6527 = vpop.permute.xlu0 %6526
  %6528 = vrot.lane.b32.xlu0 %v5372, 24
  %v6529 = vpop.permute.xlu0 %6528
  %6530 = vrot.lane.b32.xlu0 %v5508, 24
  %v6531 = vpop.permute.xlu0 %6530
  %6532 = vrot.lane.b32.xlu0 %v5644, 24
  %v6533 = vpop.permute.xlu0 %6532
  %6534 = vrot.lane.b32.xlu0 %v5780, 24
  %v6535 = vpop.permute.xlu0 %6534
  %6568 = vrot.lane.b32.xlu0 %v3741, 26
  %v6569 = vpop.permute.xlu0 %6568
  %6570 = vrot.lane.b32.xlu0 %v3877, 26
  %v6571 = vpop.permute.xlu0 %6570
  %6572 = vrot.lane.b32.xlu0 %v4013, 26
  %v6573 = vpop.permute.xlu0 %6572
  %6574 = vrot.lane.b32.xlu0 %v4149, 26
  %v6575 = vpop.permute.xlu0 %6574
  %6576 = vrot.lane.b32.xlu0 %v4285, 26
  %v6577 = vpop.permute.xlu0 %6576
  %6578 = vrot.lane.b32.xlu0 %v4421, 26
  %v6579 = vpop.permute.xlu0 %6578
  %6580 = vrot.lane.b32.xlu0 %v4557, 26
  %v6581 = vpop.permute.xlu0 %6580
  %6582 = vrot.lane.b32.xlu0 %v4693, 26
  %v6583 = vpop.permute.xlu0 %6582
  %6584 = vrot.lane.b32.xlu0 %v4829, 26
  %v6585 = vpop.permute.xlu0 %6584
  %6586 = vrot.lane.b32.xlu0 %v4965, 26
  %v6587 = vpop.permute.xlu0 %6586
  %6588 = vrot.lane.b32.xlu0 %v5101, 26
  %v6589 = vpop.permute.xlu0 %6588
  %6590 = vrot.lane.b32.xlu0 %v5237, 26
  %v6591 = vpop.permute.xlu0 %6590
  %6592 = vrot.lane.b32.xlu0 %v5373, 26
  %v6593 = vpop.permute.xlu0 %6592
  %6594 = vrot.lane.b32.xlu0 %v5509, 26
  %v6595 = vpop.permute.xlu0 %6594
  %6596 = vrot.lane.b32.xlu0 %v5645, 26
  %v6597 = vpop.permute.xlu0 %6596
  %6598 = vrot.lane.b32.xlu0 %v5781, 26
  %v6599 = vpop.permute.xlu0 %6598
  %6632 = vrot.lane.b32.xlu0 %v3742, 28
  %v6633 = vpop.permute.xlu0 %6632
  %6634 = vrot.lane.b32.xlu0 %v3878, 28
  %v6635 = vpop.permute.xlu0 %6634
  %6636 = vrot.lane.b32.xlu0 %v4014, 28
  %v6637 = vpop.permute.xlu0 %6636
  %6638 = vrot.lane.b32.xlu0 %v4150, 28
  %v6639 = vpop.permute.xlu0 %6638
  %6640 = vrot.lane.b32.xlu0 %v4286, 28
  %v6641 = vpop.permute.xlu0 %6640
  %6642 = vrot.lane.b32.xlu0 %v4422, 28
  %v6643 = vpop.permute.xlu0 %6642
  %6644 = vrot.lane.b32.xlu0 %v4558, 28
  %v6645 = vpop.permute.xlu0 %6644
  %6646 = vrot.lane.b32.xlu0 %v4694, 28
  %v6647 = vpop.permute.xlu0 %6646
  %6648 = vrot.lane.b32.xlu0 %v4830, 28
  %v6649 = vpop.permute.xlu0 %6648
  %6650 = vrot.lane.b32.xlu0 %v4966, 28
  %v6651 = vpop.permute.xlu0 %6650
  %6652 = vrot.lane.b32.xlu0 %v5102, 28
  %v6653 = vpop.permute.xlu0 %6652
  %6654 = vrot.lane.b32.xlu0 %v5238, 28
  %v6655 = vpop.permute.xlu0 %6654
  %6656 = vrot.lane.b32.xlu0 %v5374, 28
  %v6657 = vpop.permute.xlu0 %6656
  %6658 = vrot.lane.b32.xlu0 %v5510, 28
  %v6659 = vpop.permute.xlu0 %6658
  %6660 = vrot.lane.b32.xlu0 %v5646, 28
  %v6661 = vpop.permute.xlu0 %6660
  %6662 = vrot.lane.b32.xlu0 %v5782, 28
  %v6663 = vpop.permute.xlu0 %6662
  %6696 = vrot.lane.b32.xlu0 %v3743, 30
  %v6697 = vpop.permute.xlu0 %6696
  %6698 = vrot.lane.b32.xlu0 %v3879, 30
  %v6699 = vpop.permute.xlu0 %6698
  %6700 = vrot.lane.b32.xlu0 %v4015, 30
  %v6701 = vpop.permute.xlu0 %6700
  %6702 = vrot.lane.b32.xlu0 %v4151, 30
  %v6703 = vpop.permute.xlu0 %6702
  %6704 = vrot.lane.b32.xlu0 %v4287, 30
  %v6705 = vpop.permute.xlu0 %6704
  %6706 = vrot.lane.b32.xlu0 %v4423, 30
  %v6707 = vpop.permute.xlu0 %6706
  %6708 = vrot.lane.b32.xlu0 %v4559, 30
  %v6709 = vpop.permute.xlu0 %6708
  %6710 = vrot.lane.b32.xlu0 %v4695, 30
  %v6711 = vpop.permute.xlu0 %6710
  %6712 = vrot.lane.b32.xlu0 %v4831, 30
  %v6713 = vpop.permute.xlu0 %6712
  %6714 = vrot.lane.b32.xlu0 %v4967, 30
  %v6715 = vpop.permute.xlu0 %6714
  %6716 = vrot.lane.b32.xlu0 %v5103, 30
  %v6717 = vpop.permute.xlu0 %6716
  %6718 = vrot.lane.b32.xlu0 %v5239, 30
  %v6719 = vpop.permute.xlu0 %6718
  %6720 = vrot.lane.b32.xlu0 %v5375, 30
  %v6721 = vpop.permute.xlu0 %6720
  %6722 = vrot.lane.b32.xlu0 %v5511, 30
  %v6723 = vpop.permute.xlu0 %6722
  %6724 = vrot.lane.b32.xlu0 %v5647, 30
  %v6725 = vpop.permute.xlu0 %6724
  %6726 = vrot.lane.b32.xlu0 %v5783, 30
  %v6727 = vpop.permute.xlu0 %6726
  %vm6744 = vcmask 15360
  %v6745 = vsel %vm6744, %v1560, %v5801
  %v6746 = vsel %vm6744, %v1696, %v5803
  %v6747 = vsel %vm6744, %v1832, %v5805
  %v6748 = vsel %vm6744, %v1968, %v5807
  %v6749 = vsel %vm6744, %v2104, %v5809
  %v6750 = vsel %vm6744, %v2240, %v5811
  %v6751 = vsel %vm6744, %v2376, %v5813
  %v6752 = vsel %vm6744, %v2512, %v5815
  %v6753 = vsel %vm6744, %v2648, %v5817
  %v6754 = vsel %vm6744, %v2784, %v5819
  %v6755 = vsel %vm6744, %v2920, %v5821
  %v6756 = vsel %vm6744, %v3056, %v5823
  %v6757 = vsel %vm6744, %v3192, %v5825
  %v6758 = vsel %vm6744, %v3328, %v5827
  %v6759 = vsel %vm6744, %v3464, %v5829
  %v6760 = vsel %vm6744, %v3600, %v5831
  %vm6761 = vcmask 31744
  %v6762 = vsel %vm6761, %v6745, %v5865
  %v6763 = vsel %vm6761, %v6746, %v5867
  %v6764 = vsel %vm6761, %v6747, %v5869
  %v6765 = vsel %vm6761, %v6748, %v5871
  %v6766 = vsel %vm6761, %v6749, %v5873
  %v6767 = vsel %vm6761, %v6750, %v5875
  %v6768 = vsel %vm6761, %v6751, %v5877
  %v6769 = vsel %vm6761, %v6752, %v5879
  %v6770 = vsel %vm6761, %v6753, %v5881
  %v6771 = vsel %vm6761, %v6754, %v5883
  %v6772 = vsel %vm6761, %v6755, %v5885
  %v6773 = vsel %vm6761, %v6756, %v5887
  %v6774 = vsel %vm6761, %v6757, %v5889
  %v6775 = vsel %vm6761, %v6758, %v5891
  %v6776 = vsel %vm6761, %v6759, %v5893
  %v6777 = vsel %vm6761, %v6760, %v5895
  %vm6778 = vcmask 48128
  %v6779 = vsel %vm6778, %v6762, %v5929
  %v6780 = vsel %vm6778, %v6763, %v5931
  %v6781 = vsel %vm6778, %v6764, %v5933
  %v6782 = vsel %vm6778, %v6765, %v5935
  %v6783 = vsel %vm6778, %v6766, %v5937
  %v6784 = vsel %vm6778, %v6767, %v5939
  %v6785 = vsel %vm6778, %v6768, %v5941
  %v6786 = vsel %vm6778, %v6769, %v5943
  %v6787 = vsel %vm6778, %v6770, %v5945
  %v6788 = vsel %vm6778, %v6771, %v5947
  %v6789 = vsel %vm6778, %v6772, %v5949
  %v6790 = vsel %vm6778, %v6773, %v5951
  %v6791 = vsel %vm6778, %v6774, %v5953
  %v6792 = vsel %vm6778, %v6775, %v5955
  %v6793 = vsel %vm6778, %v6776, %v5957
  %v6794 = vsel %vm6778, %v6777, %v5959
  %vm6795 = vcmask 64512
  %v6796 = vsel %vm6795, %v6779, %v5993
  %v6797 = vsel %vm6795, %v6780, %v5995
  %v6798 = vsel %vm6795, %v6781, %v5997
  %v6799 = vsel %vm6795, %v6782, %v5999
  %v6800 = vsel %vm6795, %v6783, %v6001
  %v6801 = vsel %vm6795, %v6784, %v6003
  %v6802 = vsel %vm6795, %v6785, %v6005
  %v6803 = vsel %vm6795, %v6786, %v6007
  %v6804 = vsel %vm6795, %v6787, %v6009
  %v6805 = vsel %vm6795, %v6788, %v6011
  %v6806 = vsel %vm6795, %v6789, %v6013
  %v6807 = vsel %vm6795, %v6790, %v6015
  %v6808 = vsel %vm6795, %v6791, %v6017
  %v6809 = vsel %vm6795, %v6792, %v6019
  %v6810 = vsel %vm6795, %v6793, %v6021
  %v6811 = vsel %vm6795, %v6794, %v6023
  %vm6812 = vcmask 80896
  %v6813 = vsel %vm6812, %v6796, %v6057
  %v6814 = vsel %vm6812, %v6797, %v6059
  %v6815 = vsel %vm6812, %v6798, %v6061
  %v6816 = vsel %vm6812, %v6799, %v6063
  %v6817 = vsel %vm6812, %v6800, %v6065
  %v6818 = vsel %vm6812, %v6801, %v6067
  %v6819 = vsel %vm6812, %v6802, %v6069
  %v6820 = vsel %vm6812, %v6803, %v6071
  %v6821 = vsel %vm6812, %v6804, %v6073
  %v6822 = vsel %vm6812, %v6805, %v6075
  %v6823 = vsel %vm6812, %v6806, %v6077
  %v6824 = vsel %vm6812, %v6807, %v6079
  %v6825 = vsel %vm6812, %v6808, %v6081
  %v6826 = vsel %vm6812, %v6809, %v6083
  %v6827 = vsel %vm6812, %v6810, %v6085
  %v6828 = vsel %vm6812, %v6811, %v6087
  %vm6829 = vcmask 97280
  %v6830 = vsel %vm6829, %v6813, %v6121
  %v6831 = vsel %vm6829, %v6814, %v6123
  %v6832 = vsel %vm6829, %v6815, %v6125
  %v6833 = vsel %vm6829, %v6816, %v6127
  %v6834 = vsel %vm6829, %v6817, %v6129
  %v6835 = vsel %vm6829, %v6818, %v6131
  %v6836 = vsel %vm6829, %v6819, %v6133
  %v6837 = vsel %vm6829, %v6820, %v6135
  %v6838 = vsel %vm6829, %v6821, %v6137
  %v6839 = vsel %vm6829, %v6822, %v6139
  %v6840 = vsel %vm6829, %v6823, %v6141
  %v6841 = vsel %vm6829, %v6824, %v6143
  %v6842 = vsel %vm6829, %v6825, %v6145
  %v6843 = vsel %vm6829, %v6826, %v6147
  %v6844 = vsel %vm6829, %v6827, %v6149
  %v6845 = vsel %vm6829, %v6828, %v6151
  %vm6846 = vcmask 113664
  %v6847 = vsel %vm6846, %v6830, %v6185
  %v6848 = vsel %vm6846, %v6831, %v6187
  %v6849 = vsel %vm6846, %v6832, %v6189
  %v6850 = vsel %vm6846, %v6833, %v6191
  %v6851 = vsel %vm6846, %v6834, %v6193
  %v6852 = vsel %vm6846, %v6835, %v6195
  %v6853 = vsel %vm6846, %v6836, %v6197
  %v6854 = vsel %vm6846, %v6837, %v6199
  %v6855 = vsel %vm6846, %v6838, %v6201
  %v6856 = vsel %vm6846, %v6839, %v6203
  %v6857 = vsel %vm6846, %v6840, %v6205
  %v6858 = vsel %vm6846, %v6841, %v6207
  %v6859 = vsel %vm6846, %v6842, %v6209
  %v6860 = vsel %vm6846, %v6843, %v6211
  %v6861 = vsel %vm6846, %v6844, %v6213
  %v6862 = vsel %vm6846, %v6845, %v6215
  %vm6863 = vcmask 130048
  %v6864 = vsel %vm6863, %v6847, %v6249
  %v6865 = vsel %vm6863, %v6848, %v6251
  %v6866 = vsel %vm6863, %v6849, %v6253
  %v6867 = vsel %vm6863, %v6850, %v6255
  %v6868 = vsel %vm6863, %v6851, %v6257
  %v6869 = vsel %vm6863, %v6852, %v6259
  %v6870 = vsel %vm6863, %v6853, %v6261
  %v6871 = vsel %vm6863, %v6854, %v6263
  %v6872 = vsel %vm6863, %v6855, %v6265
  %v6873 = vsel %vm6863, %v6856, %v6267
  %v6874 = vsel %vm6863, %v6857, %v6269
  %v6875 = vsel %vm6863, %v6858, %v6271
  %v6876 = vsel %vm6863, %v6859, %v6273
  %v6877 = vsel %vm6863, %v6860, %v6275
  %v6878 = vsel %vm6863, %v6861, %v6277
  %v6879 = vsel %vm6863, %v6862, %v6279
  %vm6880 = vcmask 146432
  %v6881 = vsel %vm6880, %v6864, %v6313
  %v6882 = vsel %vm6880, %v6865, %v6315
  %v6883 = vsel %vm6880, %v6866, %v6317
  %v6884 = vsel %vm6880, %v6867, %v6319
  %v6885 = vsel %vm6880, %v6868, %v6321
  %v6886 = vsel %vm6880, %v6869, %v6323
  %v6887 = vsel %vm6880, %v6870, %v6325
  %v6888 = vsel %vm6880, %v6871, %v6327
  %v6889 = vsel %vm6880, %v6872, %v6329
  %v6890 = vsel %vm6880, %v6873, %v6331
  %v6891 = vsel %vm6880, %v6874, %v6333
  %v6892 = vsel %vm6880, %v6875, %v6335
  %v6893 = vsel %vm6880, %v6876, %v6337
  %v6894 = vsel %vm6880, %v6877, %v6339
  %v6895 = vsel %vm6880, %v6878, %v6341
  %v6896 = vsel %vm6880, %v6879, %v6343
  %vm6897 = vcmask 162816
  %v6898 = vsel %vm6897, %v6881, %v6377
  %v6899 = vsel %vm6897, %v6882, %v6379
  %v6900 = vsel %vm6897, %v6883, %v6381
  %v6901 = vsel %vm6897, %v6884, %v6383
  %v6902 = vsel %vm6897, %v6885, %v6385
  %v6903 = vsel %vm6897, %v6886, %v6387
  %v6904 = vsel %vm6897, %v6887, %v6389
  %v6905 = vsel %vm6897, %v6888, %v6391
  %v6906 = vsel %vm6897, %v6889, %v6393
  %v6907 = vsel %vm6897, %v6890, %v6395
  %v6908 = vsel %vm6897, %v6891, %v6397
  %v6909 = vsel %vm6897, %v6892, %v6399
  %v6910 = vsel %vm6897, %v6893, %v6401
  %v6911 = vsel %vm6897, %v6894, %v6403
  %v6912 = vsel %vm6897, %v6895, %v6405
  %v6913 = vsel %vm6897, %v6896, %v6407
  %vm6914 = vcmask 179200
  %v6915 = vsel %vm6914, %v6898, %v6441
  %v6916 = vsel %vm6914, %v6899, %v6443
  %v6917 = vsel %vm6914, %v6900, %v6445
  %v6918 = vsel %vm6914, %v6901, %v6447
  %v6919 = vsel %vm6914, %v6902, %v6449
  %v6920 = vsel %vm6914, %v6903, %v6451
  %v6921 = vsel %vm6914, %v6904, %v6453
  %v6922 = vsel %vm6914, %v6905, %v6455
  %v6923 = vsel %vm6914, %v6906, %v6457
  %v6924 = vsel %vm6914, %v6907, %v6459
  %v6925 = vsel %vm6914, %v6908, %v6461
  %v6926 = vsel %vm6914, %v6909, %v6463
  %v6927 = vsel %vm6914, %v6910, %v6465
  %v6928 = vsel %vm6914, %v6911, %v6467
  %v6929 = vsel %vm6914, %v6912, %v6469
  %v6930 = vsel %vm6914, %v6913, %v6471
  %vm6931 = vcmask 195584
  %v6932 = vsel %vm6931, %v6915, %v6505
  %v6933 = vsel %vm6931, %v6916, %v6507
  %v6934 = vsel %vm6931, %v6917, %v6509
  %v6935 = vsel %vm6931, %v6918, %v6511
  %v6936 = vsel %vm6931, %v6919, %v6513
  %v6937 = vsel %vm6931, %v6920, %v6515
  %v6938 = vsel %vm6931, %v6921, %v6517
  %v6939 = vsel %vm6931, %v6922, %v6519
  %v6940 = vsel %vm6931, %v6923, %v6521
  %v6941 = vsel %vm6931, %v6924, %v6523
  %v6942 = vsel %vm6931, %v6925, %v6525
  %v6943 = vsel %vm6931, %v6926, %v6527
  %v6944 = vsel %vm6931, %v6927, %v6529
  %v6945 = vsel %vm6931, %v6928, %v6531
  %v6946 = vsel %vm6931, %v6929, %v6533
  %v6947 = vsel %vm6931, %v6930, %v6535
  %vm6948 = vcmask 211968
  %v6949 = vsel %vm6948, %v6932, %v6569
  %v6950 = vsel %vm6948, %v6933, %v6571
  %v6951 = vsel %vm6948, %v6934, %v6573
  %v6952 = vsel %vm6948, %v6935, %v6575
  %v6953 = vsel %vm6948, %v6936, %v6577
  %v6954 = vsel %vm6948, %v6937, %v6579
  %v6955 = vsel %vm6948, %v6938, %v6581
  %v6956 = vsel %vm6948, %v6939, %v6583
  %v6957 = vsel %vm6948, %v6940, %v6585
  %v6958 = vsel %vm6948, %v6941, %v6587
  %v6959 = vsel %vm6948, %v6942, %v6589
  %v6960 = vsel %vm6948, %v6943, %v6591
  %v6961 = vsel %vm6948, %v6944, %v6593
  %v6962 = vsel %vm6948, %v6945, %v6595
  %v6963 = vsel %vm6948, %v6946, %v6597
  %v6964 = vsel %vm6948, %v6947, %v6599
  %vm6965 = vcmask 228352
  %v6966 = vsel %vm6965, %v6949, %v6633
  %v6967 = vsel %vm6965, %v6950, %v6635
  %v6968 = vsel %vm6965, %v6951, %v6637
  %v6969 = vsel %vm6965, %v6952, %v6639
  %v6970 = vsel %vm6965, %v6953, %v6641
  %v6971 = vsel %vm6965, %v6954, %v6643
  %v6972 = vsel %vm6965, %v6955, %v6645
  %v6973 = vsel %vm6965, %v6956, %v6647
  %v6974 = vsel %vm6965, %v6957, %v6649
  %v6975 = vsel %vm6965, %v6958, %v6651
  %v6976 = vsel %vm6965, %v6959, %v6653
  %v6977 = vsel %vm6965, %v6960, %v6655
  %v6978 = vsel %vm6965, %v6961, %v6657
  %v6979 = vsel %vm6965, %v6962, %v6659
  %v6980 = vsel %vm6965, %v6963, %v6661
  %v6981 = vsel %vm6965, %v6964, %v6663
  %vm6982 = vcmask 244736
  %v6983 = vsel %vm6982, %v6966, %v6697
  %v6984 = vsel %vm6982, %v6967, %v6699
  %v6985 = vsel %vm6982, %v6968, %v6701
  %v6986 = vsel %vm6982, %v6969, %v6703
  %v6987 = vsel %vm6982, %v6970, %v6705
  %v6988 = vsel %vm6982, %v6971, %v6707
  %v6989 = vsel %vm6982, %v6972, %v6709
  %v6990 = vsel %vm6982, %v6973, %v6711
  %v6991 = vsel %vm6982, %v6974, %v6713
  %v6992 = vsel %vm6982, %v6975, %v6715
  %v6993 = vsel %vm6982, %v6976, %v6717
  %v6994 = vsel %vm6982, %v6977, %v6719
  %v6995 = vsel %vm6982, %v6978, %v6721
  %v6996 = vsel %vm6982, %v6979, %v6723
  %v6997 = vsel %vm6982, %v6980, %v6725
  %v6998 = vsel %vm6982, %v6981, %v6727
  %vm6999 = vcmask 261120
  %7000 = vst.msk [vmem:[%s1] sm:$0xff] %vm6999, %v6983
  %7001 = vst.msk [vmem:[%s1 + $0x8] sm:$0xff] %vm6999, %v6984
  %7002 = vst.msk [vmem:[%s1 + $0x10] sm:$0xff] %vm6999, %v6985
  %7003 = vst.msk [vmem:[%s1 + $0x18] sm:$0xff] %vm6999, %v6986
  %7004 = vst.msk [vmem:[%s1 + $0x20] sm:$0xff] %vm6999, %v6987
  %7005 = vst.msk [vmem:[%s1 + $0x28] sm:$0xff] %vm6999, %v6988
  %7006 = vst.msk [vmem:[%s1 + $0x30] sm:$0xff] %vm6999, %v6989
  %7007 = vst.msk [vmem:[%s1 + $0x38] sm:$0xff] %vm6999, %v6990
  %7008 = vst.msk [vmem:[%s1 + $0x40] sm:$0xff] %vm6999, %v6991
  %7009 = vst.msk [vmem:[%s1 + $0x48] sm:$0xff] %vm6999, %v6992
  %7010 = vst.msk [vmem:[%s1 + $0x50] sm:$0xff] %vm6999, %v6993
  %7011 = vst.msk [vmem:[%s1 + $0x58] sm:$0xff] %vm6999, %v6994
  %7012 = vst.msk [vmem:[%s1 + $0x60] sm:$0xff] %vm6999, %v6995
  %7013 = vst.msk [vmem:[%s1 + $0x68] sm:$0xff] %vm6999, %v6996
  %7014 = vst.msk [vmem:[%s1 + $0x70] sm:$0xff] %vm6999, %v6997
  %7015 = vst.msk [vmem:[%s1 + $0x78] sm:$0xff] %vm6999, %v6998
  %7032 = vrot.lane.b32.xlu0 %v6983, 32
  %v7033 = vpop.permute.xlu0 %7032
  %7034 = vrot.lane.b32.xlu0 %v6984, 32
  %v7035 = vpop.permute.xlu0 %7034
  %7036 = vrot.lane.b32.xlu0 %v6985, 32
  %v7037 = vpop.permute.xlu0 %7036
  %7038 = vrot.lane.b32.xlu0 %v6986, 32
  %v7039 = vpop.permute.xlu0 %7038
  %7040 = vrot.lane.b32.xlu0 %v6987, 32
  %v7041 = vpop.permute.xlu0 %7040
  %7042 = vrot.lane.b32.xlu0 %v6988, 32
  %v7043 = vpop.permute.xlu0 %7042
  %7044 = vrot.lane.b32.xlu0 %v6989, 32
  %v7045 = vpop.permute.xlu0 %7044
  %7046 = vrot.lane.b32.xlu0 %v6990, 32
  %v7047 = vpop.permute.xlu0 %7046
  %7048 = vrot.lane.b32.xlu0 %v6991, 32
  %v7049 = vpop.permute.xlu0 %7048
  %7050 = vrot.lane.b32.xlu0 %v6992, 32
  %v7051 = vpop.permute.xlu0 %7050
  %7052 = vrot.lane.b32.xlu0 %v6993, 32
  %v7053 = vpop.permute.xlu0 %7052
  %7054 = vrot.lane.b32.xlu0 %v6994, 32
  %v7055 = vpop.permute.xlu0 %7054
  %7056 = vrot.lane.b32.xlu0 %v6995, 32
  %v7057 = vpop.permute.xlu0 %7056
  %7058 = vrot.lane.b32.xlu0 %v6996, 32
  %v7059 = vpop.permute.xlu0 %7058
  %7060 = vrot.lane.b32.xlu0 %v6997, 32
  %v7061 = vpop.permute.xlu0 %7060
  %7062 = vrot.lane.b32.xlu0 %v6998, 32
  %v7063 = vpop.permute.xlu0 %7062
  %vm7080 = vcmask 523520
  %7081 = vst.msk [vmem:[%s1] sm:$0xff] %vm7080, %v7033
  %7082 = vst.msk [vmem:[%s1 + $0x8] sm:$0xff] %vm7080, %v7035
  %7083 = vst.msk [vmem:[%s1 + $0x10] sm:$0xff] %vm7080, %v7037
  %7084 = vst.msk [vmem:[%s1 + $0x18] sm:$0xff] %vm7080, %v7039
  %7085 = vst.msk [vmem:[%s1 + $0x20] sm:$0xff] %vm7080, %v7041
  %7086 = vst.msk [vmem:[%s1 + $0x28] sm:$0xff] %vm7080, %v7043
  %7087 = vst.msk [vmem:[%s1 + $0x30] sm:$0xff] %vm7080, %v7045
  %7088 = vst.msk [vmem:[%s1 + $0x38] sm:$0xff] %vm7080, %v7047
  %7089 = vst.msk [vmem:[%s1 + $0x40] sm:$0xff] %vm7080, %v7049
  %7090 = vst.msk [vmem:[%s1 + $0x48] sm:$0xff] %vm7080, %v7051
  %7091 = vst.msk [vmem:[%s1 + $0x50] sm:$0xff] %vm7080, %v7053
  %7092 = vst.msk [vmem:[%s1 + $0x58] sm:$0xff] %vm7080, %v7055
  %7093 = vst.msk [vmem:[%s1 + $0x60] sm:$0xff] %vm7080, %v7057
  %7094 = vst.msk [vmem:[%s1 + $0x68] sm:$0xff] %vm7080, %v7059
  %7095 = vst.msk [vmem:[%s1 + $0x70] sm:$0xff] %vm7080, %v7061
  %7096 = vst.msk [vmem:[%s1 + $0x78] sm:$0xff] %vm7080, %v7063
  // Predicated region
  $region6: #{tpu_custom_call.1} parent=0 // pred_check
    _
  $region7: #{tpu_custom_call.1} parent=0 // pred_check_branch
    %7098 = sbr.rel (0) target = $region9
  $region8: #{tpu_custom_call.1} parent=0 // pred_region
    _
  $region9: #{tpu_custom_call.1} parent=0 // pred_fallthru
    _
  // Predicated region
  $region10: #{tpu_custom_call.1} parent=0 // pred_check
    _
  $region11: #{tpu_custom_call.1} parent=0 // pred_check_branch
    %7100 = sbr.rel (0) target = $region13
  $region12: #{tpu_custom_call.1} parent=0 // pred_region
    _
  $region13: #{tpu_custom_call.1} parent=0 // pred_fallthru
    _

</llo_original>
